<compile_context>
chip_gen: v6e
topology: v6e:2x2x1
jax: 0.10.0
libtpu: 0.0.40
codegen_flags: <defaults>
</compile_context>

<pallas_src>
import functools

import jax
import jax.numpy as jnp
from jax.experimental import pallas as pl
from jax.experimental.pallas import tpu as pltpu

EPS = 1e-5


def _vmem_limit_bytes():
    """~75% of physical VMEM: 96 MiB on v5e/v6e (128 MiB), 48 MiB on v7x (64 MiB)."""
    try:
        cap = int(pltpu.get_tpu_info().vmem_capacity_bytes)
    except Exception:
        cap = 64 * 1024 * 1024          # conservative fallback (safe on every gen)
    return max(32 * 1024 * 1024, (cap * 3) // 4)


# --------------------------------------------------------------------------- kernel
def _bottleneck_kernel(x_ref, s1_ref, b1_ref, w1_ref, s2_ref, b2_ref,
                       s3_ref, b3_ref, w2_ref, w3_ref, o_ref,
                       *, H, W, Hb, Ci, nf, NB):
    """Fused ReLU/BN1/1x1 -> ReLU/BN2/3x3 -> ReLU/BN3/1x1 -> +identity on a row slab.

    x_ref : (NB, H, W, Ci)  bf16, whole image(s), VMEM resident (auto-pipelined)
    w1    : (Ci, nf)        bf16
    w2    : (3, 3*nf, nf)   bf16, [kx, (ky, cin), cout]  (ky folded into K)
    w3    : (nf, 4*nf)      bf16
    s*/b* : (1, C)          f32 folded BatchNorm affine
    o_ref : (NB*Hb*W, 4*nf) bf16 output rows for this slab
    """
    hb = pl.program_id(1)
    h0 = hb * Hb
    mxu_dtype = w1_ref.dtype

    s1 = s1_ref[...]
    b1 = b1_ref[...]
    s2 = s2_ref[...]
    b2 = b2_ref[...]
    s3 = s3_ref[...]
    b3 = b3_ref[...]
    w1 = w1_ref[...]
    w3 = w3_ref[...]
    w2 = [w2_ref[dx] for dx in range(3)]                    # 3 x (3*nf, nf)

    # Clamped halo-row indices (out-of-image rows are masked to zero below).
    top_r = jnp.maximum(h0 - 1, 0)
    bot_r = jnp.minimum(h0 + Hb, H - 1)
    zcol = jnp.zeros((Hb + 2, 1, nf), mxu_dtype)

    for b in range(NB):                                     # static unroll over images
        # ---- (Hb+2)-row input slab (interior rows + clamped halo rows) -------------
        x_top = x_ref[b, pl.ds(top_r, 1)]                   # (1, W, Ci)
        x_mid = x_ref[b, pl.ds(h0, Hb)]                     # (Hb, W, Ci)
        x_bot = x_ref[b, pl.ds(bot_r, 1)]                   # (1, W, Ci)
        xs = jnp.concatenate([x_top, x_mid, x_bot], axis=0)  # (Hb+2, W, Ci)

        # ---- conv1: ReLU -> BN1 -> 1x1 ; then conv2 pre-act: ReLU -> BN2 -----------
        xf = jnp.maximum(xs.reshape((Hb + 2) * W, Ci).astype(jnp.float32), 0.0)
        xf = xf * s1 + b1
        h1 = jnp.dot(xf.astype(mxu_dtype), w1, preferred_element_type=jnp.float32)
        a2 = jnp.maximum(h1, 0.0) * s2 + b2                 # ((Hb+2)*W, nf) f32
        a2 = a2.reshape(Hb + 2, W, nf)

        # conv2's zero padding acts on the BN2 output: zero out-of-image halo rows,
        # then zero-pad the width by one column on each side.
        top = jnp.where(h0 > 0, a2[0:1], 0.0)
        bot = jnp.where(h0 + Hb < H, a2[Hb + 1:Hb + 2], 0.0)
        a2b = jnp.concatenate([top, a2[1:Hb + 1], bot], axis=0).astype(mxu_dtype)
        a2p = jnp.concatenate([zcol, a2b, zcol], axis=1)    # (Hb+2, W+2, nf)

        # ---- 3x3 conv: 3 matmuls, ky folded into the contraction dim (K = 3*nf) ----
        acc = None
        for dx in range(3):
            p = jnp.concatenate(
                [a2p[dy:dy + Hb, dx:dx + W, :] for dy in range(3)], axis=-1)
            p = p.reshape(Hb * W, 3 * nf)
            z = jnp.dot(p, w2[dx], preferred_element_type=jnp.float32)
            acc = z if acc is None else acc + z             # (Hb*W, nf) f32

        # ---- conv3: ReLU -> BN3 -> 1x1 (nf -> 4nf) ; residual add -------------------
        y = jnp.maximum(acc, 0.0) * s3 + b3
        out = jnp.dot(y.astype(mxu_dtype), w3, preferred_element_type=jnp.float32)
        res = x_mid.reshape(Hb * W, Ci).astype(jnp.float32)
        o_ref[b * Hb * W:(b + 1) * Hb * W, :] = (out + res).astype(o_ref.dtype)


def _bottleneck_pallas(x, s1, b1, w1, s2, b2, s3, b3, w2k, w3, *, Hb, NB):
    N, H, W, Ci = x.shape
    nf = w1.shape[1]
    Cout = w3.shape[1]
    nhb = H // Hb
    M = N * H * W

    kern = functools.partial(_bottleneck_kernel,
                             H=H, W=W, Hb=Hb, Ci=Ci, nf=nf, NB=NB)

    itemsize = jnp.dtype(x.dtype).itemsize
    flops = 2 * M * (Ci * nf + 9 * nf * nf + nf * Cout)
    bytes_acc = (itemsize * (M * Ci + M * Cout + Ci * nf + 9 * nf * nf + nf * Cout)
                 + 4 * 2 * (Ci + 3 * nf))

    return pl.pallas_call(
        kern,
        out_shape=jax.ShapeDtypeStruct((M, Cout), x.dtype),
        grid_spec=pltpu.PrefetchScalarGridSpec(
            num_scalar_prefetch=0,
            grid=(N // NB, nhb),
            in_specs=[
                # whole image block: constant over the row-slab axis -> DMA'd once per
                # image and double-buffered across images by the Pallas pipeline.
                pl.BlockSpec((NB, H, W, Ci), lambda n, h: (n, 0, 0, 0)),
                pl.BlockSpec((1, Ci), lambda n, h: (0, 0)),
                pl.BlockSpec((1, Ci), lambda n, h: (0, 0)),
                pl.BlockSpec((Ci, nf), lambda n, h: (0, 0)),
                pl.BlockSpec((1, nf), lambda n, h: (0, 0)),
                pl.BlockSpec((1, nf), lambda n, h: (0, 0)),
                pl.BlockSpec((1, nf), lambda n, h: (0, 0)),
                pl.BlockSpec((1, nf), lambda n, h: (0, 0)),
                pl.BlockSpec((3, 3 * nf, nf), lambda n, h: (0, 0, 0)),
                pl.BlockSpec((nf, Cout), lambda n, h: (0, 0)),
            ],
            out_specs=pl.BlockSpec((NB * Hb * W, Cout),
                                   lambda n, h: (n * nhb + h, 0)),
        ),
        compiler_params=pltpu.CompilerParams(
            dimension_semantics=("parallel", "parallel"),
            vmem_limit_bytes=_vmem_limit_bytes(),
        ),
        cost_estimate=pl.CostEstimate(flops=int(flops), transcendentals=0,
                                      bytes_accessed=int(bytes_acc)),
    )(x, s1, b1, w1, s2, b2, s3, b3, w2k, w3)


# --------------------------------------------------------------------------- wrapper
def _fold_bn(bn):
    scale = bn["gamma"] / jnp.sqrt(bn["var"] + EPS)
    shift = bn["beta"] - bn["mean"] * scale
    return scale, shift


def bottleneck_forward(x_nhwc, params, *, block_h=None, batch_block=None,
                       compute_dtype=jnp.bfloat16, target_rows=2048):
    """Pallas implementation of Bottleneck.forward (downsample=None, stride=1).

    Takes / returns NHWC (channels-last); activations/weights stream as bf16 with f32
    MXU accumulation.
    """
    N, H, W, Ci = x_nhwc.shape

    s1, b1 = _fold_bn(params["bn1"])
    s2, b2 = _fold_bn(params["bn2"])
    s3, b3 = _fold_bn(params["bn3"])

    w1 = jnp.transpose(params["w1_oihw"][:, :, 0, 0], (1, 0))            # (ni, nf)
    nf = w1.shape[1]
    assert Ci == 4 * nf, "identity add requires ni == 4 * nf (downsample=None)"
    # (O,I,3,3) -> (kx, ky, i, o) -> (kx, (ky,i), o): contraction dim K = 3*nf.
    w2k = jnp.transpose(params["w2_oihw"], (3, 2, 1, 0)).reshape(3, 3 * nf, nf)
    w3 = jnp.transpose(params["w3_oihw"][:, :, 0, 0], (1, 0))            # (nf, 4nf)

    # ---- row-slab / batch-block selection --------------------------------------
    if block_h is None:
        Hb = H if H * W <= target_rows else max(1, min(H, target_rows // W))
    else:
        Hb = max(1, min(block_h, H))
    while H % Hb:
        Hb -= 1

    if Hb != H:
        NB = 1                      # multi-image blocks only with whole-image slabs
    elif batch_block is None:
        NB = max(1, min(N, target_rows // (H * W), 8))
        while N % NB:
            NB -= 1
    else:
        NB = max(1, min(batch_block, N))
        while N % NB:
            NB -= 1

    x = x_nhwc.astype(compute_dtype)
    f32 = jnp.float32
    out2d = _bottleneck_pallas(
        x,
        s1.reshape(1, Ci).astype(f32), b1.reshape(1, Ci).astype(f32),
        w1.astype(compute_dtype),
        s2.reshape(1, nf).astype(f32), b2.reshape(1, nf).astype(f32),
        s3.reshape(1, nf).astype(f32), b3.reshape(1, nf).astype(f32),
        w2k.astype(compute_dtype), w3.astype(compute_dtype),
        Hb=Hb, NB=NB)
    return out2d.reshape(N, H, W, Ci)


# --------------------------------------------------------------------------- reference
def _ref_forward(x_nchw, params):
    def bn(h, p):
        scale = p["gamma"] / jnp.sqrt(p["var"] + EPS)
        shift = p["beta"] - p["mean"] * scale
        return h * scale[None, :, None, None] + shift[None, :, None, None]

    def conv2d(h, w_oihw, pad):
        return jax.lax.conv_general_dilated(
            h, w_oihw, (1, 1), [(pad, pad), (pad, pad)],
            dimension_numbers=("NCHW", "OIHW", "NCHW"))

    identity = x_nchw
    h = conv2d(bn(jax.nn.relu(x_nchw), params["bn1"]), params["w1_oihw"], 0)
    h = conv2d(bn(jax.nn.relu(h), params["bn2"]), params["w2_oihw"], 1)
    h = conv2d(bn(jax.nn.relu(h), params["bn3"]), params["w3_oihw"], 0)
    return h + identity


# --------------------------------------------------------------------------- main
def _make_params(key, ni, nf):
    expansion = 4
    ks = jax.random.split(key, 6)

    def bn_params(k, c):
        km, kv = jax.random.split(k)
        return {
            "gamma": jnp.ones((c,), jnp.float32),     # init.constant_(weight, 1.0)
            "beta": jnp.zeros((c,), jnp.float32),
            "mean": 0.1 * jax.random.normal(km, (c,), jnp.float32),
            "var": 1.0 + 0.1 * jax.random.uniform(kv, (c,), jnp.float32),
        }

    return {
        "bn1": bn_params(ks[0], ni),
        "bn2": bn_params(ks[1], nf),
        "bn3": bn_params(ks[2], nf),
        "w1_oihw": 0.1 * jax.random.normal(ks[3], (nf, ni, 1, 1), jnp.float32),
        "w2_oihw": 0.1 * jax.random.normal(ks[4], (nf, nf, 3, 3), jnp.float32),
        "w3_oihw": 0.1 * jax.random.normal(ks[5], (nf * expansion, nf, 1, 1), jnp.float32),
    }


if __name__ == "__main__":
    N, nf, H, W = 2, 4, 16, 16
    ni = nf * 4  # downsample=None -> residual add requires ni == nf * expansion

    key = jax.random.PRNGKey(0)
    kx, kp = jax.random.split(key)
    x_nhwc = jax.random.normal(kx, (N, H, W, ni), jnp.float32)   # channels-last
    params = _make_params(kp, ni, nf)

    # f32 reference in PyTorch's NCHW layout, compared back in NHWC.
    x_nchw = jnp.transpose(x_nhwc, (0, 3, 1, 2))
    ref = jnp.transpose(jax.block_until_ready(_ref_forward(x_nchw, params)), (0, 2, 3, 1))

    # Path A: whole-image slabs, 2 images per grid step (late-stage shape regime).
    out_a = jax.block_until_ready(bottleneck_forward(x_nhwc, params))
    # Path B: row-slab tiling (block_h = H//2) exercising interior halo rows and the
    # top/bottom zero-pad rows.
    out_b = jax.block_until_ready(bottleneck_forward(x_nhwc, params, block_h=H // 2))

    for out in (out_a, out_b):
        assert out.shape == (N, H, W, ni)
        o32 = out.astype(jnp.float32)
        err = float(jnp.max(jnp.abs(o32 - ref)))
        # bf16 activations / weights / output with f32 accumulation vs an f32 XLA
        # reference -> tolerance sized for bf16 rounding, not f32 bit-exactness.
        assert jnp.allclose(o32, ref, atol=1e-1, rtol=5e-2), err
    print("KERNEL_OK")
</pallas_src>

<mosaic_0001>
module attributes {stable_mosaic.version = 11 : i64} {
  func.func @_bottleneck_kernel(%arg0: i32, %arg1: i32, %arg2: memref<2x16x16x16xbf16, #tpu.memory_space<vmem>>, %arg3: memref<1x16xf32, #tpu.memory_space<vmem>>, %arg4: memref<1x16xf32, #tpu.memory_space<vmem>>, %arg5: memref<16x4xbf16, #tpu.memory_space<vmem>>, %arg6: memref<1x4xf32, #tpu.memory_space<vmem>>, %arg7: memref<1x4xf32, #tpu.memory_space<vmem>>, %arg8: memref<1x4xf32, #tpu.memory_space<vmem>>, %arg9: memref<1x4xf32, #tpu.memory_space<vmem>>, %arg10: memref<3x12x4xbf16, #tpu.memory_space<vmem>>, %arg11: memref<4x16xbf16, #tpu.memory_space<vmem>>, %arg12: memref<512x16xbf16, #tpu.memory_space<vmem>>) attributes {dimension_semantics = [#tpu.dimension_semantics<parallel>, #tpu.dimension_semantics<parallel>], iteration_bounds = array<i64: 1, 1>, scalar_prefetch = 0 : i64, scratch_operands = 0 : i64, tpu.core_type = #tpu.core_type<tc>, window_params = [{transform_indices = @transform_0, window_bounds = array<i64: 2, 16, 16, 16>}, {pipeline_mode = #tpu.pipeline_mode<synchronous>, transform_indices = @transform_1, window_bounds = array<i64: 1, 16>}, {pipeline_mode = #tpu.pipeline_mode<synchronous>, transform_indices = @transform_2, window_bounds = array<i64: 1, 16>}, {pipeline_mode = #tpu.pipeline_mode<synchronous>, transform_indices = @transform_3, window_bounds = array<i64: 16, 4>}, {pipeline_mode = #tpu.pipeline_mode<synchronous>, transform_indices = @transform_4, window_bounds = array<i64: 1, 4>}, {pipeline_mode = #tpu.pipeline_mode<synchronous>, transform_indices = @transform_5, window_bounds = array<i64: 1, 4>}, {pipeline_mode = #tpu.pipeline_mode<synchronous>, transform_indices = @transform_6, window_bounds = array<i64: 1, 4>}, {pipeline_mode = #tpu.pipeline_mode<synchronous>, transform_indices = @transform_7, window_bounds = array<i64: 1, 4>}, {pipeline_mode = #tpu.pipeline_mode<synchronous>, transform_indices = @transform_8, window_bounds = array<i64: 3, 12, 4>}, {pipeline_mode = #tpu.pipeline_mode<synchronous>, transform_indices = @transform_9, window_bounds = array<i64: 4, 16>}, {transform_indices = @transform_10, window_bounds = array<i64: 512, 16>}]} {
    %c16_i32 = arith.constant 16 : i32
    %0 = arith.muli %arg1, %c16_i32 : i32
    %c0 = arith.constant 0 : index
    %c0_0 = arith.constant 0 : index
    %1 = vector.load %arg3[%c0, %c0_0] : memref<1x16xf32, #tpu.memory_space<vmem>>, vector<1x16xf32>
    %c0_1 = arith.constant 0 : index
    %c0_2 = arith.constant 0 : index
    %2 = vector.load %arg4[%c0_1, %c0_2] : memref<1x16xf32, #tpu.memory_space<vmem>>, vector<1x16xf32>
    %c0_3 = arith.constant 0 : index
    %c0_4 = arith.constant 0 : index
    %3 = vector.load %arg6[%c0_3, %c0_4] : memref<1x4xf32, #tpu.memory_space<vmem>>, vector<1x4xf32>
    %c0_5 = arith.constant 0 : index
    %c0_6 = arith.constant 0 : index
    %4 = vector.load %arg7[%c0_5, %c0_6] : memref<1x4xf32, #tpu.memory_space<vmem>>, vector<1x4xf32>
    %c0_7 = arith.constant 0 : index
    %c0_8 = arith.constant 0 : index
    %5 = vector.load %arg8[%c0_7, %c0_8] : memref<1x4xf32, #tpu.memory_space<vmem>>, vector<1x4xf32>
    %c0_9 = arith.constant 0 : index
    %c0_10 = arith.constant 0 : index
    %6 = vector.load %arg9[%c0_9, %c0_10] : memref<1x4xf32, #tpu.memory_space<vmem>>, vector<1x4xf32>
    %c0_11 = arith.constant 0 : index
    %c0_12 = arith.constant 0 : index
    %7 = vector.load %arg5[%c0_11, %c0_12] : memref<16x4xbf16, #tpu.memory_space<vmem>>, vector<16x4xbf16>
    %c0_13 = arith.constant 0 : index
    %c0_14 = arith.constant 0 : index
    %8 = vector.load %arg11[%c0_13, %c0_14] : memref<4x16xbf16, #tpu.memory_space<vmem>>, vector<4x16xbf16>
    %c0_15 = arith.constant 0 : index
    %c0_16 = arith.constant 0 : index
    %c0_17 = arith.constant 0 : index
    %9 = vector.load %arg10[%c0_15, %c0_16, %c0_17] : memref<3x12x4xbf16, #tpu.memory_space<vmem>>, vector<1x12x4xbf16>
    %10 = vector.shape_cast %9 : vector<1x12x4xbf16> to vector<12x4xbf16>
    %c1 = arith.constant 1 : index
    %c0_18 = arith.constant 0 : index
    %c0_19 = arith.constant 0 : index
    %11 = vector.load %arg10[%c1, %c0_18, %c0_19] : memref<3x12x4xbf16, #tpu.memory_space<vmem>>, vector<1x12x4xbf16>
    %12 = vector.shape_cast %11 : vector<1x12x4xbf16> to vector<12x4xbf16>
    %c2 = arith.constant 2 : index
    %c0_20 = arith.constant 0 : index
    %c0_21 = arith.constant 0 : index
    %13 = vector.load %arg10[%c2, %c0_20, %c0_21] : memref<3x12x4xbf16, #tpu.memory_space<vmem>>, vector<1x12x4xbf16>
    %14 = vector.shape_cast %13 : vector<1x12x4xbf16> to vector<12x4xbf16>
    %c1_i32 = arith.constant 1 : i32
    %15 = arith.subi %0, %c1_i32 : i32
    %c0_i32 = arith.constant 0 : i32
    %16 = arith.maxsi %15, %c0_i32 : i32
    %c16_i32_22 = arith.constant 16 : i32
    %17 = arith.addi %0, %c16_i32_22 : i32
    %c15_i32 = arith.constant 15 : i32
    %18 = arith.minsi %17, %c15_i32 : i32
    %cst = arith.constant 0.000000e+00 : bf16
    %19 = vector.broadcast %cst : bf16 to vector<18x1x4xbf16>
    %c0_23 = arith.constant 0 : index
    %20 = arith.index_cast %16 : i32 to index
    %c0_24 = arith.constant 0 : index
    %c0_25 = arith.constant 0 : index
    %21 = vector.load %arg2[%c0_23, %20, %c0_24, %c0_25] : memref<2x16x16x16xbf16, #tpu.memory_space<vmem>>, vector<1x1x16x16xbf16>
    %22 = vector.shape_cast %21 : vector<1x1x16x16xbf16> to vector<1x16x16xbf16>
    %c0_26 = arith.constant 0 : index
    %23 = arith.index_cast %0 : i32 to index
    %c0_27 = arith.constant 0 : index
    %c0_28 = arith.constant 0 : index
    %24 = vector.load %arg2[%c0_26, %23, %c0_27, %c0_28] : memref<2x16x16x16xbf16, #tpu.memory_space<vmem>>, vector<1x16x16x16xbf16>
    %25 = vector.shape_cast %24 : vector<1x16x16x16xbf16> to vector<16x16x16xbf16>
    %c0_29 = arith.constant 0 : index
    %26 = arith.index_cast %18 : i32 to index
    %c0_30 = arith.constant 0 : index
    %c0_31 = arith.constant 0 : index
    %27 = vector.load %arg2[%c0_29, %26, %c0_30, %c0_31] : memref<2x16x16x16xbf16, #tpu.memory_space<vmem>>, vector<1x1x16x16xbf16>
    %28 = vector.shape_cast %27 : vector<1x1x16x16xbf16> to vector<1x16x16xbf16>
    %29 = tpu.concatenate %22, %25, %28 in 0 : vector<1x16x16xbf16>, vector<16x16x16xbf16>, vector<1x16x16xbf16> -> vector<18x16x16xbf16>
    %30 = vector.shape_cast %29 : vector<18x16x16xbf16> to vector<288x16xbf16>
    %31 = arith.extf %30 : vector<288x16xbf16> to vector<288x16xf32>
    %cst_32 = arith.constant 0.000000e+00 : f32
    %32 = vector.broadcast %cst_32 : f32 to vector<288x16xf32>
    %33 = arith.maximumf %31, %32 : vector<288x16xf32>
    %34 = vector.broadcast %1 : vector<1x16xf32> to vector<288x16xf32>
    %35 = arith.mulf %33, %34 : vector<288x16xf32>
    %36 = vector.broadcast %2 : vector<1x16xf32> to vector<288x16xf32>
    %37 = arith.addf %35, %36 : vector<288x16xf32>
    %38 = arith.truncf %37 : vector<288x16xf32> to vector<288x16xbf16>
    %cst_33 = arith.constant dense<0.000000e+00> : vector<288x4xf32>
    %39 = tpu.matmul %38, %7, %cst_33 {dimension_numbers = #tpu.dot_dimension_numbers<[1], [0], [0], [1], [0, 0, 1, 1], [], []>} : vector<288x16xbf16>, vector<16x4xbf16>, vector<288x4xf32> -> vector<288x4xf32>
    %cst_34 = arith.constant 0.000000e+00 : f32
    %40 = vector.broadcast %cst_34 : f32 to vector<288x4xf32>
    %41 = arith.maximumf %39, %40 : vector<288x4xf32>
    %42 = vector.broadcast %3 : vector<1x4xf32> to vector<288x4xf32>
    %43 = arith.mulf %41, %42 : vector<288x4xf32>
    %44 = vector.broadcast %4 : vector<1x4xf32> to vector<288x4xf32>
    %45 = arith.addf %43, %44 : vector<288x4xf32>
    %46 = vector.shape_cast %45 : vector<288x4xf32> to vector<18x16x4xf32>
    %c0_i32_35 = arith.constant 0 : i32
    %47 = arith.cmpi sgt, %0, %c0_i32_35 : i32
    %48 = vector.extract_strided_slice %46 {offsets = [0, 0, 0], sizes = [1, 16, 4], strides = [1, 1, 1]} : vector<18x16x4xf32> to vector<1x16x4xf32>
    %cst_36 = arith.constant 0.000000e+00 : f32
    %49 = vector.broadcast %cst_36 : f32 to vector<1x16x4xf32>
    %50 = arith.select %47, %48, %49 : vector<1x16x4xf32>
    %c16_i32_37 = arith.constant 16 : i32
    %51 = arith.addi %0, %c16_i32_37 : i32
    %c16_i32_38 = arith.constant 16 : i32
    %52 = arith.cmpi slt, %51, %c16_i32_38 : i32
    %53 = vector.extract_strided_slice %46 {offsets = [17, 0, 0], sizes = [1, 16, 4], strides = [1, 1, 1]} : vector<18x16x4xf32> to vector<1x16x4xf32>
    %cst_39 = arith.constant 0.000000e+00 : f32
    %54 = vector.broadcast %cst_39 : f32 to vector<1x16x4xf32>
    %55 = arith.select %52, %53, %54 : vector<1x16x4xf32>
    %56 = vector.extract_strided_slice %46 {offsets = [1, 0, 0], sizes = [16, 16, 4], strides = [1, 1, 1]} : vector<18x16x4xf32> to vector<16x16x4xf32>
    %57 = tpu.concatenate %50, %56, %55 in 0 : vector<1x16x4xf32>, vector<16x16x4xf32>, vector<1x16x4xf32> -> vector<18x16x4xf32>
    %58 = arith.truncf %57 : vector<18x16x4xf32> to vector<18x16x4xbf16>
    %59 = tpu.concatenate %19, %58, %19 in 1 : vector<18x1x4xbf16>, vector<18x16x4xbf16>, vector<18x1x4xbf16> -> vector<18x18x4xbf16>
    %60 = vector.extract_strided_slice %59 {offsets = [0, 0, 0], sizes = [16, 16, 4], strides = [1, 1, 1]} : vector<18x18x4xbf16> to vector<16x16x4xbf16>
    %61 = vector.extract_strided_slice %59 {offsets = [1, 0, 0], sizes = [16, 16, 4], strides = [1, 1, 1]} : vector<18x18x4xbf16> to vector<16x16x4xbf16>
    %62 = vector.extract_strided_slice %59 {offsets = [2, 0, 0], sizes = [16, 16, 4], strides = [1, 1, 1]} : vector<18x18x4xbf16> to vector<16x16x4xbf16>
    %63 = tpu.concatenate %60, %61, %62 in 2 : vector<16x16x4xbf16>, vector<16x16x4xbf16>, vector<16x16x4xbf16> -> vector<16x16x12xbf16>
    %64 = vector.shape_cast %63 : vector<16x16x12xbf16> to vector<256x12xbf16>
    %cst_40 = arith.constant dense<0.000000e+00> : vector<256x4xf32>
    %65 = tpu.matmul %64, %10, %cst_40 {dimension_numbers = #tpu.dot_dimension_numbers<[1], [0], [0], [1], [0, 0, 1, 1], [], []>} : vector<256x12xbf16>, vector<12x4xbf16>, vector<256x4xf32> -> vector<256x4xf32>
    %66 = vector.extract_strided_slice %59 {offsets = [0, 1, 0], sizes = [16, 16, 4], strides = [1, 1, 1]} : vector<18x18x4xbf16> to vector<16x16x4xbf16>
    %67 = vector.extract_strided_slice %59 {offsets = [1, 1, 0], sizes = [16, 16, 4], strides = [1, 1, 1]} : vector<18x18x4xbf16> to vector<16x16x4xbf16>
    %68 = vector.extract_strided_slice %59 {offsets = [2, 1, 0], sizes = [16, 16, 4], strides = [1, 1, 1]} : vector<18x18x4xbf16> to vector<16x16x4xbf16>
    %69 = tpu.concatenate %66, %67, %68 in 2 : vector<16x16x4xbf16>, vector<16x16x4xbf16>, vector<16x16x4xbf16> -> vector<16x16x12xbf16>
    %70 = vector.shape_cast %69 : vector<16x16x12xbf16> to vector<256x12xbf16>
    %cst_41 = arith.constant dense<0.000000e+00> : vector<256x4xf32>
    %71 = tpu.matmul %70, %12, %cst_41 {dimension_numbers = #tpu.dot_dimension_numbers<[1], [0], [0], [1], [0, 0, 1, 1], [], []>} : vector<256x12xbf16>, vector<12x4xbf16>, vector<256x4xf32> -> vector<256x4xf32>
    %72 = arith.addf %65, %71 : vector<256x4xf32>
    %73 = vector.extract_strided_slice %59 {offsets = [0, 2, 0], sizes = [16, 16, 4], strides = [1, 1, 1]} : vector<18x18x4xbf16> to vector<16x16x4xbf16>
    %74 = vector.extract_strided_slice %59 {offsets = [1, 2, 0], sizes = [16, 16, 4], strides = [1, 1, 1]} : vector<18x18x4xbf16> to vector<16x16x4xbf16>
    %75 = vector.extract_strided_slice %59 {offsets = [2, 2, 0], sizes = [16, 16, 4], strides = [1, 1, 1]} : vector<18x18x4xbf16> to vector<16x16x4xbf16>
    %76 = tpu.concatenate %73, %74, %75 in 2 : vector<16x16x4xbf16>, vector<16x16x4xbf16>, vector<16x16x4xbf16> -> vector<16x16x12xbf16>
    %77 = vector.shape_cast %76 : vector<16x16x12xbf16> to vector<256x12xbf16>
    %cst_42 = arith.constant dense<0.000000e+00> : vector<256x4xf32>
    %78 = tpu.matmul %77, %14, %cst_42 {dimension_numbers = #tpu.dot_dimension_numbers<[1], [0], [0], [1], [0, 0, 1, 1], [], []>} : vector<256x12xbf16>, vector<12x4xbf16>, vector<256x4xf32> -> vector<256x4xf32>
    %79 = arith.addf %72, %78 : vector<256x4xf32>
    %cst_43 = arith.constant 0.000000e+00 : f32
    %80 = vector.broadcast %cst_43 : f32 to vector<256x4xf32>
    %81 = arith.maximumf %79, %80 : vector<256x4xf32>
    %82 = vector.broadcast %5 : vector<1x4xf32> to vector<256x4xf32>
    %83 = arith.mulf %81, %82 : vector<256x4xf32>
    %84 = vector.broadcast %6 : vector<1x4xf32> to vector<256x4xf32>
    %85 = arith.addf %83, %84 : vector<256x4xf32>
    %86 = arith.truncf %85 : vector<256x4xf32> to vector<256x4xbf16>
    %cst_44 = arith.constant dense<0.000000e+00> : vector<256x16xf32>
    %87 = tpu.matmul %86, %8, %cst_44 {dimension_numbers = #tpu.dot_dimension_numbers<[1], [0], [0], [1], [0, 0, 1, 1], [], []>} : vector<256x4xbf16>, vector<4x16xbf16>, vector<256x16xf32> -> vector<256x16xf32>
    %88 = vector.shape_cast %25 : vector<16x16x16xbf16> to vector<256x16xbf16>
    %89 = arith.extf %88 : vector<256x16xbf16> to vector<256x16xf32>
    %90 = arith.addf %87, %89 : vector<256x16xf32>
    %91 = arith.truncf %90 : vector<256x16xf32> to vector<256x16xbf16>
    %c0_45 = arith.constant 0 : index
    %c0_46 = arith.constant 0 : index
    %92 = vector.load %arg12[%c0_45, %c0_46] : memref<512x16xbf16, #tpu.memory_space<vmem>>, vector<256x16xbf16>
    tpu.vector_store %arg12[%c0_45, %c0_46], %91 {strides = array<i32>} : memref<512x16xbf16, #tpu.memory_space<vmem>>, vector<256x16xbf16>,
    %c1_47 = arith.constant 1 : index
    %93 = arith.index_cast %16 : i32 to index
    %c0_48 = arith.constant 0 : index
    %c0_49 = arith.constant 0 : index
    %94 = vector.load %arg2[%c1_47, %93, %c0_48, %c0_49] : memref<2x16x16x16xbf16, #tpu.memory_space<vmem>>, vector<1x1x16x16xbf16>
    %95 = vector.shape_cast %94 : vector<1x1x16x16xbf16> to vector<1x16x16xbf16>
    %c1_50 = arith.constant 1 : index
    %96 = arith.index_cast %0 : i32 to index
    %c0_51 = arith.constant 0 : index
    %c0_52 = arith.constant 0 : index
    %97 = vector.load %arg2[%c1_50, %96, %c0_51, %c0_52] : memref<2x16x16x16xbf16, #tpu.memory_space<vmem>>, vector<1x16x16x16xbf16>
    %98 = vector.shape_cast %97 : vector<1x16x16x16xbf16> to vector<16x16x16xbf16>
    %c1_53 = arith.constant 1 : index
    %99 = arith.index_cast %18 : i32 to index
    %c0_54 = arith.constant 0 : index
    %c0_55 = arith.constant 0 : index
    %100 = vector.load %arg2[%c1_53, %99, %c0_54, %c0_55] : memref<2x16x16x16xbf16, #tpu.memory_space<vmem>>, vector<1x1x16x16xbf16>
    %101 = vector.shape_cast %100 : vector<1x1x16x16xbf16> to vector<1x16x16xbf16>
    %102 = tpu.concatenate %95, %98, %101 in 0 : vector<1x16x16xbf16>, vector<16x16x16xbf16>, vector<1x16x16xbf16> -> vector<18x16x16xbf16>
    %103 = vector.shape_cast %102 : vector<18x16x16xbf16> to vector<288x16xbf16>
    %104 = arith.extf %103 : vector<288x16xbf16> to vector<288x16xf32>
    %cst_56 = arith.constant 0.000000e+00 : f32
    %105 = vector.broadcast %cst_56 : f32 to vector<288x16xf32>
    %106 = arith.maximumf %104, %105 : vector<288x16xf32>
    %107 = vector.broadcast %1 : vector<1x16xf32> to vector<288x16xf32>
    %108 = arith.mulf %106, %107 : vector<288x16xf32>
    %109 = vector.broadcast %2 : vector<1x16xf32> to vector<288x16xf32>
    %110 = arith.addf %108, %109 : vector<288x16xf32>
    %111 = arith.truncf %110 : vector<288x16xf32> to vector<288x16xbf16>
    %cst_57 = arith.constant dense<0.000000e+00> : vector<288x4xf32>
    %112 = tpu.matmul %111, %7, %cst_57 {dimension_numbers = #tpu.dot_dimension_numbers<[1], [0], [0], [1], [0, 0, 1, 1], [], []>} : vector<288x16xbf16>, vector<16x4xbf16>, vector<288x4xf32> -> vector<288x4xf32>
    %cst_58 = arith.constant 0.000000e+00 : f32
    %113 = vector.broadcast %cst_58 : f32 to vector<288x4xf32>
    %114 = arith.maximumf %112, %113 : vector<288x4xf32>
    %115 = vector.broadcast %3 : vector<1x4xf32> to vector<288x4xf32>
    %116 = arith.mulf %114, %115 : vector<288x4xf32>
    %117 = vector.broadcast %4 : vector<1x4xf32> to vector<288x4xf32>
    %118 = arith.addf %116, %117 : vector<288x4xf32>
    %119 = vector.shape_cast %118 : vector<288x4xf32> to vector<18x16x4xf32>
    %c0_i32_59 = arith.constant 0 : i32
    %120 = arith.cmpi sgt, %0, %c0_i32_59 : i32
    %121 = vector.extract_strided_slice %119 {offsets = [0, 0, 0], sizes = [1, 16, 4], strides = [1, 1, 1]} : vector<18x16x4xf32> to vector<1x16x4xf32>
    %cst_60 = arith.constant 0.000000e+00 : f32
    %122 = vector.broadcast %cst_60 : f32 to vector<1x16x4xf32>
    %123 = arith.select %120, %121, %122 : vector<1x16x4xf32>
    %c16_i32_61 = arith.constant 16 : i32
    %124 = arith.addi %0, %c16_i32_61 : i32
    %c16_i32_62 = arith.constant 16 : i32
    %125 = arith.cmpi slt, %124, %c16_i32_62 : i32
    %126 = vector.extract_strided_slice %119 {offsets = [17, 0, 0], sizes = [1, 16, 4], strides = [1, 1, 1]} : vector<18x16x4xf32> to vector<1x16x4xf32>
    %cst_63 = arith.constant 0.000000e+00 : f32
    %127 = vector.broadcast %cst_63 : f32 to vector<1x16x4xf32>
    %128 = arith.select %125, %126, %127 : vector<1x16x4xf32>
    %129 = vector.extract_strided_slice %119 {offsets = [1, 0, 0], sizes = [16, 16, 4], strides = [1, 1, 1]} : vector<18x16x4xf32> to vector<16x16x4xf32>
    %130 = tpu.concatenate %123, %129, %128 in 0 : vector<1x16x4xf32>, vector<16x16x4xf32>, vector<1x16x4xf32> -> vector<18x16x4xf32>
    %131 = arith.truncf %130 : vector<18x16x4xf32> to vector<18x16x4xbf16>
    %132 = tpu.concatenate %19, %131, %19 in 1 : vector<18x1x4xbf16>, vector<18x16x4xbf16>, vector<18x1x4xbf16> -> vector<18x18x4xbf16>
    %133 = vector.extract_strided_slice %132 {offsets = [0, 0, 0], sizes = [16, 16, 4], strides = [1, 1, 1]} : vector<18x18x4xbf16> to vector<16x16x4xbf16>
    %134 = vector.extract_strided_slice %132 {offsets = [1, 0, 0], sizes = [16, 16, 4], strides = [1, 1, 1]} : vector<18x18x4xbf16> to vector<16x16x4xbf16>
    %135 = vector.extract_strided_slice %132 {offsets = [2, 0, 0], sizes = [16, 16, 4], strides = [1, 1, 1]} : vector<18x18x4xbf16> to vector<16x16x4xbf16>
    %136 = tpu.concatenate %133, %134, %135 in 2 : vector<16x16x4xbf16>, vector<16x16x4xbf16>, vector<16x16x4xbf16> -> vector<16x16x12xbf16>
    %137 = vector.shape_cast %136 : vector<16x16x12xbf16> to vector<256x12xbf16>
    %cst_64 = arith.constant dense<0.000000e+00> : vector<256x4xf32>
    %138 = tpu.matmul %137, %10, %cst_64 {dimension_numbers = #tpu.dot_dimension_numbers<[1], [0], [0], [1], [0, 0, 1, 1], [], []>} : vector<256x12xbf16>, vector<12x4xbf16>, vector<256x4xf32> -> vector<256x4xf32>
    %139 = vector.extract_strided_slice %132 {offsets = [0, 1, 0], sizes = [16, 16, 4], strides = [1, 1, 1]} : vector<18x18x4xbf16> to vector<16x16x4xbf16>
    %140 = vector.extract_strided_slice %132 {offsets = [1, 1, 0], sizes = [16, 16, 4], strides = [1, 1, 1]} : vector<18x18x4xbf16> to vector<16x16x4xbf16>
    %141 = vector.extract_strided_slice %132 {offsets = [2, 1, 0], sizes = [16, 16, 4], strides = [1, 1, 1]} : vector<18x18x4xbf16> to vector<16x16x4xbf16>
    %142 = tpu.concatenate %139, %140, %141 in 2 : vector<16x16x4xbf16>, vector<16x16x4xbf16>, vector<16x16x4xbf16> -> vector<16x16x12xbf16>
    %143 = vector.shape_cast %142 : vector<16x16x12xbf16> to vector<256x12xbf16>
    %cst_65 = arith.constant dense<0.000000e+00> : vector<256x4xf32>
    %144 = tpu.matmul %143, %12, %cst_65 {dimension_numbers = #tpu.dot_dimension_numbers<[1], [0], [0], [1], [0, 0, 1, 1], [], []>} : vector<256x12xbf16>, vector<12x4xbf16>, vector<256x4xf32> -> vector<256x4xf32>
    %145 = arith.addf %138, %144 : vector<256x4xf32>
    %146 = vector.extract_strided_slice %132 {offsets = [0, 2, 0], sizes = [16, 16, 4], strides = [1, 1, 1]} : vector<18x18x4xbf16> to vector<16x16x4xbf16>
    %147 = vector.extract_strided_slice %132 {offsets = [1, 2, 0], sizes = [16, 16, 4], strides = [1, 1, 1]} : vector<18x18x4xbf16> to vector<16x16x4xbf16>
    %148 = vector.extract_strided_slice %132 {offsets = [2, 2, 0], sizes = [16, 16, 4], strides = [1, 1, 1]} : vector<18x18x4xbf16> to vector<16x16x4xbf16>
    %149 = tpu.concatenate %146, %147, %148 in 2 : vector<16x16x4xbf16>, vector<16x16x4xbf16>, vector<16x16x4xbf16> -> vector<16x16x12xbf16>
    %150 = vector.shape_cast %149 : vector<16x16x12xbf16> to vector<256x12xbf16>
    %cst_66 = arith.constant dense<0.000000e+00> : vector<256x4xf32>
    %151 = tpu.matmul %150, %14, %cst_66 {dimension_numbers = #tpu.dot_dimension_numbers<[1], [0], [0], [1], [0, 0, 1, 1], [], []>} : vector<256x12xbf16>, vector<12x4xbf16>, vector<256x4xf32> -> vector<256x4xf32>
    %152 = arith.addf %145, %151 : vector<256x4xf32>
    %cst_67 = arith.constant 0.000000e+00 : f32
    %153 = vector.broadcast %cst_67 : f32 to vector<256x4xf32>
    %154 = arith.maximumf %152, %153 : vector<256x4xf32>
    %155 = vector.broadcast %5 : vector<1x4xf32> to vector<256x4xf32>
    %156 = arith.mulf %154, %155 : vector<256x4xf32>
    %157 = vector.broadcast %6 : vector<1x4xf32> to vector<256x4xf32>
    %158 = arith.addf %156, %157 : vector<256x4xf32>
    %159 = arith.truncf %158 : vector<256x4xf32> to vector<256x4xbf16>
    %cst_68 = arith.constant dense<0.000000e+00> : vector<256x16xf32>
    %160 = tpu.matmul %159, %8, %cst_68 {dimension_numbers = #tpu.dot_dimension_numbers<[1], [0], [0], [1], [0, 0, 1, 1], [], []>} : vector<256x4xbf16>, vector<4x16xbf16>, vector<256x16xf32> -> vector<256x16xf32>
    %161 = vector.shape_cast %98 : vector<16x16x16xbf16> to vector<256x16xbf16>
    %162 = arith.extf %161 : vector<256x16xbf16> to vector<256x16xf32>
    %163 = arith.addf %160, %162 : vector<256x16xf32>
    %164 = arith.truncf %163 : vector<256x16xf32> to vector<256x16xbf16>
    %c256 = arith.constant 256 : index
    %c0_69 = arith.constant 0 : index
    %165 = vector.load %arg12[%c256, %c0_69] : memref<512x16xbf16, #tpu.memory_space<vmem>>, vector<256x16xbf16>
    tpu.vector_store %arg12[%c256, %c0_69], %164 {strides = array<i32>} : memref<512x16xbf16, #tpu.memory_space<vmem>>, vector<256x16xbf16>,
    return
  }
  func.func @transform_0(%arg0: i32, %arg1: i32) -> (i32, i32, i32, i32) {
    %c0_i32 = arith.constant 0 : i32
    %c0_i32_0 = arith.constant 0 : i32
    %c0_i32_1 = arith.constant 0 : i32
    %c0_i32_2 = arith.constant 0 : i32
    return %arg0, %c0_i32, %c0_i32_0, %c0_i32_1 : i32, i32, i32, i32
  }
  func.func @transform_1(%arg0: i32, %arg1: i32) -> (i32, i32) {
    %c0_i32 = arith.constant 0 : i32
    %c0_i32_0 = arith.constant 0 : i32
    %c0_i32_1 = arith.constant 0 : i32
    return %c0_i32, %c0_i32_0 : i32, i32
  }
  func.func @transform_2(%arg0: i32, %arg1: i32) -> (i32, i32) {
    %c0_i32 = arith.constant 0 : i32
    %c0_i32_0 = arith.constant 0 : i32
    %c0_i32_1 = arith.constant 0 : i32
    return %c0_i32, %c0_i32_0 : i32, i32
  }
  func.func @transform_3(%arg0: i32, %arg1: i32) -> (i32, i32) {
    %c0_i32 = arith.constant 0 : i32
    %c0_i32_0 = arith.constant 0 : i32
    %c0_i32_1 = arith.constant 0 : i32
    return %c0_i32, %c0_i32_0 : i32, i32
  }
  func.func @transform_4(%arg0: i32, %arg1: i32) -> (i32, i32) {
    %c0_i32 = arith.constant 0 : i32
    %c0_i32_0 = arith.constant 0 : i32
    %c0_i32_1 = arith.constant 0 : i32
    return %c0_i32, %c0_i32_0 : i32, i32
  }
  func.func @transform_5(%arg0: i32, %arg1: i32) -> (i32, i32) {
    %c0_i32 = arith.constant 0 : i32
    %c0_i32_0 = arith.constant 0 : i32
    %c0_i32_1 = arith.constant 0 : i32
    return %c0_i32, %c0_i32_0 : i32, i32
  }
  func.func @transform_6(%arg0: i32, %arg1: i32) -> (i32, i32) {
    %c0_i32 = arith.constant 0 : i32
    %c0_i32_0 = arith.constant 0 : i32
    %c0_i32_1 = arith.constant 0 : i32
    return %c0_i32, %c0_i32_0 : i32, i32
  }
  func.func @transform_7(%arg0: i32, %arg1: i32) -> (i32, i32) {
    %c0_i32 = arith.constant 0 : i32
    %c0_i32_0 = arith.constant 0 : i32
    %c0_i32_1 = arith.constant 0 : i32
    return %c0_i32, %c0_i32_0 : i32, i32
  }
  func.func @transform_8(%arg0: i32, %arg1: i32) -> (i32, i32, i32) {
    %c0_i32 = arith.constant 0 : i32
    %c0_i32_0 = arith.constant 0 : i32
    %c0_i32_1 = arith.constant 0 : i32
    %c0_i32_2 = arith.constant 0 : i32
    return %c0_i32, %c0_i32_0, %c0_i32_1 : i32, i32, i32
  }
  func.func @transform_9(%arg0: i32, %arg1: i32) -> (i32, i32) {
    %c0_i32 = arith.constant 0 : i32
    %c0_i32_0 = arith.constant 0 : i32
    %c0_i32_1 = arith.constant 0 : i32
    return %c0_i32, %c0_i32_0 : i32, i32
  }
  func.func @transform_10(%arg0: i32, %arg1: i32) -> (i32, i32) {
    %c1_i32 = arith.constant 1 : i32
    %0 = arith.muli %arg0, %c1_i32 : i32
    %1 = arith.addi %0, %arg1 : i32
    %c0_i32 = arith.constant 0 : i32
    %c0_i32_0 = arith.constant 0 : i32
    return %1, %c0_i32 : i32, i32
  }
}

</mosaic_0001>

<llo_original>
// kernel: tpu_custom_call.1
$region0: #{tpu_custom_call.1}
  #allocation0 [shape = 'u32[]', space=smem, size = 0x4, offset = 0x4, fixed_abs, tag = 'smem constant byte address 0x4 - core index']
  #allocation1 [shape = 'u32[144,128]{1,0:T(1,128)}', space=vmem, size = 0x12000, scoped, tag = 'internal scratch']
  %s0 = inlined_call_operand.hbm [shape: bf16[2,16,16,16], index: 0, kind: input, shape index: {}]
  %s1 = inlined_call_operand.vmem [shape: f32[1,16], index: 1, kind: input, shape index: {}]
  %s2 = inlined_call_operand.vmem [shape: f32[1,16], index: 2, kind: input, shape index: {}]
  %s3 = inlined_call_operand.vmem [shape: bf16[16,4], index: 3, kind: input, shape index: {}]
  %s4 = inlined_call_operand.vmem [shape: f32[1,4], index: 4, kind: input, shape index: {}]
  %s5 = inlined_call_operand.vmem [shape: f32[1,4], index: 5, kind: input, shape index: {}]
  %s6 = inlined_call_operand.vmem [shape: f32[1,4], index: 6, kind: input, shape index: {}]
  %s7 = inlined_call_operand.vmem [shape: f32[1,4], index: 7, kind: input, shape index: {}]
  %s8 = inlined_call_operand.vmem [shape: bf16[3,12,4], index: 8, kind: input, shape index: {}]
  %s9 = inlined_call_operand.vmem [shape: bf16[4,16], index: 9, kind: input, shape index: {}]
  %s10 = inlined_call_operand.vmem [shape: bf16[512,16], index: 10, kind: output, shape index: {}]
  %s11 = sld [smem:[#allocation0]]
  $region54: #{tpu_custom_call.1} parent=0
    _
  %s13 = ssub.s32 1, %s11
  %s14 = scalar_select 0, %s13, %s11
  $region1: #{tpu_custom_call.1} parent=0
    #allocation2 [shape = 'u8[131072]{0}', space=vmem, size = 0x20000, scoped, tag = 'input window, operand 0, single buffered']
    #allocation3 [shape = 's32[1]{0}', space=sflag, size = 0x4, scoped, tag = 'scoped memory for tpu_custom_call.1']
    %15 = vsyncpa [#allocation3], 0
    // Predicated region
    $region2: #{tpu_custom_call.1} parent=1 // pred_check
      _
    $region3: #{tpu_custom_call.1} parent=1 // pred_check_branch
      %17 = sbr.rel (0) target = $region5
    $region4: #{tpu_custom_call.1} parent=1 // pred_region
      %s19 = ssub.s32 4096, 4096
      %20 = vsyncadd [#allocation3], %s19
      %s21 = sshll.u32 [#allocation2], 4
      %s22 = int_to_ptr.vmem [resolvable:$true] %s21
      %27 = dma.hbm_to_vmem [thread:$0]  %s0, 4096, %s22, [#allocation3], 64, 64, 4
    $region5: #{tpu_custom_call.1} parent=1 // pred_fallthru
      _
    // Predicated region
    $region6: #{tpu_custom_call.1} parent=1 // pred_check
      _
    $region7: #{tpu_custom_call.1} parent=1 // pred_check_branch
      %29 = sbr.rel (0) target = $region9
    $region8: #{tpu_custom_call.1} parent=1 // pred_region
      _
    $region9: #{tpu_custom_call.1} parent=1 // pred_fallthru
      _
    // Predicated region
    $region10: #{tpu_custom_call.1} parent=1 // pred_check
      _
    $region11: #{tpu_custom_call.1} parent=1 // pred_check_branch
      %31 = sbr.rel (0) target = $region13
    $region12: #{tpu_custom_call.1} parent=1 // pred_region
      _
    $region13: #{tpu_custom_call.1} parent=1 // pred_fallthru
      _
    // Predicated region
    $region14: #{tpu_custom_call.1} parent=1 // pred_check
      _
    $region15: #{tpu_custom_call.1} parent=1 // pred_check_branch
      %33 = sbr.rel (0) target = $region17
    $region16: #{tpu_custom_call.1} parent=1 // pred_region
      _
    $region17: #{tpu_custom_call.1} parent=1 // pred_fallthru
      _
    // Predicated region
    $region18: #{tpu_custom_call.1} parent=1 // pred_check
      _
    $region19: #{tpu_custom_call.1} parent=1 // pred_check_branch
      %35 = sbr.rel (0) target = $region21
    $region20: #{tpu_custom_call.1} parent=1 // pred_region
      _
    $region21: #{tpu_custom_call.1} parent=1 // pred_fallthru
      _
    // Predicated region
    $region22: #{tpu_custom_call.1} parent=1 // pred_check
      _
    $region23: #{tpu_custom_call.1} parent=1 // pred_check_branch
      %37 = sbr.rel (0) target = $region25
    $region24: #{tpu_custom_call.1} parent=1 // pred_region
      _
    $region25: #{tpu_custom_call.1} parent=1 // pred_fallthru
      _
    // Predicated region
    $region26: #{tpu_custom_call.1} parent=1 // pred_check
      _
    $region27: #{tpu_custom_call.1} parent=1 // pred_check_branch
      %39 = sbr.rel (0) target = $region29
    $region28: #{tpu_custom_call.1} parent=1 // pred_region
      _
    $region29: #{tpu_custom_call.1} parent=1 // pred_fallthru
      _
    // Predicated region
    $region30: #{tpu_custom_call.1} parent=1 // pred_check
      _
    $region31: #{tpu_custom_call.1} parent=1 // pred_check_branch
      %41 = sbr.rel (0) target = $region33
    $region32: #{tpu_custom_call.1} parent=1 // pred_region
      _
    $region33: #{tpu_custom_call.1} parent=1 // pred_fallthru
      _
    // Predicated region
    $region34: #{tpu_custom_call.1} parent=1 // pred_check
      _
    $region35: #{tpu_custom_call.1} parent=1 // pred_check_branch
      %43 = sbr.rel (0) target = $region37
    $region36: #{tpu_custom_call.1} parent=1 // pred_region
      _
    $region37: #{tpu_custom_call.1} parent=1 // pred_fallthru
      _
    // Predicated region
    $region38: #{tpu_custom_call.1} parent=1 // pred_check
      _
    $region39: #{tpu_custom_call.1} parent=1 // pred_check_branch
      %45 = sbr.rel (0) target = $region41
    $region40: #{tpu_custom_call.1} parent=1 // pred_region
      _
    $region41: #{tpu_custom_call.1} parent=1 // pred_fallthru
      _
    // Predicated region
    $region42: #{tpu_custom_call.1} parent=1 // pred_check
      _
    $region43: #{tpu_custom_call.1} parent=1 // pred_check_branch
      %47 = sbr.rel (0) target = $region45
    $region44: #{tpu_custom_call.1} parent=1 // pred_region
      %48 = dma.done [#allocation3], 4096
    $region45: #{tpu_custom_call.1} parent=1 // pred_fallthru
      _
    %s49 = sadd.s32 0, 0
    %s50 = smul.u32 64, %s49
    %p51 = scmp.lt.s32.totalorder %s50, 63
    %s52 = scalar_select %p51, %s50, 63
    %s53 = smul.addr %s52, 4
    %s54 = scalar_lea.vmem %s10, %s53
    %s55 = sadd.s32 0, 0
    %s56 = smul.u32 64, %s55
    %p57 = scmp.lt.s32.totalorder %s56, 63
    %s58 = scalar_select %p57, %s56, 63
    %s59 = smul.addr %s58, 4
    %s60 = scalar_lea.vmem %s10, %s59
    %s61 = sadd.s32 0, 0
    %s62 = smul.u32 64, %s61
    %s64 = smul.u32 0, 16
    %v65 = vld [vmem:[%s1] sm:$0x1]
    %v66 = vld [vmem:[%s2] sm:$0x1]
    %v67 = vld [vmem:[%s4] sm:$0x1]
    %v68 = vld [vmem:[%s5] sm:$0x1]
    %v69 = vld [vmem:[%s6] sm:$0x1]
    %v70 = vld [vmem:[%s7] sm:$0x1]
    %v71 = vld [vmem:[%s3] sm:$0xf]
    %v72 = vld [vmem:[%s3 + $0x4] sm:$0xf]
    %v73 = vld [vmem:[%s9] sm:$0x3]
    %v74 = vld [vmem:[%s8] sm:$0xf]
    %v75 = vld [vmem:[%s8 + $0x4] sm:$0x3]
    %s76 = scalar_lea.vmem %s8, 8
    %v77 = vld [vmem:[%s76] sm:$0xf]
    %v78 = vld [vmem:[%s76 + $0x4] sm:$0x3]
    %s79 = scalar_lea.vmem %s8, 16
    %v80 = vld [vmem:[%s79] sm:$0xf]
    %v81 = vld [vmem:[%s79 + $0x4] sm:$0x3]
    %s82 = ssub.s32 %s64, 1
    %p83 = scmp.gt.s32.totalorder %s82, 0
    %s84 = scalar_select %p83, %s82, 0
    %s85 = sadd.s32 %s64, 16
    %p86 = scmp.lt.s32.totalorder %s85, 15
    %s87 = scalar_select %p86, %s85, 15
    %s88 = smul.u32 %s84, 2
    %s89 = smul.addr %s88, 4
    %s90 = scalar_lea.vmem [#allocation2], %s89
    %v91 = vld [vmem:[%s90] sm:$0xf]
    %v92 = vld [vmem:[%s90 + $0x4] sm:$0xf]
    %s93 = smul.u32 %s64, 2
    %s94 = smul.addr %s93, 4
    %s95 = scalar_lea.vmem [#allocation2], %s94
    %v96 = vld [vmem:[%s95] sm:$0xf]
    %v97 = vld [vmem:[%s95 + $0x4] sm:$0xf]
    %v98 = vld [vmem:[%s95 + $0x8] sm:$0xf]
    %v99 = vld [vmem:[%s95 + $0xc] sm:$0xf]
    %v100 = vld [vmem:[%s95 + $0x10] sm:$0xf]
    %v101 = vld [vmem:[%s95 + $0x14] sm:$0xf]
    %v102 = vld [vmem:[%s95 + $0x18] sm:$0xf]
    %v103 = vld [vmem:[%s95 + $0x1c] sm:$0xf]
    %v104 = vld [vmem:[%s95 + $0x20] sm:$0xf]
    %v105 = vld [vmem:[%s95 + $0x24] sm:$0xf]
    %v106 = vld [vmem:[%s95 + $0x28] sm:$0xf]
    %v107 = vld [vmem:[%s95 + $0x2c] sm:$0xf]
    %v108 = vld [vmem:[%s95 + $0x30] sm:$0xf]
    %v109 = vld [vmem:[%s95 + $0x34] sm:$0xf]
    %v110 = vld [vmem:[%s95 + $0x38] sm:$0xf]
    %v111 = vld [vmem:[%s95 + $0x3c] sm:$0xf]
    %v112 = vld [vmem:[%s95 + $0x40] sm:$0xf]
    %v113 = vld [vmem:[%s95 + $0x44] sm:$0xf]
    %v114 = vld [vmem:[%s95 + $0x48] sm:$0xf]
    %v115 = vld [vmem:[%s95 + $0x4c] sm:$0xf]
    %v116 = vld [vmem:[%s95 + $0x50] sm:$0xf]
    %v117 = vld [vmem:[%s95 + $0x54] sm:$0xf]
    %v118 = vld [vmem:[%s95 + $0x58] sm:$0xf]
    %v119 = vld [vmem:[%s95 + $0x5c] sm:$0xf]
    %v120 = vld [vmem:[%s95 + $0x60] sm:$0xf]
    %v121 = vld [vmem:[%s95 + $0x64] sm:$0xf]
    %v122 = vld [vmem:[%s95 + $0x68] sm:$0xf]
    %v123 = vld [vmem:[%s95 + $0x6c] sm:$0xf]
    %v124 = vld [vmem:[%s95 + $0x70] sm:$0xf]
    %v125 = vld [vmem:[%s95 + $0x74] sm:$0xf]
    %v126 = vld [vmem:[%s95 + $0x78] sm:$0xf]
    %v127 = vld [vmem:[%s95 + $0x7c] sm:$0xf]
    %s128 = smul.u32 %s87, 2
    %s129 = smul.addr %s128, 4
    %s130 = scalar_lea.vmem [#allocation2], %s129
    %v131 = vld [vmem:[%s130] sm:$0xf]
    %v132 = vld [vmem:[%s130 + $0x4] sm:$0xf]
    %v133 = vunpack.c.l.bf16 %v91
    %v134 = vunpack.c.l.bf16 %v92
    %v135 = vunpack.c.l.bf16 %v96
    %v136 = vunpack.c.l.bf16 %v97
    %v137 = vunpack.c.l.bf16 %v98
    %v138 = vunpack.c.l.bf16 %v99
    %v139 = vunpack.c.l.bf16 %v100
    %v140 = vunpack.c.l.bf16 %v101
    %v141 = vunpack.c.l.bf16 %v102
    %v142 = vunpack.c.l.bf16 %v103
    %v143 = vunpack.c.l.bf16 %v104
    %v144 = vunpack.c.l.bf16 %v105
    %v145 = vunpack.c.l.bf16 %v106
    %v146 = vunpack.c.l.bf16 %v107
    %v147 = vunpack.c.l.bf16 %v108
    %v148 = vunpack.c.l.bf16 %v109
    %v149 = vunpack.c.l.bf16 %v110
    %v150 = vunpack.c.l.bf16 %v111
    %v151 = vunpack.c.l.bf16 %v112
    %v152 = vunpack.c.l.bf16 %v113
    %v153 = vunpack.c.l.bf16 %v114
    %v154 = vunpack.c.l.bf16 %v115
    %v155 = vunpack.c.l.bf16 %v116
    %v156 = vunpack.c.l.bf16 %v117
    %v157 = vunpack.c.l.bf16 %v118
    %v158 = vunpack.c.l.bf16 %v119
    %v159 = vunpack.c.l.bf16 %v120
    %v160 = vunpack.c.l.bf16 %v121
    %v161 = vunpack.c.l.bf16 %v122
    %v162 = vunpack.c.l.bf16 %v123
    %v163 = vunpack.c.l.bf16 %v124
    %v164 = vunpack.c.l.bf16 %v125
    %v165 = vunpack.c.l.bf16 %v126
    %v166 = vunpack.c.l.bf16 %v127
    %v167 = vunpack.c.l.bf16 %v131
    %v168 = vunpack.c.l.bf16 %v132
    %v169 = vmax.f32 %v133, 0.0
    %v170 = vmax.f32 %v134, 0.0
    %v171 = vmax.f32 %v135, 0.0
    %v172 = vmax.f32 %v136, 0.0
    %v173 = vmax.f32 %v137, 0.0
    %v174 = vmax.f32 %v138, 0.0
    %v175 = vmax.f32 %v139, 0.0
    %v176 = vmax.f32 %v140, 0.0
    %v177 = vmax.f32 %v141, 0.0
    %v178 = vmax.f32 %v142, 0.0
    %v179 = vmax.f32 %v143, 0.0
    %v180 = vmax.f32 %v144, 0.0
    %v181 = vmax.f32 %v145, 0.0
    %v182 = vmax.f32 %v146, 0.0
    %v183 = vmax.f32 %v147, 0.0
    %v184 = vmax.f32 %v148, 0.0
    %v185 = vmax.f32 %v149, 0.0
    %v186 = vmax.f32 %v150, 0.0
    %v187 = vmax.f32 %v151, 0.0
    %v188 = vmax.f32 %v152, 0.0
    %v189 = vmax.f32 %v153, 0.0
    %v190 = vmax.f32 %v154, 0.0
    %v191 = vmax.f32 %v155, 0.0
    %v192 = vmax.f32 %v156, 0.0
    %v193 = vmax.f32 %v157, 0.0
    %v194 = vmax.f32 %v158, 0.0
    %v195 = vmax.f32 %v159, 0.0
    %v196 = vmax.f32 %v160, 0.0
    %v197 = vmax.f32 %v161, 0.0
    %v198 = vmax.f32 %v162, 0.0
    %v199 = vmax.f32 %v163, 0.0
    %v200 = vmax.f32 %v164, 0.0
    %v201 = vmax.f32 %v165, 0.0
    %v202 = vmax.f32 %v166, 0.0
    %v203 = vmax.f32 %v167, 0.0
    %v204 = vmax.f32 %v168, 0.0
    %v206 = vlaneseq
    %v207 = vshrl.u32 %v206, 7
    %v208 = vsub.s32 0, %v207
    %v209 = vrot.slane %v65, %v208
    %v211 = vmul.f32 %v169, %v209
    %v212 = vmul.f32 %v170, %v209
    %v213 = vmul.f32 %v171, %v209
    %v214 = vmul.f32 %v172, %v209
    %v215 = vmul.f32 %v173, %v209
    %v216 = vmul.f32 %v174, %v209
    %v217 = vmul.f32 %v175, %v209
    %v218 = vmul.f32 %v176, %v209
    %v219 = vmul.f32 %v177, %v209
    %v220 = vmul.f32 %v178, %v209
    %v221 = vmul.f32 %v179, %v209
    %v222 = vmul.f32 %v180, %v209
    %v223 = vmul.f32 %v181, %v209
    %v224 = vmul.f32 %v182, %v209
    %v225 = vmul.f32 %v183, %v209
    %v226 = vmul.f32 %v184, %v209
    %v227 = vmul.f32 %v185, %v209
    %v228 = vmul.f32 %v186, %v209
    %v229 = vmul.f32 %v187, %v209
    %v230 = vmul.f32 %v188, %v209
    %v231 = vmul.f32 %v189, %v209
    %v232 = vmul.f32 %v190, %v209
    %v233 = vmul.f32 %v191, %v209
    %v234 = vmul.f32 %v192, %v209
    %v235 = vmul.f32 %v193, %v209
    %v236 = vmul.f32 %v194, %v209
    %v237 = vmul.f32 %v195, %v209
    %v238 = vmul.f32 %v196, %v209
    %v239 = vmul.f32 %v197, %v209
    %v240 = vmul.f32 %v198, %v209
    %v241 = vmul.f32 %v199, %v209
    %v242 = vmul.f32 %v200, %v209
    %v243 = vmul.f32 %v201, %v209
    %v244 = vmul.f32 %v202, %v209
    %v245 = vmul.f32 %v203, %v209
    %v246 = vmul.f32 %v204, %v209
    %v248 = vlaneseq
    %v249 = vshrl.u32 %v248, 7
    %v250 = vsub.s32 0, %v249
    %v251 = vrot.slane %v66, %v250
    %v253 = vadd.f32 %v211, %v251
    %v254 = vadd.f32 %v212, %v251
    %v255 = vadd.f32 %v213, %v251
    %v256 = vadd.f32 %v214, %v251
    %v257 = vadd.f32 %v215, %v251
    %v258 = vadd.f32 %v216, %v251
    %v259 = vadd.f32 %v217, %v251
    %v260 = vadd.f32 %v218, %v251
    %v261 = vadd.f32 %v219, %v251
    %v262 = vadd.f32 %v220, %v251
    %v263 = vadd.f32 %v221, %v251
    %v264 = vadd.f32 %v222, %v251
    %v265 = vadd.f32 %v223, %v251
    %v266 = vadd.f32 %v224, %v251
    %v267 = vadd.f32 %v225, %v251
    %v268 = vadd.f32 %v226, %v251
    %v269 = vadd.f32 %v227, %v251
    %v270 = vadd.f32 %v228, %v251
    %v271 = vadd.f32 %v229, %v251
    %v272 = vadd.f32 %v230, %v251
    %v273 = vadd.f32 %v231, %v251
    %v274 = vadd.f32 %v232, %v251
    %v275 = vadd.f32 %v233, %v251
    %v276 = vadd.f32 %v234, %v251
    %v277 = vadd.f32 %v235, %v251
    %v278 = vadd.f32 %v236, %v251
    %v279 = vadd.f32 %v237, %v251
    %v280 = vadd.f32 %v238, %v251
    %v281 = vadd.f32 %v239, %v251
    %v282 = vadd.f32 %v240, %v251
    %v283 = vadd.f32 %v241, %v251
    %v284 = vadd.f32 %v242, %v251
    %v285 = vadd.f32 %v243, %v251
    %v286 = vadd.f32 %v244, %v251
    %v287 = vadd.f32 %v245, %v251
    %v288 = vadd.f32 %v246, %v251
    %v289 = vpack.c.bf16 %v254, %v253
    %v290 = vpack.c.bf16 %v256, %v255
    %v291 = vpack.c.bf16 %v258, %v257
    %v292 = vpack.c.bf16 %v260, %v259
    %v293 = vpack.c.bf16 %v262, %v261
    %v294 = vpack.c.bf16 %v264, %v263
    %v295 = vpack.c.bf16 %v266, %v265
    %v296 = vpack.c.bf16 %v268, %v267
    %v297 = vpack.c.bf16 %v270, %v269
    %v298 = vpack.c.bf16 %v272, %v271
    %v299 = vpack.c.bf16 %v274, %v273
    %v300 = vpack.c.bf16 %v276, %v275
    %v301 = vpack.c.bf16 %v278, %v277
    %v302 = vpack.c.bf16 %v280, %v279
    %v303 = vpack.c.bf16 %v282, %v281
    %v304 = vpack.c.bf16 %v284, %v283
    %v305 = vpack.c.bf16 %v286, %v285
    %v306 = vpack.c.bf16 %v288, %v287
    %v309 = vunpack.c.l.b16 %v71
    %v310 = vunpack.c.l.b16 %v72
    %v311 = vpack.c.b16 %v310, %v309
    %vm313 = vcmask 130048
    %v315 = vsel %vm313, %v289, 0
    %v318 = vsel %vm313, %v290, 0
    %v321 = vsel %vm313, %v291, 0
    %v324 = vsel %vm313, %v292, 0
    %v327 = vsel %vm313, %v293, 0
    %v330 = vsel %vm313, %v294, 0
    %v333 = vsel %vm313, %v295, 0
    %v336 = vsel %vm313, %v296, 0
    %v339 = vsel %vm313, %v297, 0
    %v342 = vsel %vm313, %v298, 0
    %v345 = vsel %vm313, %v299, 0
    %v348 = vsel %vm313, %v300, 0
    %v351 = vsel %vm313, %v301, 0
    %v354 = vsel %vm313, %v302, 0
    %v357 = vsel %vm313, %v303, 0
    %v360 = vsel %vm313, %v304, 0
    %v363 = vsel %vm313, %v305, 0
    %v366 = vsel %vm313, %v306, 0
    %368 = vmatprep.subr.bf16.mxu0 0
    %369 = vmatpush1.bf16.msra.mxu0 0
    %370 = vmatprep.subr.bf16.mxu0 0
    %371 = vmatpush1.bf16.msra.mxu0 0
    %372 = vmatprep.subr.bf16.mxu0 0
    %373 = vmatpush1.bf16.msra.mxu0 0
    %374 = vmatprep.subr.bf16.mxu0 0
    %375 = vmatpush1.bf16.msra.mxu0 0
    %376 = vmatprep.subr.bf16.mxu0 0
    %377 = vmatpush1.bf16.msra.mxu0 0
    %378 = vmatprep.subr.bf16.mxu0 0
    %379 = vmatpush1.bf16.msra.mxu0 0
    %380 = vmatprep.subr.bf16.mxu0 0
    %381 = vmatpush1.bf16.msra.mxu0 0
    %382 = vmatprep.subr.bf16.mxu0 0
    %383 = vmatpush1.bf16.msra.mxu0 %v311
    %384 = vmatprep.subr.bf16.mxu0 0
    %385 = vmatpush2.bf16.msra.mxu0 0
    %386 = vmatprep.subr.bf16.mxu0 0
    %387 = vmatpush2.bf16.msra.mxu0 0
    %388 = vmatprep.subr.bf16.mxu0 0
    %389 = vmatpush2.bf16.msra.mxu0 0
    %390 = vmatprep.subr.bf16.mxu0 0
    %391 = vmatpush2.bf16.msra.mxu0 0
    %392 = vmatprep.subr.bf16.mxu0 0
    %393 = vmatpush2.bf16.msra.mxu0 0
    %394 = vmatprep.subr.bf16.mxu0 0
    %395 = vmatpush2.bf16.msra.mxu0 0
    %396 = vmatprep.subr.bf16.mxu0 0
    %397 = vmatpush2.bf16.msra.mxu0 0
    %398 = vmatprep.subr.bf16.mxu0 0
    %399 = vmatpush2.bf16.msra.mxu0 0
    %400 = vmatprep.mubr.bf16.mxu0 0
    %401 = vmatmul.mubr.bf16.gmra.mxu0 %v315
    %v402 = vpop.f32.mrf.mxu0
    %v403 = vadd.f32 0.0, %v402
    %v404 = vpop.f32.mrf.mxu0
    %v405 = vpop.f32.mrf.mxu0
    %v406 = vadd.f32 0.0, %v405
    %v407 = vpop.f32.mrf.mxu0
    %408 = vmatprep.mubr.bf16.mxu0 0
    %409 = vmatmul.mubr.bf16.gmra.mxu0 %v318
    %v410 = vpop.f32.mrf.mxu0
    %v411 = vadd.f32 0.0, %v410
    %v412 = vpop.f32.mrf.mxu0
    %v413 = vpop.f32.mrf.mxu0
    %v414 = vadd.f32 0.0, %v413
    %v415 = vpop.f32.mrf.mxu0
    %416 = vmatprep.mubr.bf16.mxu0 0
    %417 = vmatmul.mubr.bf16.gmra.mxu0 %v321
    %v418 = vpop.f32.mrf.mxu0
    %v419 = vadd.f32 0.0, %v418
    %v420 = vpop.f32.mrf.mxu0
    %v421 = vpop.f32.mrf.mxu0
    %v422 = vadd.f32 0.0, %v421
    %v423 = vpop.f32.mrf.mxu0
    %424 = vmatprep.mubr.bf16.mxu0 0
    %425 = vmatmul.mubr.bf16.gmra.mxu0 %v324
    %v426 = vpop.f32.mrf.mxu0
    %v427 = vadd.f32 0.0, %v426
    %v428 = vpop.f32.mrf.mxu0
    %v429 = vpop.f32.mrf.mxu0
    %v430 = vadd.f32 0.0, %v429
    %v431 = vpop.f32.mrf.mxu0
    %432 = vmatprep.mubr.bf16.mxu0 0
    %433 = vmatmul.mubr.bf16.gmra.mxu0 %v327
    %v434 = vpop.f32.mrf.mxu0
    %v435 = vadd.f32 0.0, %v434
    %v436 = vpop.f32.mrf.mxu0
    %v437 = vpop.f32.mrf.mxu0
    %v438 = vadd.f32 0.0, %v437
    %v439 = vpop.f32.mrf.mxu0
    %440 = vmatprep.mubr.bf16.mxu0 0
    %441 = vmatmul.mubr.bf16.gmra.mxu0 %v330
    %v442 = vpop.f32.mrf.mxu0
    %v443 = vadd.f32 0.0, %v442
    %v444 = vpop.f32.mrf.mxu0
    %v445 = vpop.f32.mrf.mxu0
    %v446 = vadd.f32 0.0, %v445
    %v447 = vpop.f32.mrf.mxu0
    %448 = vmatprep.mubr.bf16.mxu0 0
    %449 = vmatmul.mubr.bf16.gmra.mxu0 %v333
    %v450 = vpop.f32.mrf.mxu0
    %v451 = vadd.f32 0.0, %v450
    %v452 = vpop.f32.mrf.mxu0
    %v453 = vpop.f32.mrf.mxu0
    %v454 = vadd.f32 0.0, %v453
    %v455 = vpop.f32.mrf.mxu0
    %456 = vmatprep.mubr.bf16.mxu0 0
    %457 = vmatmul.mubr.bf16.gmra.mxu0 %v336
    %v458 = vpop.f32.mrf.mxu0
    %v459 = vadd.f32 0.0, %v458
    %v460 = vpop.f32.mrf.mxu0
    %v461 = vpop.f32.mrf.mxu0
    %v462 = vadd.f32 0.0, %v461
    %v463 = vpop.f32.mrf.mxu0
    %464 = vmatprep.mubr.bf16.mxu0 0
    %465 = vmatmul.mubr.bf16.gmra.mxu0 %v339
    %v466 = vpop.f32.mrf.mxu0
    %v467 = vadd.f32 0.0, %v466
    %v468 = vpop.f32.mrf.mxu0
    %v469 = vpop.f32.mrf.mxu0
    %v470 = vadd.f32 0.0, %v469
    %v471 = vpop.f32.mrf.mxu0
    %472 = vmatprep.mubr.bf16.mxu0 0
    %473 = vmatmul.mubr.bf16.gmra.mxu0 %v342
    %v474 = vpop.f32.mrf.mxu0
    %v475 = vadd.f32 0.0, %v474
    %v476 = vpop.f32.mrf.mxu0
    %v477 = vpop.f32.mrf.mxu0
    %v478 = vadd.f32 0.0, %v477
    %v479 = vpop.f32.mrf.mxu0
    %480 = vmatprep.mubr.bf16.mxu0 0
    %481 = vmatmul.mubr.bf16.gmra.mxu0 %v345
    %v482 = vpop.f32.mrf.mxu0
    %v483 = vadd.f32 0.0, %v482
    %v484 = vpop.f32.mrf.mxu0
    %v485 = vpop.f32.mrf.mxu0
    %v486 = vadd.f32 0.0, %v485
    %v487 = vpop.f32.mrf.mxu0
    %488 = vmatprep.mubr.bf16.mxu0 0
    %489 = vmatmul.mubr.bf16.gmra.mxu0 %v348
    %v490 = vpop.f32.mrf.mxu0
    %v491 = vadd.f32 0.0, %v490
    %v492 = vpop.f32.mrf.mxu0
    %v493 = vpop.f32.mrf.mxu0
    %v494 = vadd.f32 0.0, %v493
    %v495 = vpop.f32.mrf.mxu0
    %496 = vmatprep.mubr.bf16.mxu0 0
    %497 = vmatmul.mubr.bf16.gmra.mxu0 %v351
    %v498 = vpop.f32.mrf.mxu0
    %v499 = vadd.f32 0.0, %v498
    %v500 = vpop.f32.mrf.mxu0
    %v501 = vpop.f32.mrf.mxu0
    %v502 = vadd.f32 0.0, %v501
    %v503 = vpop.f32.mrf.mxu0
    %504 = vmatprep.mubr.bf16.mxu0 0
    %505 = vmatmul.mubr.bf16.gmra.mxu0 %v354
    %v506 = vpop.f32.mrf.mxu0
    %v507 = vadd.f32 0.0, %v506
    %v508 = vpop.f32.mrf.mxu0
    %v509 = vpop.f32.mrf.mxu0
    %v510 = vadd.f32 0.0, %v509
    %v511 = vpop.f32.mrf.mxu0
    %512 = vmatprep.mubr.bf16.mxu0 0
    %513 = vmatmul.mubr.bf16.gmra.mxu0 %v357
    %v514 = vpop.f32.mrf.mxu0
    %v515 = vadd.f32 0.0, %v514
    %v516 = vpop.f32.mrf.mxu0
    %v517 = vpop.f32.mrf.mxu0
    %v518 = vadd.f32 0.0, %v517
    %v519 = vpop.f32.mrf.mxu0
    %520 = vmatprep.mubr.bf16.mxu0 0
    %521 = vmatmul.mubr.bf16.gmra.mxu0 %v360
    %v522 = vpop.f32.mrf.mxu0
    %v523 = vadd.f32 0.0, %v522
    %v524 = vpop.f32.mrf.mxu0
    %v525 = vpop.f32.mrf.mxu0
    %v526 = vadd.f32 0.0, %v525
    %v527 = vpop.f32.mrf.mxu0
    %528 = vmatprep.mubr.bf16.mxu0 0
    %529 = vmatmul.mubr.bf16.gmra.mxu0 %v363
    %v530 = vpop.f32.mrf.mxu0
    %v531 = vadd.f32 0.0, %v530
    %v532 = vpop.f32.mrf.mxu0
    %v533 = vpop.f32.mrf.mxu0
    %v534 = vadd.f32 0.0, %v533
    %v535 = vpop.f32.mrf.mxu0
    %536 = vmatprep.mubr.bf16.mxu0 0
    %537 = vmatmul.mubr.bf16.gmra.mxu0 %v366
    %v538 = vpop.f32.mrf.mxu0
    %v539 = vadd.f32 0.0, %v538
    %v540 = vpop.f32.mrf.mxu0
    %v541 = vpop.f32.mrf.mxu0
    %v542 = vadd.f32 0.0, %v541
    %v543 = vpop.f32.mrf.mxu0
    %544 = vdwg.mxu0
    %v545 = vmax.f32 %v403, 0.0
    %v546 = vmax.f32 %v406, 0.0
    %v547 = vmax.f32 %v411, 0.0
    %v548 = vmax.f32 %v414, 0.0
    %v549 = vmax.f32 %v419, 0.0
    %v550 = vmax.f32 %v422, 0.0
    %v551 = vmax.f32 %v427, 0.0
    %v552 = vmax.f32 %v430, 0.0
    %v553 = vmax.f32 %v435, 0.0
    %v554 = vmax.f32 %v438, 0.0
    %v555 = vmax.f32 %v443, 0.0
    %v556 = vmax.f32 %v446, 0.0
    %v557 = vmax.f32 %v451, 0.0
    %v558 = vmax.f32 %v454, 0.0
    %v559 = vmax.f32 %v459, 0.0
    %v560 = vmax.f32 %v462, 0.0
    %v561 = vmax.f32 %v467, 0.0
    %v562 = vmax.f32 %v470, 0.0
    %v563 = vmax.f32 %v475, 0.0
    %v564 = vmax.f32 %v478, 0.0
    %v565 = vmax.f32 %v483, 0.0
    %v566 = vmax.f32 %v486, 0.0
    %v567 = vmax.f32 %v491, 0.0
    %v568 = vmax.f32 %v494, 0.0
    %v569 = vmax.f32 %v499, 0.0
    %v570 = vmax.f32 %v502, 0.0
    %v571 = vmax.f32 %v507, 0.0
    %v572 = vmax.f32 %v510, 0.0
    %v573 = vmax.f32 %v515, 0.0
    %v574 = vmax.f32 %v518, 0.0
    %v575 = vmax.f32 %v523, 0.0
    %v576 = vmax.f32 %v526, 0.0
    %v577 = vmax.f32 %v531, 0.0
    %v578 = vmax.f32 %v534, 0.0
    %v579 = vmax.f32 %v539, 0.0
    %v580 = vmax.f32 %v542, 0.0
    %v582 = vlaneseq
    %v583 = vshrl.u32 %v582, 7
    %v584 = vsub.s32 0, %v583
    %v585 = vrot.slane %v67, %v584
    %v587 = vmul.f32 %v545, %v585
    %v588 = vmul.f32 %v546, %v585
    %v589 = vmul.f32 %v547, %v585
    %v590 = vmul.f32 %v548, %v585
    %v591 = vmul.f32 %v549, %v585
    %v592 = vmul.f32 %v550, %v585
    %v593 = vmul.f32 %v551, %v585
    %v594 = vmul.f32 %v552, %v585
    %v595 = vmul.f32 %v553, %v585
    %v596 = vmul.f32 %v554, %v585
    %v597 = vmul.f32 %v555, %v585
    %v598 = vmul.f32 %v556, %v585
    %v599 = vmul.f32 %v557, %v585
    %v600 = vmul.f32 %v558, %v585
    %v601 = vmul.f32 %v559, %v585
    %v602 = vmul.f32 %v560, %v585
    %v603 = vmul.f32 %v561, %v585
    %v604 = vmul.f32 %v562, %v585
    %v605 = vmul.f32 %v563, %v585
    %v606 = vmul.f32 %v564, %v585
    %v607 = vmul.f32 %v565, %v585
    %v608 = vmul.f32 %v566, %v585
    %v609 = vmul.f32 %v567, %v585
    %v610 = vmul.f32 %v568, %v585
    %v611 = vmul.f32 %v569, %v585
    %v612 = vmul.f32 %v570, %v585
    %v613 = vmul.f32 %v571, %v585
    %v614 = vmul.f32 %v572, %v585
    %v615 = vmul.f32 %v573, %v585
    %v616 = vmul.f32 %v574, %v585
    %v617 = vmul.f32 %v575, %v585
    %v618 = vmul.f32 %v576, %v585
    %v619 = vmul.f32 %v577, %v585
    %v620 = vmul.f32 %v578, %v585
    %v621 = vmul.f32 %v579, %v585
    %v622 = vmul.f32 %v580, %v585
    %v624 = vlaneseq
    %v625 = vshrl.u32 %v624, 7
    %v626 = vsub.s32 0, %v625
    %v627 = vrot.slane %v68, %v626
    %v629 = vadd.f32 %v587, %v627
    %v630 = vadd.f32 %v588, %v627
    %v631 = vadd.f32 %v589, %v627
    %v632 = vadd.f32 %v590, %v627
    %v633 = vadd.f32 %v591, %v627
    %v634 = vadd.f32 %v592, %v627
    %v635 = vadd.f32 %v593, %v627
    %v636 = vadd.f32 %v594, %v627
    %v637 = vadd.f32 %v595, %v627
    %v638 = vadd.f32 %v596, %v627
    %v639 = vadd.f32 %v597, %v627
    %v640 = vadd.f32 %v598, %v627
    %v641 = vadd.f32 %v599, %v627
    %v642 = vadd.f32 %v600, %v627
    %v643 = vadd.f32 %v601, %v627
    %v644 = vadd.f32 %v602, %v627
    %v645 = vadd.f32 %v603, %v627
    %v646 = vadd.f32 %v604, %v627
    %v647 = vadd.f32 %v605, %v627
    %v648 = vadd.f32 %v606, %v627
    %v649 = vadd.f32 %v607, %v627
    %v650 = vadd.f32 %v608, %v627
    %v651 = vadd.f32 %v609, %v627
    %v652 = vadd.f32 %v610, %v627
    %v653 = vadd.f32 %v611, %v627
    %v654 = vadd.f32 %v612, %v627
    %v655 = vadd.f32 %v613, %v627
    %v656 = vadd.f32 %v614, %v627
    %v657 = vadd.f32 %v615, %v627
    %v658 = vadd.f32 %v616, %v627
    %v659 = vadd.f32 %v617, %v627
    %v660 = vadd.f32 %v618, %v627
    %v661 = vadd.f32 %v619, %v627
    %v662 = vadd.f32 %v620, %v627
    %v663 = vadd.f32 %v621, %v627
    %v664 = vadd.f32 %v622, %v627
    %p665 = scmp.gt.s32.totalorder %s64, 0
    %s666 = scalar_select %p665, 1, 0
    %v667 = vstv %s666
    %vm668 = vcmp.eq.s32.totalorder %v667, 1
    %v669 = vsel %vm668, %v629, 0.0
    %v670 = vsel %vm668, %v630, 0.0
    %p671 = scmp.lt.s32.totalorder %s85, 16
    %s672 = scalar_select %p671, 1, 0
    %v673 = vstv %s672
    %vm674 = vcmp.eq.s32.totalorder %v673, 1
    %v675 = vsel %vm674, %v663, 0.0
    %v676 = vsel %vm674, %v664, 0.0
    %v677 = vpack.c.bf16 %v670, %v669
    %v678 = vpack.c.bf16 %v632, %v631
    %v679 = vpack.c.bf16 %v634, %v633
    %v680 = vpack.c.bf16 %v636, %v635
    %v681 = vpack.c.bf16 %v638, %v637
    %v682 = vpack.c.bf16 %v640, %v639
    %v683 = vpack.c.bf16 %v642, %v641
    %v684 = vpack.c.bf16 %v644, %v643
    %v685 = vpack.c.bf16 %v646, %v645
    %v686 = vpack.c.bf16 %v648, %v647
    %v687 = vpack.c.bf16 %v650, %v649
    %v688 = vpack.c.bf16 %v652, %v651
    %v689 = vpack.c.bf16 %v654, %v653
    %v690 = vpack.c.bf16 %v656, %v655
    %v691 = vpack.c.bf16 %v658, %v657
    %v692 = vpack.c.bf16 %v660, %v659
    %v693 = vpack.c.bf16 %v662, %v661
    %v694 = vpack.c.bf16 %v676, %v675
    %v696 = vshrl.u32 %v677, 16
    %v698 = vrot.slane %v696, 7
    %v699 = vshll.u32 %v677, 16
    %v701 = vor.u32 %v698, %v699
    %v703 = vshrl.u32 %v678, 16
    %v705 = vrot.slane %v703, 7
    %v706 = vshll.u32 %v678, 16
    %v708 = vor.u32 %v705, %v706
    %v710 = vshrl.u32 %v679, 16
    %v712 = vrot.slane %v710, 7
    %v713 = vshll.u32 %v679, 16
    %v715 = vor.u32 %v712, %v713
    %v717 = vshrl.u32 %v680, 16
    %v719 = vrot.slane %v717, 7
    %v720 = vshll.u32 %v680, 16
    %v722 = vor.u32 %v719, %v720
    %v724 = vshrl.u32 %v681, 16
    %v726 = vrot.slane %v724, 7
    %v727 = vshll.u32 %v681, 16
    %v729 = vor.u32 %v726, %v727
    %v731 = vshrl.u32 %v682, 16
    %v733 = vrot.slane %v731, 7
    %v734 = vshll.u32 %v682, 16
    %v736 = vor.u32 %v733, %v734
    %v738 = vshrl.u32 %v683, 16
    %v740 = vrot.slane %v738, 7
    %v741 = vshll.u32 %v683, 16
    %v743 = vor.u32 %v740, %v741
    %v745 = vshrl.u32 %v684, 16
    %v747 = vrot.slane %v745, 7
    %v748 = vshll.u32 %v684, 16
    %v750 = vor.u32 %v747, %v748
    %v752 = vshrl.u32 %v685, 16
    %v754 = vrot.slane %v752, 7
    %v755 = vshll.u32 %v685, 16
    %v757 = vor.u32 %v754, %v755
    %v759 = vshrl.u32 %v686, 16
    %v761 = vrot.slane %v759, 7
    %v762 = vshll.u32 %v686, 16
    %v764 = vor.u32 %v761, %v762
    %v766 = vshrl.u32 %v687, 16
    %v768 = vrot.slane %v766, 7
    %v769 = vshll.u32 %v687, 16
    %v771 = vor.u32 %v768, %v769
    %v773 = vshrl.u32 %v688, 16
    %v775 = vrot.slane %v773, 7
    %v776 = vshll.u32 %v688, 16
    %v778 = vor.u32 %v775, %v776
    %v780 = vshrl.u32 %v689, 16
    %v782 = vrot.slane %v780, 7
    %v783 = vshll.u32 %v689, 16
    %v785 = vor.u32 %v782, %v783
    %v787 = vshrl.u32 %v690, 16
    %v789 = vrot.slane %v787, 7
    %v790 = vshll.u32 %v690, 16
    %v792 = vor.u32 %v789, %v790
    %v794 = vshrl.u32 %v691, 16
    %v796 = vrot.slane %v794, 7
    %v797 = vshll.u32 %v691, 16
    %v799 = vor.u32 %v796, %v797
    %v801 = vshrl.u32 %v692, 16
    %v803 = vrot.slane %v801, 7
    %v804 = vshll.u32 %v692, 16
    %v806 = vor.u32 %v803, %v804
    %v808 = vshrl.u32 %v693, 16
    %v810 = vrot.slane %v808, 7
    %v811 = vshll.u32 %v693, 16
    %v813 = vor.u32 %v810, %v811
    %v815 = vshrl.u32 %v694, 16
    %v817 = vrot.slane %v815, 7
    %v818 = vshll.u32 %v694, 16
    %v820 = vor.u32 %v817, %v818
    %vm857 = vcmask 1040384
    %vm858 = vsmask.f32 256
    %vm859 = vmand %vm857, %vm858
    %v860 = vsel %vm859, 0, %v701
    %v861 = vsel %vm859, 0, %v708
    %v862 = vsel %vm859, 0, %v715
    %v863 = vsel %vm859, 0, %v722
    %v864 = vsel %vm859, 0, %v729
    %v865 = vsel %vm859, 0, %v736
    %v866 = vsel %vm859, 0, %v743
    %v867 = vsel %vm859, 0, %v750
    %v868 = vsel %vm859, 0, %v757
    %v869 = vsel %vm859, 0, %v764
    %v870 = vsel %vm859, 0, %v771
    %v871 = vsel %vm859, 0, %v778
    %v872 = vsel %vm859, 0, %v785
    %v873 = vsel %vm859, 0, %v792
    %v874 = vsel %vm859, 0, %v799
    %v875 = vsel %vm859, 0, %v806
    %v876 = vsel %vm859, 0, %v813
    %v877 = vsel %vm859, 0, %v820
    %v878 = vsel %vm859, %v698, 0
    %v879 = vsel %vm859, %v705, 0
    %v880 = vsel %vm859, %v712, 0
    %v881 = vsel %vm859, %v719, 0
    %v882 = vsel %vm859, %v726, 0
    %v883 = vsel %vm859, %v733, 0
    %v884 = vsel %vm859, %v740, 0
    %v885 = vsel %vm859, %v747, 0
    %v886 = vsel %vm859, %v754, 0
    %v887 = vsel %vm859, %v761, 0
    %v888 = vsel %vm859, %v768, 0
    %v889 = vsel %vm859, %v775, 0
    %v890 = vsel %vm859, %v782, 0
    %v891 = vsel %vm859, %v789, 0
    %v892 = vsel %vm859, %v796, 0
    %v893 = vsel %vm859, %v803, 0
    %v894 = vsel %vm859, %v810, 0
    %v895 = vsel %vm859, %v817, 0
    %912 = vrot.lane.b32.xlu0 %v861, 4
    %v913 = vpop.permute.xlu0 %912
    %914 = vrot.lane.b32.xlu0 %v862, 4
    %v915 = vpop.permute.xlu0 %914
    %916 = vrot.lane.b32.xlu0 %v863, 4
    %v917 = vpop.permute.xlu0 %916
    %918 = vrot.lane.b32.xlu0 %v864, 4
    %v919 = vpop.permute.xlu0 %918
    %920 = vrot.lane.b32.xlu0 %v865, 4
    %v921 = vpop.permute.xlu0 %920
    %922 = vrot.lane.b32.xlu0 %v866, 4
    %v923 = vpop.permute.xlu0 %922
    %924 = vrot.lane.b32.xlu0 %v867, 4
    %v925 = vpop.permute.xlu0 %924
    %926 = vrot.lane.b32.xlu0 %v868, 4
    %v927 = vpop.permute.xlu0 %926
    %928 = vrot.lane.b32.xlu0 %v869, 4
    %v929 = vpop.permute.xlu0 %928
    %930 = vrot.lane.b32.xlu0 %v870, 4
    %v931 = vpop.permute.xlu0 %930
    %932 = vrot.lane.b32.xlu0 %v871, 4
    %v933 = vpop.permute.xlu0 %932
    %934 = vrot.lane.b32.xlu0 %v872, 4
    %v935 = vpop.permute.xlu0 %934
    %936 = vrot.lane.b32.xlu0 %v873, 4
    %v937 = vpop.permute.xlu0 %936
    %938 = vrot.lane.b32.xlu0 %v874, 4
    %v939 = vpop.permute.xlu0 %938
    %940 = vrot.lane.b32.xlu0 %v875, 4
    %v941 = vpop.permute.xlu0 %940
    %942 = vrot.lane.b32.xlu0 %v876, 4
    %v943 = vpop.permute.xlu0 %942
    %945 = vrot.lane.b32.xlu0 %v862, 8
    %v946 = vpop.permute.xlu0 %945
    %947 = vrot.lane.b32.xlu0 %v863, 8
    %v948 = vpop.permute.xlu0 %947
    %949 = vrot.lane.b32.xlu0 %v864, 8
    %v950 = vpop.permute.xlu0 %949
    %951 = vrot.lane.b32.xlu0 %v865, 8
    %v952 = vpop.permute.xlu0 %951
    %953 = vrot.lane.b32.xlu0 %v866, 8
    %v954 = vpop.permute.xlu0 %953
    %955 = vrot.lane.b32.xlu0 %v867, 8
    %v956 = vpop.permute.xlu0 %955
    %957 = vrot.lane.b32.xlu0 %v868, 8
    %v958 = vpop.permute.xlu0 %957
    %959 = vrot.lane.b32.xlu0 %v869, 8
    %v960 = vpop.permute.xlu0 %959
    %961 = vrot.lane.b32.xlu0 %v870, 8
    %v962 = vpop.permute.xlu0 %961
    %963 = vrot.lane.b32.xlu0 %v871, 8
    %v964 = vpop.permute.xlu0 %963
    %965 = vrot.lane.b32.xlu0 %v872, 8
    %v966 = vpop.permute.xlu0 %965
    %967 = vrot.lane.b32.xlu0 %v873, 8
    %v968 = vpop.permute.xlu0 %967
    %969 = vrot.lane.b32.xlu0 %v874, 8
    %v970 = vpop.permute.xlu0 %969
    %971 = vrot.lane.b32.xlu0 %v875, 8
    %v972 = vpop.permute.xlu0 %971
    %973 = vrot.lane.b32.xlu0 %v876, 8
    %v974 = vpop.permute.xlu0 %973
    %975 = vrot.lane.b32.xlu0 %v877, 8
    %v976 = vpop.permute.xlu0 %975
    %vm977 = vcmask 31744
    %v980 = vsel %vm977, %v860, %v913
    %v983 = vsel %vm977, %v861, %v915
    %v986 = vsel %vm977, %v862, %v917
    %v989 = vsel %vm977, %v863, %v919
    %v992 = vsel %vm977, %v864, %v921
    %v995 = vsel %vm977, %v865, %v923
    %v998 = vsel %vm977, %v866, %v925
    %v1001 = vsel %vm977, %v867, %v927
    %v1004 = vsel %vm977, %v868, %v929
    %v1007 = vsel %vm977, %v869, %v931
    %v1010 = vsel %vm977, %v870, %v933
    %v1013 = vsel %vm977, %v871, %v935
    %v1016 = vsel %vm977, %v872, %v937
    %v1019 = vsel %vm977, %v873, %v939
    %v1022 = vsel %vm977, %v874, %v941
    %v1025 = vsel %vm977, %v875, %v943
    %vm1026 = vcmask 64512
    %v1028 = vsel %vm1026, %v980, %v946
    %v1030 = vsel %vm1026, %v983, %v948
    %v1032 = vsel %vm1026, %v986, %v950
    %v1034 = vsel %vm1026, %v989, %v952
    %v1036 = vsel %vm1026, %v992, %v954
    %v1038 = vsel %vm1026, %v995, %v956
    %v1040 = vsel %vm1026, %v998, %v958
    %v1042 = vsel %vm1026, %v1001, %v960
    %v1044 = vsel %vm1026, %v1004, %v962
    %v1046 = vsel %vm1026, %v1007, %v964
    %v1048 = vsel %vm1026, %v1010, %v966
    %v1050 = vsel %vm1026, %v1013, %v968
    %v1052 = vsel %vm1026, %v1016, %v970
    %v1054 = vsel %vm1026, %v1019, %v972
    %v1056 = vsel %vm1026, %v1022, %v974
    %v1058 = vsel %vm1026, %v1025, %v976
    %1075 = vrot.lane.b32.xlu0 %v879, 4
    %v1076 = vpop.permute.xlu0 %1075
    %1077 = vrot.lane.b32.xlu0 %v880, 4
    %v1078 = vpop.permute.xlu0 %1077
    %1079 = vrot.lane.b32.xlu0 %v881, 4
    %v1080 = vpop.permute.xlu0 %1079
    %1081 = vrot.lane.b32.xlu0 %v882, 4
    %v1082 = vpop.permute.xlu0 %1081
    %1083 = vrot.lane.b32.xlu0 %v883, 4
    %v1084 = vpop.permute.xlu0 %1083
    %1085 = vrot.lane.b32.xlu0 %v884, 4
    %v1086 = vpop.permute.xlu0 %1085
    %1087 = vrot.lane.b32.xlu0 %v885, 4
    %v1088 = vpop.permute.xlu0 %1087
    %1089 = vrot.lane.b32.xlu0 %v886, 4
    %v1090 = vpop.permute.xlu0 %1089
    %1091 = vrot.lane.b32.xlu0 %v887, 4
    %v1092 = vpop.permute.xlu0 %1091
    %1093 = vrot.lane.b32.xlu0 %v888, 4
    %v1094 = vpop.permute.xlu0 %1093
    %1095 = vrot.lane.b32.xlu0 %v889, 4
    %v1096 = vpop.permute.xlu0 %1095
    %1097 = vrot.lane.b32.xlu0 %v890, 4
    %v1098 = vpop.permute.xlu0 %1097
    %1099 = vrot.lane.b32.xlu0 %v891, 4
    %v1100 = vpop.permute.xlu0 %1099
    %1101 = vrot.lane.b32.xlu0 %v892, 4
    %v1102 = vpop.permute.xlu0 %1101
    %1103 = vrot.lane.b32.xlu0 %v893, 4
    %v1104 = vpop.permute.xlu0 %1103
    %1105 = vrot.lane.b32.xlu0 %v894, 4
    %v1106 = vpop.permute.xlu0 %1105
    %1108 = vrot.lane.b32.xlu0 %v880, 8
    %v1109 = vpop.permute.xlu0 %1108
    %1110 = vrot.lane.b32.xlu0 %v881, 8
    %v1111 = vpop.permute.xlu0 %1110
    %1112 = vrot.lane.b32.xlu0 %v882, 8
    %v1113 = vpop.permute.xlu0 %1112
    %1114 = vrot.lane.b32.xlu0 %v883, 8
    %v1115 = vpop.permute.xlu0 %1114
    %1116 = vrot.lane.b32.xlu0 %v884, 8
    %v1117 = vpop.permute.xlu0 %1116
    %1118 = vrot.lane.b32.xlu0 %v885, 8
    %v1119 = vpop.permute.xlu0 %1118
    %1120 = vrot.lane.b32.xlu0 %v886, 8
    %v1121 = vpop.permute.xlu0 %1120
    %1122 = vrot.lane.b32.xlu0 %v887, 8
    %v1123 = vpop.permute.xlu0 %1122
    %1124 = vrot.lane.b32.xlu0 %v888, 8
    %v1125 = vpop.permute.xlu0 %1124
    %1126 = vrot.lane.b32.xlu0 %v889, 8
    %v1127 = vpop.permute.xlu0 %1126
    %1128 = vrot.lane.b32.xlu0 %v890, 8
    %v1129 = vpop.permute.xlu0 %1128
    %1130 = vrot.lane.b32.xlu0 %v891, 8
    %v1131 = vpop.permute.xlu0 %1130
    %1132 = vrot.lane.b32.xlu0 %v892, 8
    %v1133 = vpop.permute.xlu0 %1132
    %1134 = vrot.lane.b32.xlu0 %v893, 8
    %v1135 = vpop.permute.xlu0 %1134
    %1136 = vrot.lane.b32.xlu0 %v894, 8
    %v1137 = vpop.permute.xlu0 %1136
    %1138 = vrot.lane.b32.xlu0 %v895, 8
    %v1139 = vpop.permute.xlu0 %1138
    %v1142 = vsel %vm977, %v878, %v1076
    %v1145 = vsel %vm977, %v879, %v1078
    %v1148 = vsel %vm977, %v880, %v1080
    %v1151 = vsel %vm977, %v881, %v1082
    %v1154 = vsel %vm977, %v882, %v1084
    %v1157 = vsel %vm977, %v883, %v1086
    %v1160 = vsel %vm977, %v884, %v1088
    %v1163 = vsel %vm977, %v885, %v1090
    %v1166 = vsel %vm977, %v886, %v1092
    %v1169 = vsel %vm977, %v887, %v1094
    %v1172 = vsel %vm977, %v888, %v1096
    %v1175 = vsel %vm977, %v889, %v1098
    %v1178 = vsel %vm977, %v890, %v1100
    %v1181 = vsel %vm977, %v891, %v1102
    %v1184 = vsel %vm977, %v892, %v1104
    %v1187 = vsel %vm977, %v893, %v1106
    %v1189 = vsel %vm1026, %v1142, %v1109
    %v1191 = vsel %vm1026, %v1145, %v1111
    %v1193 = vsel %vm1026, %v1148, %v1113
    %v1195 = vsel %vm1026, %v1151, %v1115
    %v1197 = vsel %vm1026, %v1154, %v1117
    %v1199 = vsel %vm1026, %v1157, %v1119
    %v1201 = vsel %vm1026, %v1160, %v1121
    %v1203 = vsel %vm1026, %v1163, %v1123
    %v1205 = vsel %vm1026, %v1166, %v1125
    %v1207 = vsel %vm1026, %v1169, %v1127
    %v1209 = vsel %vm1026, %v1172, %v1129
    %v1211 = vsel %vm1026, %v1175, %v1131
    %v1213 = vsel %vm1026, %v1178, %v1133
    %v1215 = vsel %vm1026, %v1181, %v1135
    %v1217 = vsel %vm1026, %v1184, %v1137
    %v1219 = vsel %vm1026, %v1187, %v1139
    %vm1220 = vsmask.f32 7424
    %v1221 = vshrl.u32 %v1028, 16
    %v1223 = vshll.u32 %v1028, 16
    %v1225 = vrot.slane %v1223, 1
    %v1226 = vor.u32 %v1221, %v1225
    %v1227 = vshll.u32 %v1189, 16
    %v1229 = vrot.slane %v1227, 1
    %v1230 = vsel %vm1220, %v1226, %v1229
    %v1231 = vshrl.u32 %v1030, 16
    %v1233 = vshll.u32 %v1030, 16
    %v1235 = vrot.slane %v1233, 1
    %v1236 = vor.u32 %v1231, %v1235
    %v1237 = vshll.u32 %v1191, 16
    %v1239 = vrot.slane %v1237, 1
    %v1240 = vsel %vm1220, %v1236, %v1239
    %v1241 = vshrl.u32 %v1032, 16
    %v1243 = vshll.u32 %v1032, 16
    %v1245 = vrot.slane %v1243, 1
    %v1246 = vor.u32 %v1241, %v1245
    %v1247 = vshll.u32 %v1193, 16
    %v1249 = vrot.slane %v1247, 1
    %v1250 = vsel %vm1220, %v1246, %v1249
    %v1251 = vshrl.u32 %v1034, 16
    %v1253 = vshll.u32 %v1034, 16
    %v1255 = vrot.slane %v1253, 1
    %v1256 = vor.u32 %v1251, %v1255
    %v1257 = vshll.u32 %v1195, 16
    %v1259 = vrot.slane %v1257, 1
    %v1260 = vsel %vm1220, %v1256, %v1259
    %v1261 = vshrl.u32 %v1036, 16
    %v1263 = vshll.u32 %v1036, 16
    %v1265 = vrot.slane %v1263, 1
    %v1266 = vor.u32 %v1261, %v1265
    %v1267 = vshll.u32 %v1197, 16
    %v1269 = vrot.slane %v1267, 1
    %v1270 = vsel %vm1220, %v1266, %v1269
    %v1271 = vshrl.u32 %v1038, 16
    %v1273 = vshll.u32 %v1038, 16
    %v1275 = vrot.slane %v1273, 1
    %v1276 = vor.u32 %v1271, %v1275
    %v1277 = vshll.u32 %v1199, 16
    %v1279 = vrot.slane %v1277, 1
    %v1280 = vsel %vm1220, %v1276, %v1279
    %v1281 = vshrl.u32 %v1040, 16
    %v1283 = vshll.u32 %v1040, 16
    %v1285 = vrot.slane %v1283, 1
    %v1286 = vor.u32 %v1281, %v1285
    %v1287 = vshll.u32 %v1201, 16
    %v1289 = vrot.slane %v1287, 1
    %v1290 = vsel %vm1220, %v1286, %v1289
    %v1291 = vshrl.u32 %v1042, 16
    %v1293 = vshll.u32 %v1042, 16
    %v1295 = vrot.slane %v1293, 1
    %v1296 = vor.u32 %v1291, %v1295
    %v1297 = vshll.u32 %v1203, 16
    %v1299 = vrot.slane %v1297, 1
    %v1300 = vsel %vm1220, %v1296, %v1299
    %v1301 = vshrl.u32 %v1044, 16
    %v1303 = vshll.u32 %v1044, 16
    %v1305 = vrot.slane %v1303, 1
    %v1306 = vor.u32 %v1301, %v1305
    %v1307 = vshll.u32 %v1205, 16
    %v1309 = vrot.slane %v1307, 1
    %v1310 = vsel %vm1220, %v1306, %v1309
    %v1311 = vshrl.u32 %v1046, 16
    %v1313 = vshll.u32 %v1046, 16
    %v1315 = vrot.slane %v1313, 1
    %v1316 = vor.u32 %v1311, %v1315
    %v1317 = vshll.u32 %v1207, 16
    %v1319 = vrot.slane %v1317, 1
    %v1320 = vsel %vm1220, %v1316, %v1319
    %v1321 = vshrl.u32 %v1048, 16
    %v1323 = vshll.u32 %v1048, 16
    %v1325 = vrot.slane %v1323, 1
    %v1326 = vor.u32 %v1321, %v1325
    %v1327 = vshll.u32 %v1209, 16
    %v1329 = vrot.slane %v1327, 1
    %v1330 = vsel %vm1220, %v1326, %v1329
    %v1331 = vshrl.u32 %v1050, 16
    %v1333 = vshll.u32 %v1050, 16
    %v1335 = vrot.slane %v1333, 1
    %v1336 = vor.u32 %v1331, %v1335
    %v1337 = vshll.u32 %v1211, 16
    %v1339 = vrot.slane %v1337, 1
    %v1340 = vsel %vm1220, %v1336, %v1339
    %v1341 = vshrl.u32 %v1052, 16
    %v1343 = vshll.u32 %v1052, 16
    %v1345 = vrot.slane %v1343, 1
    %v1346 = vor.u32 %v1341, %v1345
    %v1347 = vshll.u32 %v1213, 16
    %v1349 = vrot.slane %v1347, 1
    %v1350 = vsel %vm1220, %v1346, %v1349
    %v1351 = vshrl.u32 %v1054, 16
    %v1353 = vshll.u32 %v1054, 16
    %v1355 = vrot.slane %v1353, 1
    %v1356 = vor.u32 %v1351, %v1355
    %v1357 = vshll.u32 %v1215, 16
    %v1359 = vrot.slane %v1357, 1
    %v1360 = vsel %vm1220, %v1356, %v1359
    %v1361 = vshrl.u32 %v1056, 16
    %v1363 = vshll.u32 %v1056, 16
    %v1365 = vrot.slane %v1363, 1
    %v1366 = vor.u32 %v1361, %v1365
    %v1367 = vshll.u32 %v1217, 16
    %v1369 = vrot.slane %v1367, 1
    %v1370 = vsel %vm1220, %v1366, %v1369
    %v1371 = vshrl.u32 %v1058, 16
    %v1373 = vshll.u32 %v1058, 16
    %v1375 = vrot.slane %v1373, 1
    %v1376 = vor.u32 %v1371, %v1375
    %v1377 = vshll.u32 %v1219, 16
    %v1379 = vrot.slane %v1377, 1
    %v1380 = vsel %vm1220, %v1376, %v1379
    %v1383 = vunpack.c.l.b16 %v77
    %v1384 = vunpack.c.l.b16 %v78
    %v1385 = vpack.c.b16 %v1384, %v1383
    %vm1386 = vcmask 97280
    %v1388 = vsel %vm1386, %v1230, 0
    %v1391 = vsel %vm1386, %v1240, 0
    %v1394 = vsel %vm1386, %v1250, 0
    %v1397 = vsel %vm1386, %v1260, 0
    %v1400 = vsel %vm1386, %v1270, 0
    %v1403 = vsel %vm1386, %v1280, 0
    %v1406 = vsel %vm1386, %v1290, 0
    %v1409 = vsel %vm1386, %v1300, 0
    %v1412 = vsel %vm1386, %v1310, 0
    %v1415 = vsel %vm1386, %v1320, 0
    %v1418 = vsel %vm1386, %v1330, 0
    %v1421 = vsel %vm1386, %v1340, 0
    %v1424 = vsel %vm1386, %v1350, 0
    %v1427 = vsel %vm1386, %v1360, 0
    %v1430 = vsel %vm1386, %v1370, 0
    %v1433 = vsel %vm1386, %v1380, 0
    %vm1435 = vcmask 1045504
    %v1437 = vsel %vm1435, %v1385, 0
    %1439 = vmatprep.subr.bf16.mxu0 0
    %1440 = vmatpush1.bf16.msra.mxu0 0
    %1441 = vmatprep.subr.bf16.mxu0 0
    %1442 = vmatpush1.bf16.msra.mxu0 0
    %1443 = vmatprep.subr.bf16.mxu0 0
    %1444 = vmatpush1.bf16.msra.mxu0 0
    %1445 = vmatprep.subr.bf16.mxu0 0
    %1446 = vmatpush1.bf16.msra.mxu0 0
    %1447 = vmatprep.subr.bf16.mxu0 0
    %1448 = vmatpush1.bf16.msra.mxu0 0
    %1449 = vmatprep.subr.bf16.mxu0 0
    %1450 = vmatpush1.bf16.msra.mxu0 0
    %1451 = vmatprep.subr.bf16.mxu0 0
    %1452 = vmatpush1.bf16.msra.mxu0 0
    %1453 = vmatprep.subr.bf16.mxu0 0
    %1454 = vmatpush1.bf16.msra.mxu0 %v1437
    %1455 = vmatprep.subr.bf16.mxu0 0
    %1456 = vmatpush2.bf16.msra.mxu0 0
    %1457 = vmatprep.subr.bf16.mxu0 0
    %1458 = vmatpush2.bf16.msra.mxu0 0
    %1459 = vmatprep.subr.bf16.mxu0 0
    %1460 = vmatpush2.bf16.msra.mxu0 0
    %1461 = vmatprep.subr.bf16.mxu0 0
    %1462 = vmatpush2.bf16.msra.mxu0 0
    %1463 = vmatprep.subr.bf16.mxu0 0
    %1464 = vmatpush2.bf16.msra.mxu0 0
    %1465 = vmatprep.subr.bf16.mxu0 0
    %1466 = vmatpush2.bf16.msra.mxu0 0
    %1467 = vmatprep.subr.bf16.mxu0 0
    %1468 = vmatpush2.bf16.msra.mxu0 0
    %1469 = vmatprep.subr.bf16.mxu0 0
    %1470 = vmatpush2.bf16.msra.mxu0 0
    %1471 = vmatprep.mubr.bf16.mxu0 0
    %1472 = vmatmul.mubr.bf16.gmra.mxu0 %v1388
    %v1473 = vpop.f32.mrf.mxu0
    %v1474 = vadd.f32 0.0, %v1473
    %v1475 = vpop.f32.mrf.mxu0
    %v1476 = vpop.f32.mrf.mxu0
    %v1477 = vadd.f32 0.0, %v1476
    %v1478 = vpop.f32.mrf.mxu0
    %1479 = vmatprep.mubr.bf16.mxu0 0
    %1480 = vmatmul.mubr.bf16.gmra.mxu0 %v1391
    %v1481 = vpop.f32.mrf.mxu0
    %v1482 = vadd.f32 0.0, %v1481
    %v1483 = vpop.f32.mrf.mxu0
    %v1484 = vpop.f32.mrf.mxu0
    %v1485 = vadd.f32 0.0, %v1484
    %v1486 = vpop.f32.mrf.mxu0
    %1487 = vmatprep.mubr.bf16.mxu0 0
    %1488 = vmatmul.mubr.bf16.gmra.mxu0 %v1394
    %v1489 = vpop.f32.mrf.mxu0
    %v1490 = vadd.f32 0.0, %v1489
    %v1491 = vpop.f32.mrf.mxu0
    %v1492 = vpop.f32.mrf.mxu0
    %v1493 = vadd.f32 0.0, %v1492
    %v1494 = vpop.f32.mrf.mxu0
    %1495 = vmatprep.mubr.bf16.mxu0 0
    %1496 = vmatmul.mubr.bf16.gmra.mxu0 %v1397
    %v1497 = vpop.f32.mrf.mxu0
    %v1498 = vadd.f32 0.0, %v1497
    %v1499 = vpop.f32.mrf.mxu0
    %v1500 = vpop.f32.mrf.mxu0
    %v1501 = vadd.f32 0.0, %v1500
    %v1502 = vpop.f32.mrf.mxu0
    %1503 = vmatprep.mubr.bf16.mxu0 0
    %1504 = vmatmul.mubr.bf16.gmra.mxu0 %v1400
    %v1505 = vpop.f32.mrf.mxu0
    %v1506 = vadd.f32 0.0, %v1505
    %v1507 = vpop.f32.mrf.mxu0
    %v1508 = vpop.f32.mrf.mxu0
    %v1509 = vadd.f32 0.0, %v1508
    %v1510 = vpop.f32.mrf.mxu0
    %1511 = vmatprep.mubr.bf16.mxu0 0
    %1512 = vmatmul.mubr.bf16.gmra.mxu0 %v1403
    %v1513 = vpop.f32.mrf.mxu0
    %v1514 = vadd.f32 0.0, %v1513
    %v1515 = vpop.f32.mrf.mxu0
    %v1516 = vpop.f32.mrf.mxu0
    %v1517 = vadd.f32 0.0, %v1516
    %v1518 = vpop.f32.mrf.mxu0
    %1519 = vmatprep.mubr.bf16.mxu0 0
    %1520 = vmatmul.mubr.bf16.gmra.mxu0 %v1406
    %v1521 = vpop.f32.mrf.mxu0
    %v1522 = vadd.f32 0.0, %v1521
    %v1523 = vpop.f32.mrf.mxu0
    %v1524 = vpop.f32.mrf.mxu0
    %v1525 = vadd.f32 0.0, %v1524
    %v1526 = vpop.f32.mrf.mxu0
    %1527 = vmatprep.mubr.bf16.mxu0 0
    %1528 = vmatmul.mubr.bf16.gmra.mxu0 %v1409
    %v1529 = vpop.f32.mrf.mxu0
    %v1530 = vadd.f32 0.0, %v1529
    %v1531 = vpop.f32.mrf.mxu0
    %v1532 = vpop.f32.mrf.mxu0
    %v1533 = vadd.f32 0.0, %v1532
    %v1534 = vpop.f32.mrf.mxu0
    %1535 = vmatprep.mubr.bf16.mxu0 0
    %1536 = vmatmul.mubr.bf16.gmra.mxu0 %v1412
    %v1537 = vpop.f32.mrf.mxu0
    %v1538 = vadd.f32 0.0, %v1537
    %v1539 = vpop.f32.mrf.mxu0
    %v1540 = vpop.f32.mrf.mxu0
    %v1541 = vadd.f32 0.0, %v1540
    %v1542 = vpop.f32.mrf.mxu0
    %1543 = vmatprep.mubr.bf16.mxu0 0
    %1544 = vmatmul.mubr.bf16.gmra.mxu0 %v1415
    %v1545 = vpop.f32.mrf.mxu0
    %v1546 = vadd.f32 0.0, %v1545
    %v1547 = vpop.f32.mrf.mxu0
    %v1548 = vpop.f32.mrf.mxu0
    %v1549 = vadd.f32 0.0, %v1548
    %v1550 = vpop.f32.mrf.mxu0
    %1551 = vmatprep.mubr.bf16.mxu0 0
    %1552 = vmatmul.mubr.bf16.gmra.mxu0 %v1418
    %v1553 = vpop.f32.mrf.mxu0
    %v1554 = vadd.f32 0.0, %v1553
    %v1555 = vpop.f32.mrf.mxu0
    %v1556 = vpop.f32.mrf.mxu0
    %v1557 = vadd.f32 0.0, %v1556
    %v1558 = vpop.f32.mrf.mxu0
    %1559 = vmatprep.mubr.bf16.mxu0 0
    %1560 = vmatmul.mubr.bf16.gmra.mxu0 %v1421
    %v1561 = vpop.f32.mrf.mxu0
    %v1562 = vadd.f32 0.0, %v1561
    %v1563 = vpop.f32.mrf.mxu0
    %v1564 = vpop.f32.mrf.mxu0
    %v1565 = vadd.f32 0.0, %v1564
    %v1566 = vpop.f32.mrf.mxu0
    %1567 = vmatprep.mubr.bf16.mxu0 0
    %1568 = vmatmul.mubr.bf16.gmra.mxu0 %v1424
    %v1569 = vpop.f32.mrf.mxu0
    %v1570 = vadd.f32 0.0, %v1569
    %v1571 = vpop.f32.mrf.mxu0
    %v1572 = vpop.f32.mrf.mxu0
    %v1573 = vadd.f32 0.0, %v1572
    %v1574 = vpop.f32.mrf.mxu0
    %1575 = vmatprep.mubr.bf16.mxu0 0
    %1576 = vmatmul.mubr.bf16.gmra.mxu0 %v1427
    %v1577 = vpop.f32.mrf.mxu0
    %v1578 = vadd.f32 0.0, %v1577
    %v1579 = vpop.f32.mrf.mxu0
    %v1580 = vpop.f32.mrf.mxu0
    %v1581 = vadd.f32 0.0, %v1580
    %v1582 = vpop.f32.mrf.mxu0
    %1583 = vmatprep.mubr.bf16.mxu0 0
    %1584 = vmatmul.mubr.bf16.gmra.mxu0 %v1430
    %v1585 = vpop.f32.mrf.mxu0
    %v1586 = vadd.f32 0.0, %v1585
    %v1587 = vpop.f32.mrf.mxu0
    %v1588 = vpop.f32.mrf.mxu0
    %v1589 = vadd.f32 0.0, %v1588
    %v1590 = vpop.f32.mrf.mxu0
    %1591 = vmatprep.mubr.bf16.mxu0 0
    %1592 = vmatmul.mubr.bf16.gmra.mxu0 %v1433
    %v1593 = vpop.f32.mrf.mxu0
    %v1594 = vadd.f32 0.0, %v1593
    %v1595 = vpop.f32.mrf.mxu0
    %v1596 = vpop.f32.mrf.mxu0
    %v1597 = vadd.f32 0.0, %v1596
    %v1598 = vpop.f32.mrf.mxu0
    %1599 = vdwg.mxu0
    %v1602 = vunpack.c.l.b16 %v74
    %v1603 = vunpack.c.l.b16 %v75
    %v1604 = vpack.c.b16 %v1603, %v1602
    %v1605 = vsel %vm1386, %v1028, 0
    %v1607 = vsel %vm1386, %v1030, 0
    %v1609 = vsel %vm1386, %v1032, 0
    %v1611 = vsel %vm1386, %v1034, 0
    %v1613 = vsel %vm1386, %v1036, 0
    %v1615 = vsel %vm1386, %v1038, 0
    %v1617 = vsel %vm1386, %v1040, 0
    %v1619 = vsel %vm1386, %v1042, 0
    %v1621 = vsel %vm1386, %v1044, 0
    %v1623 = vsel %vm1386, %v1046, 0
    %v1625 = vsel %vm1386, %v1048, 0
    %v1627 = vsel %vm1386, %v1050, 0
    %v1629 = vsel %vm1386, %v1052, 0
    %v1631 = vsel %vm1386, %v1054, 0
    %v1633 = vsel %vm1386, %v1056, 0
    %v1635 = vsel %vm1386, %v1058, 0
    %v1638 = vsel %vm1435, %v1604, 0
    %1640 = vmatprep.subr.bf16.mxu0 0
    %1641 = vmatpush1.bf16.msra.mxu0 0
    %1642 = vmatprep.subr.bf16.mxu0 0
    %1643 = vmatpush1.bf16.msra.mxu0 0
    %1644 = vmatprep.subr.bf16.mxu0 0
    %1645 = vmatpush1.bf16.msra.mxu0 0
    %1646 = vmatprep.subr.bf16.mxu0 0
    %1647 = vmatpush1.bf16.msra.mxu0 0
    %1648 = vmatprep.subr.bf16.mxu0 0
    %1649 = vmatpush1.bf16.msra.mxu0 0
    %1650 = vmatprep.subr.bf16.mxu0 0
    %1651 = vmatpush1.bf16.msra.mxu0 0
    %1652 = vmatprep.subr.bf16.mxu0 0
    %1653 = vmatpush1.bf16.msra.mxu0 0
    %1654 = vmatprep.subr.bf16.mxu0 0
    %1655 = vmatpush1.bf16.msra.mxu0 %v1638
    %1656 = vmatprep.subr.bf16.mxu0 0
    %1657 = vmatpush2.bf16.msra.mxu0 0
    %1658 = vmatprep.subr.bf16.mxu0 0
    %1659 = vmatpush2.bf16.msra.mxu0 0
    %1660 = vmatprep.subr.bf16.mxu0 0
    %1661 = vmatpush2.bf16.msra.mxu0 0
    %1662 = vmatprep.subr.bf16.mxu0 0
    %1663 = vmatpush2.bf16.msra.mxu0 0
    %1664 = vmatprep.subr.bf16.mxu0 0
    %1665 = vmatpush2.bf16.msra.mxu0 0
    %1666 = vmatprep.subr.bf16.mxu0 0
    %1667 = vmatpush2.bf16.msra.mxu0 0
    %1668 = vmatprep.subr.bf16.mxu0 0
    %1669 = vmatpush2.bf16.msra.mxu0 0
    %1670 = vmatprep.subr.bf16.mxu0 0
    %1671 = vmatpush2.bf16.msra.mxu0 0
    %1672 = vmatprep.mubr.bf16.mxu0 0
    %1673 = vmatmul.mubr.bf16.gmra.mxu0 %v1605
    %v1674 = vpop.f32.mrf.mxu0
    %v1675 = vadd.f32 %v1474, %v1674
    %v1676 = vpop.f32.mrf.mxu0
    %v1677 = vpop.f32.mrf.mxu0
    %v1678 = vadd.f32 %v1477, %v1677
    %v1679 = vpop.f32.mrf.mxu0
    %1680 = vmatprep.mubr.bf16.mxu0 0
    %1681 = vmatmul.mubr.bf16.gmra.mxu0 %v1607
    %v1682 = vpop.f32.mrf.mxu0
    %v1683 = vadd.f32 %v1482, %v1682
    %v1684 = vpop.f32.mrf.mxu0
    %v1685 = vpop.f32.mrf.mxu0
    %v1686 = vadd.f32 %v1485, %v1685
    %v1687 = vpop.f32.mrf.mxu0
    %1688 = vmatprep.mubr.bf16.mxu0 0
    %1689 = vmatmul.mubr.bf16.gmra.mxu0 %v1609
    %v1690 = vpop.f32.mrf.mxu0
    %v1691 = vadd.f32 %v1490, %v1690
    %v1692 = vpop.f32.mrf.mxu0
    %v1693 = vpop.f32.mrf.mxu0
    %v1694 = vadd.f32 %v1493, %v1693
    %v1695 = vpop.f32.mrf.mxu0
    %1696 = vmatprep.mubr.bf16.mxu0 0
    %1697 = vmatmul.mubr.bf16.gmra.mxu0 %v1611
    %v1698 = vpop.f32.mrf.mxu0
    %v1699 = vadd.f32 %v1498, %v1698
    %v1700 = vpop.f32.mrf.mxu0
    %v1701 = vpop.f32.mrf.mxu0
    %v1702 = vadd.f32 %v1501, %v1701
    %v1703 = vpop.f32.mrf.mxu0
    %1704 = vmatprep.mubr.bf16.mxu0 0
    %1705 = vmatmul.mubr.bf16.gmra.mxu0 %v1613
    %v1706 = vpop.f32.mrf.mxu0
    %v1707 = vadd.f32 %v1506, %v1706
    %v1708 = vpop.f32.mrf.mxu0
    %v1709 = vpop.f32.mrf.mxu0
    %v1710 = vadd.f32 %v1509, %v1709
    %v1711 = vpop.f32.mrf.mxu0
    %1712 = vmatprep.mubr.bf16.mxu0 0
    %1713 = vmatmul.mubr.bf16.gmra.mxu0 %v1615
    %v1714 = vpop.f32.mrf.mxu0
    %v1715 = vadd.f32 %v1514, %v1714
    %v1716 = vpop.f32.mrf.mxu0
    %v1717 = vpop.f32.mrf.mxu0
    %v1718 = vadd.f32 %v1517, %v1717
    %v1719 = vpop.f32.mrf.mxu0
    %1720 = vmatprep.mubr.bf16.mxu0 0
    %1721 = vmatmul.mubr.bf16.gmra.mxu0 %v1617
    %v1722 = vpop.f32.mrf.mxu0
    %v1723 = vadd.f32 %v1522, %v1722
    %v1724 = vpop.f32.mrf.mxu0
    %v1725 = vpop.f32.mrf.mxu0
    %v1726 = vadd.f32 %v1525, %v1725
    %v1727 = vpop.f32.mrf.mxu0
    %1728 = vmatprep.mubr.bf16.mxu0 0
    %1729 = vmatmul.mubr.bf16.gmra.mxu0 %v1619
    %v1730 = vpop.f32.mrf.mxu0
    %v1731 = vadd.f32 %v1530, %v1730
    %v1732 = vpop.f32.mrf.mxu0
    %v1733 = vpop.f32.mrf.mxu0
    %v1734 = vadd.f32 %v1533, %v1733
    %v1735 = vpop.f32.mrf.mxu0
    %1736 = vmatprep.mubr.bf16.mxu0 0
    %1737 = vmatmul.mubr.bf16.gmra.mxu0 %v1621
    %v1738 = vpop.f32.mrf.mxu0
    %v1739 = vadd.f32 %v1538, %v1738
    %v1740 = vpop.f32.mrf.mxu0
    %v1741 = vpop.f32.mrf.mxu0
    %v1742 = vadd.f32 %v1541, %v1741
    %v1743 = vpop.f32.mrf.mxu0
    %1744 = vmatprep.mubr.bf16.mxu0 0
    %1745 = vmatmul.mubr.bf16.gmra.mxu0 %v1623
    %v1746 = vpop.f32.mrf.mxu0
    %v1747 = vadd.f32 %v1546, %v1746
    %v1748 = vpop.f32.mrf.mxu0
    %v1749 = vpop.f32.mrf.mxu0
    %v1750 = vadd.f32 %v1549, %v1749
    %v1751 = vpop.f32.mrf.mxu0
    %1752 = vmatprep.mubr.bf16.mxu0 0
    %1753 = vmatmul.mubr.bf16.gmra.mxu0 %v1625
    %v1754 = vpop.f32.mrf.mxu0
    %v1755 = vadd.f32 %v1554, %v1754
    %v1756 = vpop.f32.mrf.mxu0
    %v1757 = vpop.f32.mrf.mxu0
    %v1758 = vadd.f32 %v1557, %v1757
    %v1759 = vpop.f32.mrf.mxu0
    %1760 = vmatprep.mubr.bf16.mxu0 0
    %1761 = vmatmul.mubr.bf16.gmra.mxu0 %v1627
    %v1762 = vpop.f32.mrf.mxu0
    %v1763 = vadd.f32 %v1562, %v1762
    %v1764 = vpop.f32.mrf.mxu0
    %v1765 = vpop.f32.mrf.mxu0
    %v1766 = vadd.f32 %v1565, %v1765
    %v1767 = vpop.f32.mrf.mxu0
    %1768 = vmatprep.mubr.bf16.mxu0 0
    %1769 = vmatmul.mubr.bf16.gmra.mxu0 %v1629
    %v1770 = vpop.f32.mrf.mxu0
    %v1771 = vadd.f32 %v1570, %v1770
    %v1772 = vpop.f32.mrf.mxu0
    %v1773 = vpop.f32.mrf.mxu0
    %v1774 = vadd.f32 %v1573, %v1773
    %v1775 = vpop.f32.mrf.mxu0
    %1776 = vmatprep.mubr.bf16.mxu0 0
    %1777 = vmatmul.mubr.bf16.gmra.mxu0 %v1631
    %v1778 = vpop.f32.mrf.mxu0
    %v1779 = vadd.f32 %v1578, %v1778
    %v1780 = vpop.f32.mrf.mxu0
    %v1781 = vpop.f32.mrf.mxu0
    %v1782 = vadd.f32 %v1581, %v1781
    %v1783 = vpop.f32.mrf.mxu0
    %1784 = vmatprep.mubr.bf16.mxu0 0
    %1785 = vmatmul.mubr.bf16.gmra.mxu0 %v1633
    %v1786 = vpop.f32.mrf.mxu0
    %v1787 = vadd.f32 %v1586, %v1786
    %v1788 = vpop.f32.mrf.mxu0
    %v1789 = vpop.f32.mrf.mxu0
    %v1790 = vadd.f32 %v1589, %v1789
    %v1791 = vpop.f32.mrf.mxu0
    %1792 = vmatprep.mubr.bf16.mxu0 0
    %1793 = vmatmul.mubr.bf16.gmra.mxu0 %v1635
    %v1794 = vpop.f32.mrf.mxu0
    %v1795 = vadd.f32 %v1594, %v1794
    %v1796 = vpop.f32.mrf.mxu0
    %v1797 = vpop.f32.mrf.mxu0
    %v1798 = vadd.f32 %v1597, %v1797
    %v1799 = vpop.f32.mrf.mxu0
    %1800 = vdwg.mxu0
    %vm1833 = vcmask 1046528
    %v1834 = vrot.slane %v1028, 1
    %v1835 = vrot.slane %v1189, 1
    %v1836 = vsel %vm1833, %v1834, %v1835
    %v1837 = vrot.slane %v1030, 1
    %v1838 = vrot.slane %v1191, 1
    %v1839 = vsel %vm1833, %v1837, %v1838
    %v1840 = vrot.slane %v1032, 1
    %v1841 = vrot.slane %v1193, 1
    %v1842 = vsel %vm1833, %v1840, %v1841
    %v1843 = vrot.slane %v1034, 1
    %v1844 = vrot.slane %v1195, 1
    %v1845 = vsel %vm1833, %v1843, %v1844
    %v1846 = vrot.slane %v1036, 1
    %v1847 = vrot.slane %v1197, 1
    %v1848 = vsel %vm1833, %v1846, %v1847
    %v1849 = vrot.slane %v1038, 1
    %v1850 = vrot.slane %v1199, 1
    %v1851 = vsel %vm1833, %v1849, %v1850
    %v1852 = vrot.slane %v1040, 1
    %v1853 = vrot.slane %v1201, 1
    %v1854 = vsel %vm1833, %v1852, %v1853
    %v1855 = vrot.slane %v1042, 1
    %v1856 = vrot.slane %v1203, 1
    %v1857 = vsel %vm1833, %v1855, %v1856
    %v1858 = vrot.slane %v1044, 1
    %v1859 = vrot.slane %v1205, 1
    %v1860 = vsel %vm1833, %v1858, %v1859
    %v1861 = vrot.slane %v1046, 1
    %v1862 = vrot.slane %v1207, 1
    %v1863 = vsel %vm1833, %v1861, %v1862
    %v1864 = vrot.slane %v1048, 1
    %v1865 = vrot.slane %v1209, 1
    %v1866 = vsel %vm1833, %v1864, %v1865
    %v1867 = vrot.slane %v1050, 1
    %v1868 = vrot.slane %v1211, 1
    %v1869 = vsel %vm1833, %v1867, %v1868
    %v1870 = vrot.slane %v1052, 1
    %v1871 = vrot.slane %v1213, 1
    %v1872 = vsel %vm1833, %v1870, %v1871
    %v1873 = vrot.slane %v1054, 1
    %v1874 = vrot.slane %v1215, 1
    %v1875 = vsel %vm1833, %v1873, %v1874
    %v1876 = vrot.slane %v1056, 1
    %v1877 = vrot.slane %v1217, 1
    %v1878 = vsel %vm1833, %v1876, %v1877
    %v1879 = vrot.slane %v1058, 1
    %v1880 = vrot.slane %v1219, 1
    %v1881 = vsel %vm1833, %v1879, %v1880
    %v1884 = vunpack.c.l.b16 %v80
    %v1885 = vunpack.c.l.b16 %v81
    %v1886 = vpack.c.b16 %v1885, %v1884
    %v1888 = vsel %vm1386, %v1836, 0
    %v1891 = vsel %vm1386, %v1839, 0
    %v1894 = vsel %vm1386, %v1842, 0
    %v1897 = vsel %vm1386, %v1845, 0
    %v1900 = vsel %vm1386, %v1848, 0
    %v1903 = vsel %vm1386, %v1851, 0
    %v1906 = vsel %vm1386, %v1854, 0
    %v1909 = vsel %vm1386, %v1857, 0
    %v1912 = vsel %vm1386, %v1860, 0
    %v1915 = vsel %vm1386, %v1863, 0
    %v1918 = vsel %vm1386, %v1866, 0
    %v1921 = vsel %vm1386, %v1869, 0
    %v1924 = vsel %vm1386, %v1872, 0
    %v1927 = vsel %vm1386, %v1875, 0
    %v1930 = vsel %vm1386, %v1878, 0
    %v1933 = vsel %vm1386, %v1881, 0
    %v1936 = vsel %vm1435, %v1886, 0
    %1938 = vmatprep.subr.bf16.mxu0 0
    %1939 = vmatpush1.bf16.msra.mxu0 0
    %1940 = vmatprep.subr.bf16.mxu0 0
    %1941 = vmatpush1.bf16.msra.mxu0 0
    %1942 = vmatprep.subr.bf16.mxu0 0
    %1943 = vmatpush1.bf16.msra.mxu0 0
    %1944 = vmatprep.subr.bf16.mxu0 0
    %1945 = vmatpush1.bf16.msra.mxu0 0
    %1946 = vmatprep.subr.bf16.mxu0 0
    %1947 = vmatpush1.bf16.msra.mxu0 0
    %1948 = vmatprep.subr.bf16.mxu0 0
    %1949 = vmatpush1.bf16.msra.mxu0 0
    %1950 = vmatprep.subr.bf16.mxu0 0
    %1951 = vmatpush1.bf16.msra.mxu0 0
    %1952 = vmatprep.subr.bf16.mxu0 0
    %1953 = vmatpush1.bf16.msra.mxu0 %v1936
    %1954 = vmatprep.subr.bf16.mxu0 0
    %1955 = vmatpush2.bf16.msra.mxu0 0
    %1956 = vmatprep.subr.bf16.mxu0 0
    %1957 = vmatpush2.bf16.msra.mxu0 0
    %1958 = vmatprep.subr.bf16.mxu0 0
    %1959 = vmatpush2.bf16.msra.mxu0 0
    %1960 = vmatprep.subr.bf16.mxu0 0
    %1961 = vmatpush2.bf16.msra.mxu0 0
    %1962 = vmatprep.subr.bf16.mxu0 0
    %1963 = vmatpush2.bf16.msra.mxu0 0
    %1964 = vmatprep.subr.bf16.mxu0 0
    %1965 = vmatpush2.bf16.msra.mxu0 0
    %1966 = vmatprep.subr.bf16.mxu0 0
    %1967 = vmatpush2.bf16.msra.mxu0 0
    %1968 = vmatprep.subr.bf16.mxu0 0
    %1969 = vmatpush2.bf16.msra.mxu0 0
    %1970 = vmatprep.mubr.bf16.mxu0 0
    %1971 = vmatmul.mubr.bf16.gmra.mxu0 %v1888
    %v1972 = vpop.f32.mrf.mxu0
    %v1973 = vadd.f32 0.0, %v1972
    %v1974 = vpop.f32.mrf.mxu0
    %v1975 = vpop.f32.mrf.mxu0
    %v1976 = vadd.f32 0.0, %v1975
    %v1977 = vpop.f32.mrf.mxu0
    %1978 = vmatprep.mubr.bf16.mxu0 0
    %1979 = vmatmul.mubr.bf16.gmra.mxu0 %v1891
    %v1980 = vpop.f32.mrf.mxu0
    %v1981 = vadd.f32 0.0, %v1980
    %v1982 = vpop.f32.mrf.mxu0
    %v1983 = vpop.f32.mrf.mxu0
    %v1984 = vadd.f32 0.0, %v1983
    %v1985 = vpop.f32.mrf.mxu0
    %1986 = vmatprep.mubr.bf16.mxu0 0
    %1987 = vmatmul.mubr.bf16.gmra.mxu0 %v1894
    %v1988 = vpop.f32.mrf.mxu0
    %v1989 = vadd.f32 0.0, %v1988
    %v1990 = vpop.f32.mrf.mxu0
    %v1991 = vpop.f32.mrf.mxu0
    %v1992 = vadd.f32 0.0, %v1991
    %v1993 = vpop.f32.mrf.mxu0
    %1994 = vmatprep.mubr.bf16.mxu0 0
    %1995 = vmatmul.mubr.bf16.gmra.mxu0 %v1897
    %v1996 = vpop.f32.mrf.mxu0
    %v1997 = vadd.f32 0.0, %v1996
    %v1998 = vpop.f32.mrf.mxu0
    %v1999 = vpop.f32.mrf.mxu0
    %v2000 = vadd.f32 0.0, %v1999
    %v2001 = vpop.f32.mrf.mxu0
    %2002 = vmatprep.mubr.bf16.mxu0 0
    %2003 = vmatmul.mubr.bf16.gmra.mxu0 %v1900
    %v2004 = vpop.f32.mrf.mxu0
    %v2005 = vadd.f32 0.0, %v2004
    %v2006 = vpop.f32.mrf.mxu0
    %v2007 = vpop.f32.mrf.mxu0
    %v2008 = vadd.f32 0.0, %v2007
    %v2009 = vpop.f32.mrf.mxu0
    %2010 = vmatprep.mubr.bf16.mxu0 0
    %2011 = vmatmul.mubr.bf16.gmra.mxu0 %v1903
    %v2012 = vpop.f32.mrf.mxu0
    %v2013 = vadd.f32 0.0, %v2012
    %v2014 = vpop.f32.mrf.mxu0
    %v2015 = vpop.f32.mrf.mxu0
    %v2016 = vadd.f32 0.0, %v2015
    %v2017 = vpop.f32.mrf.mxu0
    %2018 = vmatprep.mubr.bf16.mxu0 0
    %2019 = vmatmul.mubr.bf16.gmra.mxu0 %v1906
    %v2020 = vpop.f32.mrf.mxu0
    %v2021 = vadd.f32 0.0, %v2020
    %v2022 = vpop.f32.mrf.mxu0
    %v2023 = vpop.f32.mrf.mxu0
    %v2024 = vadd.f32 0.0, %v2023
    %v2025 = vpop.f32.mrf.mxu0
    %2026 = vmatprep.mubr.bf16.mxu0 0
    %2027 = vmatmul.mubr.bf16.gmra.mxu0 %v1909
    %v2028 = vpop.f32.mrf.mxu0
    %v2029 = vadd.f32 0.0, %v2028
    %v2030 = vpop.f32.mrf.mxu0
    %v2031 = vpop.f32.mrf.mxu0
    %v2032 = vadd.f32 0.0, %v2031
    %v2033 = vpop.f32.mrf.mxu0
    %2034 = vmatprep.mubr.bf16.mxu0 0
    %2035 = vmatmul.mubr.bf16.gmra.mxu0 %v1912
    %v2036 = vpop.f32.mrf.mxu0
    %v2037 = vadd.f32 0.0, %v2036
    %v2038 = vpop.f32.mrf.mxu0
    %v2039 = vpop.f32.mrf.mxu0
    %v2040 = vadd.f32 0.0, %v2039
    %v2041 = vpop.f32.mrf.mxu0
    %2042 = vmatprep.mubr.bf16.mxu0 0
    %2043 = vmatmul.mubr.bf16.gmra.mxu0 %v1915
    %v2044 = vpop.f32.mrf.mxu0
    %v2045 = vadd.f32 0.0, %v2044
    %v2046 = vpop.f32.mrf.mxu0
    %v2047 = vpop.f32.mrf.mxu0
    %v2048 = vadd.f32 0.0, %v2047
    %v2049 = vpop.f32.mrf.mxu0
    %2050 = vmatprep.mubr.bf16.mxu0 0
    %2051 = vmatmul.mubr.bf16.gmra.mxu0 %v1918
    %v2052 = vpop.f32.mrf.mxu0
    %v2053 = vadd.f32 0.0, %v2052
    %v2054 = vpop.f32.mrf.mxu0
    %v2055 = vpop.f32.mrf.mxu0
    %v2056 = vadd.f32 0.0, %v2055
    %v2057 = vpop.f32.mrf.mxu0
    %2058 = vmatprep.mubr.bf16.mxu0 0
    %2059 = vmatmul.mubr.bf16.gmra.mxu0 %v1921
    %v2060 = vpop.f32.mrf.mxu0
    %v2061 = vadd.f32 0.0, %v2060
    %v2062 = vpop.f32.mrf.mxu0
    %v2063 = vpop.f32.mrf.mxu0
    %v2064 = vadd.f32 0.0, %v2063
    %v2065 = vpop.f32.mrf.mxu0
    %2066 = vmatprep.mubr.bf16.mxu0 0
    %2067 = vmatmul.mubr.bf16.gmra.mxu0 %v1924
    %v2068 = vpop.f32.mrf.mxu0
    %v2069 = vadd.f32 0.0, %v2068
    %v2070 = vpop.f32.mrf.mxu0
    %v2071 = vpop.f32.mrf.mxu0
    %v2072 = vadd.f32 0.0, %v2071
    %v2073 = vpop.f32.mrf.mxu0
    %2074 = vmatprep.mubr.bf16.mxu0 0
    %2075 = vmatmul.mubr.bf16.gmra.mxu0 %v1927
    %v2076 = vpop.f32.mrf.mxu0
    %v2077 = vadd.f32 0.0, %v2076
    %v2078 = vpop.f32.mrf.mxu0
    %v2079 = vpop.f32.mrf.mxu0
    %v2080 = vadd.f32 0.0, %v2079
    %v2081 = vpop.f32.mrf.mxu0
    %2082 = vmatprep.mubr.bf16.mxu0 0
    %2083 = vmatmul.mubr.bf16.gmra.mxu0 %v1930
    %v2084 = vpop.f32.mrf.mxu0
    %v2085 = vadd.f32 0.0, %v2084
    %v2086 = vpop.f32.mrf.mxu0
    %v2087 = vpop.f32.mrf.mxu0
    %v2088 = vadd.f32 0.0, %v2087
    %v2089 = vpop.f32.mrf.mxu0
    %2090 = vmatprep.mubr.bf16.mxu0 0
    %2091 = vmatmul.mubr.bf16.gmra.mxu0 %v1933
    %v2092 = vpop.f32.mrf.mxu0
    %v2093 = vadd.f32 0.0, %v2092
    %v2094 = vpop.f32.mrf.mxu0
    %v2095 = vpop.f32.mrf.mxu0
    %v2096 = vadd.f32 0.0, %v2095
    %v2097 = vpop.f32.mrf.mxu0
    %2098 = vdwg.mxu0
    %v2099 = vadd.f32 %v1675, %v1973
    %v2100 = vadd.f32 %v1678, %v1976
    %v2101 = vadd.f32 %v1683, %v1981
    %v2102 = vadd.f32 %v1686, %v1984
    %v2103 = vadd.f32 %v1691, %v1989
    %v2104 = vadd.f32 %v1694, %v1992
    %v2105 = vadd.f32 %v1699, %v1997
    %v2106 = vadd.f32 %v1702, %v2000
    %v2107 = vadd.f32 %v1707, %v2005
    %v2108 = vadd.f32 %v1710, %v2008
    %v2109 = vadd.f32 %v1715, %v2013
    %v2110 = vadd.f32 %v1718, %v2016
    %v2111 = vadd.f32 %v1723, %v2021
    %v2112 = vadd.f32 %v1726, %v2024
    %v2113 = vadd.f32 %v1731, %v2029
    %v2114 = vadd.f32 %v1734, %v2032
    %v2115 = vadd.f32 %v1739, %v2037
    %v2116 = vadd.f32 %v1742, %v2040
    %v2117 = vadd.f32 %v1747, %v2045
    %v2118 = vadd.f32 %v1750, %v2048
    %v2119 = vadd.f32 %v1755, %v2053
    %v2120 = vadd.f32 %v1758, %v2056
    %v2121 = vadd.f32 %v1763, %v2061
    %v2122 = vadd.f32 %v1766, %v2064
    %v2123 = vadd.f32 %v1771, %v2069
    %v2124 = vadd.f32 %v1774, %v2072
    %v2125 = vadd.f32 %v1779, %v2077
    %v2126 = vadd.f32 %v1782, %v2080
    %v2127 = vadd.f32 %v1787, %v2085
    %v2128 = vadd.f32 %v1790, %v2088
    %v2129 = vadd.f32 %v1795, %v2093
    %v2130 = vadd.f32 %v1798, %v2096
    %v2131 = vmax.f32 %v2099, 0.0
    %v2132 = vmax.f32 %v2100, 0.0
    %v2133 = vmax.f32 %v2101, 0.0
    %v2134 = vmax.f32 %v2102, 0.0
    %v2135 = vmax.f32 %v2103, 0.0
    %v2136 = vmax.f32 %v2104, 0.0
    %v2137 = vmax.f32 %v2105, 0.0
    %v2138 = vmax.f32 %v2106, 0.0
    %v2139 = vmax.f32 %v2107, 0.0
    %v2140 = vmax.f32 %v2108, 0.0
    %v2141 = vmax.f32 %v2109, 0.0
    %v2142 = vmax.f32 %v2110, 0.0
    %v2143 = vmax.f32 %v2111, 0.0
    %v2144 = vmax.f32 %v2112, 0.0
    %v2145 = vmax.f32 %v2113, 0.0
    %v2146 = vmax.f32 %v2114, 0.0
    %v2147 = vmax.f32 %v2115, 0.0
    %v2148 = vmax.f32 %v2116, 0.0
    %v2149 = vmax.f32 %v2117, 0.0
    %v2150 = vmax.f32 %v2118, 0.0
    %v2151 = vmax.f32 %v2119, 0.0
    %v2152 = vmax.f32 %v2120, 0.0
    %v2153 = vmax.f32 %v2121, 0.0
    %v2154 = vmax.f32 %v2122, 0.0
    %v2155 = vmax.f32 %v2123, 0.0
    %v2156 = vmax.f32 %v2124, 0.0
    %v2157 = vmax.f32 %v2125, 0.0
    %v2158 = vmax.f32 %v2126, 0.0
    %v2159 = vmax.f32 %v2127, 0.0
    %v2160 = vmax.f32 %v2128, 0.0
    %v2161 = vmax.f32 %v2129, 0.0
    %v2162 = vmax.f32 %v2130, 0.0
    %v2164 = vlaneseq
    %v2165 = vshrl.u32 %v2164, 7
    %v2166 = vsub.s32 0, %v2165
    %v2167 = vrot.slane %v69, %v2166
    %v2169 = vmul.f32 %v2131, %v2167
    %v2170 = vmul.f32 %v2132, %v2167
    %v2171 = vmul.f32 %v2133, %v2167
    %v2172 = vmul.f32 %v2134, %v2167
    %v2173 = vmul.f32 %v2135, %v2167
    %v2174 = vmul.f32 %v2136, %v2167
    %v2175 = vmul.f32 %v2137, %v2167
    %v2176 = vmul.f32 %v2138, %v2167
    %v2177 = vmul.f32 %v2139, %v2167
    %v2178 = vmul.f32 %v2140, %v2167
    %v2179 = vmul.f32 %v2141, %v2167
    %v2180 = vmul.f32 %v2142, %v2167
    %v2181 = vmul.f32 %v2143, %v2167
    %v2182 = vmul.f32 %v2144, %v2167
    %v2183 = vmul.f32 %v2145, %v2167
    %v2184 = vmul.f32 %v2146, %v2167
    %v2185 = vmul.f32 %v2147, %v2167
    %v2186 = vmul.f32 %v2148, %v2167
    %v2187 = vmul.f32 %v2149, %v2167
    %v2188 = vmul.f32 %v2150, %v2167
    %v2189 = vmul.f32 %v2151, %v2167
    %v2190 = vmul.f32 %v2152, %v2167
    %v2191 = vmul.f32 %v2153, %v2167
    %v2192 = vmul.f32 %v2154, %v2167
    %v2193 = vmul.f32 %v2155, %v2167
    %v2194 = vmul.f32 %v2156, %v2167
    %v2195 = vmul.f32 %v2157, %v2167
    %v2196 = vmul.f32 %v2158, %v2167
    %v2197 = vmul.f32 %v2159, %v2167
    %v2198 = vmul.f32 %v2160, %v2167
    %v2199 = vmul.f32 %v2161, %v2167
    %v2200 = vmul.f32 %v2162, %v2167
    %v2202 = vlaneseq
    %v2203 = vshrl.u32 %v2202, 7
    %v2204 = vsub.s32 0, %v2203
    %v2205 = vrot.slane %v70, %v2204
    %v2207 = vadd.f32 %v2169, %v2205
    %v2208 = vadd.f32 %v2170, %v2205
    %v2209 = vadd.f32 %v2171, %v2205
    %v2210 = vadd.f32 %v2172, %v2205
    %v2211 = vadd.f32 %v2173, %v2205
    %v2212 = vadd.f32 %v2174, %v2205
    %v2213 = vadd.f32 %v2175, %v2205
    %v2214 = vadd.f32 %v2176, %v2205
    %v2215 = vadd.f32 %v2177, %v2205
    %v2216 = vadd.f32 %v2178, %v2205
    %v2217 = vadd.f32 %v2179, %v2205
    %v2218 = vadd.f32 %v2180, %v2205
    %v2219 = vadd.f32 %v2181, %v2205
    %v2220 = vadd.f32 %v2182, %v2205
    %v2221 = vadd.f32 %v2183, %v2205
    %v2222 = vadd.f32 %v2184, %v2205
    %v2223 = vadd.f32 %v2185, %v2205
    %v2224 = vadd.f32 %v2186, %v2205
    %v2225 = vadd.f32 %v2187, %v2205
    %v2226 = vadd.f32 %v2188, %v2205
    %v2227 = vadd.f32 %v2189, %v2205
    %v2228 = vadd.f32 %v2190, %v2205
    %v2229 = vadd.f32 %v2191, %v2205
    %v2230 = vadd.f32 %v2192, %v2205
    %v2231 = vadd.f32 %v2193, %v2205
    %v2232 = vadd.f32 %v2194, %v2205
    %v2233 = vadd.f32 %v2195, %v2205
    %v2234 = vadd.f32 %v2196, %v2205
    %v2235 = vadd.f32 %v2197, %v2205
    %v2236 = vadd.f32 %v2198, %v2205
    %v2237 = vadd.f32 %v2199, %v2205
    %v2238 = vadd.f32 %v2200, %v2205
    %v2239 = vpack.c.bf16 %v2208, %v2207
    %v2240 = vpack.c.bf16 %v2210, %v2209
    %v2241 = vpack.c.bf16 %v2212, %v2211
    %v2242 = vpack.c.bf16 %v2214, %v2213
    %v2243 = vpack.c.bf16 %v2216, %v2215
    %v2244 = vpack.c.bf16 %v2218, %v2217
    %v2245 = vpack.c.bf16 %v2220, %v2219
    %v2246 = vpack.c.bf16 %v2222, %v2221
    %v2247 = vpack.c.bf16 %v2224, %v2223
    %v2248 = vpack.c.bf16 %v2226, %v2225
    %v2249 = vpack.c.bf16 %v2228, %v2227
    %v2250 = vpack.c.bf16 %v2230, %v2229
    %v2251 = vpack.c.bf16 %v2232, %v2231
    %v2252 = vpack.c.bf16 %v2234, %v2233
    %v2253 = vpack.c.bf16 %v2236, %v2235
    %v2254 = vpack.c.bf16 %v2238, %v2237
    %v2256 = vsel %vm977, %v2239, 0
    %v2259 = vsel %vm977, %v2240, 0
    %v2262 = vsel %vm977, %v2241, 0
    %v2265 = vsel %vm977, %v2242, 0
    %v2268 = vsel %vm977, %v2243, 0
    %v2271 = vsel %vm977, %v2244, 0
    %v2274 = vsel %vm977, %v2245, 0
    %v2277 = vsel %vm977, %v2246, 0
    %v2280 = vsel %vm977, %v2247, 0
    %v2283 = vsel %vm977, %v2248, 0
    %v2286 = vsel %vm977, %v2249, 0
    %v2289 = vsel %vm977, %v2250, 0
    %v2292 = vsel %vm977, %v2251, 0
    %v2295 = vsel %vm977, %v2252, 0
    %v2298 = vsel %vm977, %v2253, 0
    %v2301 = vsel %vm977, %v2254, 0
    %vm2303 = vcmask 1041408
    %v2305 = vsel %vm2303, %v73, 0
    %2307 = vmatprep.subr.bf16.mxu0 0
    %2308 = vmatpush1.bf16.msra.mxu0 0
    %2309 = vmatprep.subr.bf16.mxu0 0
    %2310 = vmatpush1.bf16.msra.mxu0 0
    %2311 = vmatprep.subr.bf16.mxu0 0
    %2312 = vmatpush1.bf16.msra.mxu0 0
    %2313 = vmatprep.subr.bf16.mxu0 0
    %2314 = vmatpush1.bf16.msra.mxu0 0
    %2315 = vmatprep.subr.bf16.mxu0 0
    %2316 = vmatpush1.bf16.msra.mxu0 0
    %2317 = vmatprep.subr.bf16.mxu0 0
    %2318 = vmatpush1.bf16.msra.mxu0 0
    %2319 = vmatprep.subr.bf16.mxu0 0
    %2320 = vmatpush1.bf16.msra.mxu0 0
    %2321 = vmatprep.subr.bf16.mxu0 0
    %2322 = vmatpush1.bf16.msra.mxu0 %v2305
    %2323 = vmatprep.subr.bf16.mxu0 0
    %2324 = vmatpush2.bf16.msra.mxu0 0
    %2325 = vmatprep.subr.bf16.mxu0 0
    %2326 = vmatpush2.bf16.msra.mxu0 0
    %2327 = vmatprep.subr.bf16.mxu0 0
    %2328 = vmatpush2.bf16.msra.mxu0 0
    %2329 = vmatprep.subr.bf16.mxu0 0
    %2330 = vmatpush2.bf16.msra.mxu0 0
    %2331 = vmatprep.subr.bf16.mxu0 0
    %2332 = vmatpush2.bf16.msra.mxu0 0
    %2333 = vmatprep.subr.bf16.mxu0 0
    %2334 = vmatpush2.bf16.msra.mxu0 0
    %2335 = vmatprep.subr.bf16.mxu0 0
    %2336 = vmatpush2.bf16.msra.mxu0 0
    %2337 = vmatprep.subr.bf16.mxu0 0
    %2338 = vmatpush2.bf16.msra.mxu0 0
    %2339 = vmatprep.mubr.bf16.mxu0 0
    %2340 = vmatmul.mubr.bf16.gmra.mxu0 %v2256
    %v2341 = vpop.f32.mrf.mxu0
    %v2342 = vadd.f32 %v135, %v2341
    %v2343 = vpop.f32.mrf.mxu0
    %v2344 = vpop.f32.mrf.mxu0
    %v2345 = vadd.f32 %v136, %v2344
    %v2346 = vpop.f32.mrf.mxu0
    %2347 = vmatprep.mubr.bf16.mxu0 0
    %2348 = vmatmul.mubr.bf16.gmra.mxu0 %v2259
    %v2349 = vpop.f32.mrf.mxu0
    %v2350 = vadd.f32 %v137, %v2349
    %v2351 = vpop.f32.mrf.mxu0
    %v2352 = vpop.f32.mrf.mxu0
    %v2353 = vadd.f32 %v138, %v2352
    %v2354 = vpop.f32.mrf.mxu0
    %2355 = vmatprep.mubr.bf16.mxu0 0
    %2356 = vmatmul.mubr.bf16.gmra.mxu0 %v2262
    %v2357 = vpop.f32.mrf.mxu0
    %v2358 = vadd.f32 %v139, %v2357
    %v2359 = vpop.f32.mrf.mxu0
    %v2360 = vpop.f32.mrf.mxu0
    %v2361 = vadd.f32 %v140, %v2360
    %v2362 = vpop.f32.mrf.mxu0
    %2363 = vmatprep.mubr.bf16.mxu0 0
    %2364 = vmatmul.mubr.bf16.gmra.mxu0 %v2265
    %v2365 = vpop.f32.mrf.mxu0
    %v2366 = vadd.f32 %v141, %v2365
    %v2367 = vpop.f32.mrf.mxu0
    %v2368 = vpop.f32.mrf.mxu0
    %v2369 = vadd.f32 %v142, %v2368
    %v2370 = vpop.f32.mrf.mxu0
    %2371 = vmatprep.mubr.bf16.mxu0 0
    %2372 = vmatmul.mubr.bf16.gmra.mxu0 %v2268
    %v2373 = vpop.f32.mrf.mxu0
    %v2374 = vadd.f32 %v143, %v2373
    %v2375 = vpop.f32.mrf.mxu0
    %v2376 = vpop.f32.mrf.mxu0
    %v2377 = vadd.f32 %v144, %v2376
    %v2378 = vpop.f32.mrf.mxu0
    %2379 = vmatprep.mubr.bf16.mxu0 0
    %2380 = vmatmul.mubr.bf16.gmra.mxu0 %v2271
    %v2381 = vpop.f32.mrf.mxu0
    %v2382 = vadd.f32 %v145, %v2381
    %v2383 = vpop.f32.mrf.mxu0
    %v2384 = vpop.f32.mrf.mxu0
    %v2385 = vadd.f32 %v146, %v2384
    %v2386 = vpop.f32.mrf.mxu0
    %2387 = vmatprep.mubr.bf16.mxu0 0
    %2388 = vmatmul.mubr.bf16.gmra.mxu0 %v2274
    %v2389 = vpop.f32.mrf.mxu0
    %v2390 = vadd.f32 %v147, %v2389
    %v2391 = vpop.f32.mrf.mxu0
    %v2392 = vpop.f32.mrf.mxu0
    %v2393 = vadd.f32 %v148, %v2392
    %v2394 = vpop.f32.mrf.mxu0
    %2395 = vmatprep.mubr.bf16.mxu0 0
    %2396 = vmatmul.mubr.bf16.gmra.mxu0 %v2277
    %v2397 = vpop.f32.mrf.mxu0
    %v2398 = vadd.f32 %v149, %v2397
    %v2399 = vpop.f32.mrf.mxu0
    %v2400 = vpop.f32.mrf.mxu0
    %v2401 = vadd.f32 %v150, %v2400
    %v2402 = vpop.f32.mrf.mxu0
    %2403 = vmatprep.mubr.bf16.mxu0 0
    %2404 = vmatmul.mubr.bf16.gmra.mxu0 %v2280
    %v2405 = vpop.f32.mrf.mxu0
    %v2406 = vadd.f32 %v151, %v2405
    %v2407 = vpop.f32.mrf.mxu0
    %v2408 = vpop.f32.mrf.mxu0
    %v2409 = vadd.f32 %v152, %v2408
    %v2410 = vpop.f32.mrf.mxu0
    %2411 = vmatprep.mubr.bf16.mxu0 0
    %2412 = vmatmul.mubr.bf16.gmra.mxu0 %v2283
    %v2413 = vpop.f32.mrf.mxu0
    %v2414 = vadd.f32 %v153, %v2413
    %v2415 = vpop.f32.mrf.mxu0
    %v2416 = vpop.f32.mrf.mxu0
    %v2417 = vadd.f32 %v154, %v2416
    %v2418 = vpop.f32.mrf.mxu0
    %2419 = vmatprep.mubr.bf16.mxu0 0
    %2420 = vmatmul.mubr.bf16.gmra.mxu0 %v2286
    %v2421 = vpop.f32.mrf.mxu0
    %v2422 = vadd.f32 %v155, %v2421
    %v2423 = vpop.f32.mrf.mxu0
    %v2424 = vpop.f32.mrf.mxu0
    %v2425 = vadd.f32 %v156, %v2424
    %v2426 = vpop.f32.mrf.mxu0
    %2427 = vmatprep.mubr.bf16.mxu0 0
    %2428 = vmatmul.mubr.bf16.gmra.mxu0 %v2289
    %v2429 = vpop.f32.mrf.mxu0
    %v2430 = vadd.f32 %v157, %v2429
    %v2431 = vpop.f32.mrf.mxu0
    %v2432 = vpop.f32.mrf.mxu0
    %v2433 = vadd.f32 %v158, %v2432
    %v2434 = vpop.f32.mrf.mxu0
    %2435 = vmatprep.mubr.bf16.mxu0 0
    %2436 = vmatmul.mubr.bf16.gmra.mxu0 %v2292
    %v2437 = vpop.f32.mrf.mxu0
    %v2438 = vadd.f32 %v159, %v2437
    %v2439 = vpop.f32.mrf.mxu0
    %v2440 = vpop.f32.mrf.mxu0
    %v2441 = vadd.f32 %v160, %v2440
    %v2442 = vpop.f32.mrf.mxu0
    %2443 = vmatprep.mubr.bf16.mxu0 0
    %2444 = vmatmul.mubr.bf16.gmra.mxu0 %v2295
    %v2445 = vpop.f32.mrf.mxu0
    %v2446 = vadd.f32 %v161, %v2445
    %v2447 = vpop.f32.mrf.mxu0
    %v2448 = vpop.f32.mrf.mxu0
    %v2449 = vadd.f32 %v162, %v2448
    %v2450 = vpop.f32.mrf.mxu0
    %2451 = vmatprep.mubr.bf16.mxu0 0
    %2452 = vmatmul.mubr.bf16.gmra.mxu0 %v2298
    %v2453 = vpop.f32.mrf.mxu0
    %v2454 = vadd.f32 %v163, %v2453
    %v2455 = vpop.f32.mrf.mxu0
    %v2456 = vpop.f32.mrf.mxu0
    %v2457 = vadd.f32 %v164, %v2456
    %v2458 = vpop.f32.mrf.mxu0
    %2459 = vmatprep.mubr.bf16.mxu0 0
    %2460 = vmatmul.mubr.bf16.gmra.mxu0 %v2301
    %v2461 = vpop.f32.mrf.mxu0
    %v2462 = vadd.f32 %v165, %v2461
    %v2463 = vpop.f32.mrf.mxu0
    %v2464 = vpop.f32.mrf.mxu0
    %v2465 = vadd.f32 %v166, %v2464
    %v2466 = vpop.f32.mrf.mxu0
    %2467 = vdwg.mxu0
    %v2468 = vpack.c.bf16 %v2345, %v2342
    %v2469 = vpack.c.bf16 %v2353, %v2350
    %v2470 = vpack.c.bf16 %v2361, %v2358
    %v2471 = vpack.c.bf16 %v2369, %v2366
    %v2472 = vpack.c.bf16 %v2377, %v2374
    %v2473 = vpack.c.bf16 %v2385, %v2382
    %v2474 = vpack.c.bf16 %v2393, %v2390
    %v2475 = vpack.c.bf16 %v2401, %v2398
    %v2476 = vpack.c.bf16 %v2409, %v2406
    %v2477 = vpack.c.bf16 %v2417, %v2414
    %v2478 = vpack.c.bf16 %v2425, %v2422
    %v2479 = vpack.c.bf16 %v2433, %v2430
    %v2480 = vpack.c.bf16 %v2441, %v2438
    %v2481 = vpack.c.bf16 %v2449, %v2446
    %v2482 = vpack.c.bf16 %v2457, %v2454
    %v2483 = vpack.c.bf16 %v2465, %v2462
    %v2500 = vunpack.c.l.b16 %v2468
    %v2501 = vunpack.c.h.b16 %v2468
    %v2502 = vunpack.c.l.b16 %v2469
    %v2503 = vunpack.c.h.b16 %v2469
    %v2504 = vunpack.c.l.b16 %v2470
    %v2505 = vunpack.c.h.b16 %v2470
    %v2506 = vunpack.c.l.b16 %v2471
    %v2507 = vunpack.c.h.b16 %v2471
    %v2508 = vunpack.c.l.b16 %v2472
    %v2509 = vunpack.c.h.b16 %v2472
    %v2510 = vunpack.c.l.b16 %v2473
    %v2511 = vunpack.c.h.b16 %v2473
    %v2512 = vunpack.c.l.b16 %v2474
    %v2513 = vunpack.c.h.b16 %v2474
    %v2514 = vunpack.c.l.b16 %v2475
    %v2515 = vunpack.c.h.b16 %v2475
    %v2516 = vunpack.c.l.b16 %v2476
    %v2517 = vunpack.c.h.b16 %v2476
    %v2518 = vunpack.c.l.b16 %v2477
    %v2519 = vunpack.c.h.b16 %v2477
    %v2520 = vunpack.c.l.b16 %v2478
    %v2521 = vunpack.c.h.b16 %v2478
    %v2522 = vunpack.c.l.b16 %v2479
    %v2523 = vunpack.c.h.b16 %v2479
    %v2524 = vunpack.c.l.b16 %v2480
    %v2525 = vunpack.c.h.b16 %v2480
    %v2526 = vunpack.c.l.b16 %v2481
    %v2527 = vunpack.c.h.b16 %v2481
    %v2528 = vunpack.c.l.b16 %v2482
    %v2529 = vunpack.c.h.b16 %v2482
    %v2530 = vunpack.c.l.b16 %v2483
    %v2531 = vunpack.c.h.b16 %v2483
    %v2532 = vpack.c.b16 %v2500, %v2500
    %v2533 = vpack.c.b16 %v2501, %v2501
    %v2534 = vpack.c.b16 %v2502, %v2502
    %v2535 = vpack.c.b16 %v2503, %v2503
    %v2536 = vpack.c.b16 %v2504, %v2504
    %v2537 = vpack.c.b16 %v2505, %v2505
    %v2538 = vpack.c.b16 %v2506, %v2506
    %v2539 = vpack.c.b16 %v2507, %v2507
    %v2540 = vpack.c.b16 %v2508, %v2508
    %v2541 = vpack.c.b16 %v2509, %v2509
    %v2542 = vpack.c.b16 %v2510, %v2510
    %v2543 = vpack.c.b16 %v2511, %v2511
    %v2544 = vpack.c.b16 %v2512, %v2512
    %v2545 = vpack.c.b16 %v2513, %v2513
    %v2546 = vpack.c.b16 %v2514, %v2514
    %v2547 = vpack.c.b16 %v2515, %v2515
    %v2548 = vpack.c.b16 %v2516, %v2516
    %v2549 = vpack.c.b16 %v2517, %v2517
    %v2550 = vpack.c.b16 %v2518, %v2518
    %v2551 = vpack.c.b16 %v2519, %v2519
    %v2552 = vpack.c.b16 %v2520, %v2520
    %v2553 = vpack.c.b16 %v2521, %v2521
    %v2554 = vpack.c.b16 %v2522, %v2522
    %v2555 = vpack.c.b16 %v2523, %v2523
    %v2556 = vpack.c.b16 %v2524, %v2524
    %v2557 = vpack.c.b16 %v2525, %v2525
    %v2558 = vpack.c.b16 %v2526, %v2526
    %v2559 = vpack.c.b16 %v2527, %v2527
    %v2560 = vpack.c.b16 %v2528, %v2528
    %v2561 = vpack.c.b16 %v2529, %v2529
    %v2562 = vpack.c.b16 %v2530, %v2530
    %v2563 = vpack.c.b16 %v2531, %v2531
    %vm2596 = vcmask 125952
    %2597 = vst.msk [vmem:[%s60] sm:$0xf] %vm2596, %v2532
    %2598 = vst.msk [vmem:[%s60 + $0x4] sm:$0xf] %vm2596, %v2533
    %2599 = vst.msk [vmem:[%s60 + $0x8] sm:$0xf] %vm2596, %v2534
    %2600 = vst.msk [vmem:[%s60 + $0xc] sm:$0xf] %vm2596, %v2535
    %2601 = vst.msk [vmem:[%s60 + $0x10] sm:$0xf] %vm2596, %v2536
    %2602 = vst.msk [vmem:[%s60 + $0x14] sm:$0xf] %vm2596, %v2537
    %2603 = vst.msk [vmem:[%s60 + $0x18] sm:$0xf] %vm2596, %v2538
    %2604 = vst.msk [vmem:[%s60 + $0x1c] sm:$0xf] %vm2596, %v2539
    %2605 = vst.msk [vmem:[%s60 + $0x20] sm:$0xf] %vm2596, %v2540
    %2606 = vst.msk [vmem:[%s60 + $0x24] sm:$0xf] %vm2596, %v2541
    %2607 = vst.msk [vmem:[%s60 + $0x28] sm:$0xf] %vm2596, %v2542
    %2608 = vst.msk [vmem:[%s60 + $0x2c] sm:$0xf] %vm2596, %v2543
    %2609 = vst.msk [vmem:[%s60 + $0x30] sm:$0xf] %vm2596, %v2544
    %2610 = vst.msk [vmem:[%s60 + $0x34] sm:$0xf] %vm2596, %v2545
    %2611 = vst.msk [vmem:[%s60 + $0x38] sm:$0xf] %vm2596, %v2546
    %2612 = vst.msk [vmem:[%s60 + $0x3c] sm:$0xf] %vm2596, %v2547
    %2613 = vst.msk [vmem:[%s60 + $0x40] sm:$0xf] %vm2596, %v2548
    %2614 = vst.msk [vmem:[%s60 + $0x44] sm:$0xf] %vm2596, %v2549
    %2615 = vst.msk [vmem:[%s60 + $0x48] sm:$0xf] %vm2596, %v2550
    %2616 = vst.msk [vmem:[%s60 + $0x4c] sm:$0xf] %vm2596, %v2551
    %2617 = vst.msk [vmem:[%s60 + $0x50] sm:$0xf] %vm2596, %v2552
    %2618 = vst.msk [vmem:[%s60 + $0x54] sm:$0xf] %vm2596, %v2553
    %2619 = vst.msk [vmem:[%s60 + $0x58] sm:$0xf] %vm2596, %v2554
    %2620 = vst.msk [vmem:[%s60 + $0x5c] sm:$0xf] %vm2596, %v2555
    %2621 = vst.msk [vmem:[%s60 + $0x60] sm:$0xf] %vm2596, %v2556
    %2622 = vst.msk [vmem:[%s60 + $0x64] sm:$0xf] %vm2596, %v2557
    %2623 = vst.msk [vmem:[%s60 + $0x68] sm:$0xf] %vm2596, %v2558
    %2624 = vst.msk [vmem:[%s60 + $0x6c] sm:$0xf] %vm2596, %v2559
    %2625 = vst.msk [vmem:[%s60 + $0x70] sm:$0xf] %vm2596, %v2560
    %2626 = vst.msk [vmem:[%s60 + $0x74] sm:$0xf] %vm2596, %v2561
    %2627 = vst.msk [vmem:[%s60 + $0x78] sm:$0xf] %vm2596, %v2562
    %2628 = vst.msk [vmem:[%s60 + $0x7c] sm:$0xf] %vm2596, %v2563
    %s2629 = sadd.s32 %s88, 32
    %s2630 = smul.addr %s2629, 4
    %s2631 = scalar_lea.vmem [#allocation2], %s2630
    %v2632 = vld [vmem:[%s2631] sm:$0xf]
    %v2633 = vld [vmem:[%s2631 + $0x4] sm:$0xf]
    %s2634 = sadd.s32 %s93, 32
    %s2635 = smul.addr %s2634, 4
    %s2636 = scalar_lea.vmem [#allocation2], %s2635
    %v2637 = vld [vmem:[%s2636] sm:$0xf]
    %v2638 = vld [vmem:[%s2636 + $0x4] sm:$0xf]
    %v2639 = vld [vmem:[%s2636 + $0x8] sm:$0xf]
    %v2640 = vld [vmem:[%s2636 + $0xc] sm:$0xf]
    %v2641 = vld [vmem:[%s2636 + $0x10] sm:$0xf]
    %v2642 = vld [vmem:[%s2636 + $0x14] sm:$0xf]
    %v2643 = vld [vmem:[%s2636 + $0x18] sm:$0xf]
    %v2644 = vld [vmem:[%s2636 + $0x1c] sm:$0xf]
    %v2645 = vld [vmem:[%s2636 + $0x20] sm:$0xf]
    %v2646 = vld [vmem:[%s2636 + $0x24] sm:$0xf]
    %v2647 = vld [vmem:[%s2636 + $0x28] sm:$0xf]
    %v2648 = vld [vmem:[%s2636 + $0x2c] sm:$0xf]
    %v2649 = vld [vmem:[%s2636 + $0x30] sm:$0xf]
    %v2650 = vld [vmem:[%s2636 + $0x34] sm:$0xf]
    %v2651 = vld [vmem:[%s2636 + $0x38] sm:$0xf]
    %v2652 = vld [vmem:[%s2636 + $0x3c] sm:$0xf]
    %v2653 = vld [vmem:[%s2636 + $0x40] sm:$0xf]
    %v2654 = vld [vmem:[%s2636 + $0x44] sm:$0xf]
    %v2655 = vld [vmem:[%s2636 + $0x48] sm:$0xf]
    %v2656 = vld [vmem:[%s2636 + $0x4c] sm:$0xf]
    %v2657 = vld [vmem:[%s2636 + $0x50] sm:$0xf]
    %v2658 = vld [vmem:[%s2636 + $0x54] sm:$0xf]
    %v2659 = vld [vmem:[%s2636 + $0x58] sm:$0xf]
    %v2660 = vld [vmem:[%s2636 + $0x5c] sm:$0xf]
    %v2661 = vld [vmem:[%s2636 + $0x60] sm:$0xf]
    %v2662 = vld [vmem:[%s2636 + $0x64] sm:$0xf]
    %v2663 = vld [vmem:[%s2636 + $0x68] sm:$0xf]
    %v2664 = vld [vmem:[%s2636 + $0x6c] sm:$0xf]
    %v2665 = vld [vmem:[%s2636 + $0x70] sm:$0xf]
    %v2666 = vld [vmem:[%s2636 + $0x74] sm:$0xf]
    %v2667 = vld [vmem:[%s2636 + $0x78] sm:$0xf]
    %v2668 = vld [vmem:[%s2636 + $0x7c] sm:$0xf]
    %s2669 = sadd.s32 %s128, 32
    %s2670 = smul.addr %s2669, 4
    %s2671 = scalar_lea.vmem [#allocation2], %s2670
    %v2672 = vld [vmem:[%s2671] sm:$0xf]
    %v2673 = vld [vmem:[%s2671 + $0x4] sm:$0xf]
    %v2674 = vunpack.c.l.bf16 %v2632
    %v2675 = vunpack.c.l.bf16 %v2633
    %v2676 = vunpack.c.l.bf16 %v2637
    %v2677 = vunpack.c.l.bf16 %v2638
    %v2678 = vunpack.c.l.bf16 %v2639
    %v2679 = vunpack.c.l.bf16 %v2640
    %v2680 = vunpack.c.l.bf16 %v2641
    %v2681 = vunpack.c.l.bf16 %v2642
    %v2682 = vunpack.c.l.bf16 %v2643
    %v2683 = vunpack.c.l.bf16 %v2644
    %v2684 = vunpack.c.l.bf16 %v2645
    %v2685 = vunpack.c.l.bf16 %v2646
    %v2686 = vunpack.c.l.bf16 %v2647
    %v2687 = vunpack.c.l.bf16 %v2648
    %v2688 = vunpack.c.l.bf16 %v2649
    %v2689 = vunpack.c.l.bf16 %v2650
    %v2690 = vunpack.c.l.bf16 %v2651
    %v2691 = vunpack.c.l.bf16 %v2652
    %v2692 = vunpack.c.l.bf16 %v2653
    %v2693 = vunpack.c.l.bf16 %v2654
    %v2694 = vunpack.c.l.bf16 %v2655
    %v2695 = vunpack.c.l.bf16 %v2656
    %v2696 = vunpack.c.l.bf16 %v2657
    %v2697 = vunpack.c.l.bf16 %v2658
    %v2698 = vunpack.c.l.bf16 %v2659
    %v2699 = vunpack.c.l.bf16 %v2660
    %v2700 = vunpack.c.l.bf16 %v2661
    %v2701 = vunpack.c.l.bf16 %v2662
    %v2702 = vunpack.c.l.bf16 %v2663
    %v2703 = vunpack.c.l.bf16 %v2664
    %v2704 = vunpack.c.l.bf16 %v2665
    %v2705 = vunpack.c.l.bf16 %v2666
    %v2706 = vunpack.c.l.bf16 %v2667
    %v2707 = vunpack.c.l.bf16 %v2668
    %v2708 = vunpack.c.l.bf16 %v2672
    %v2709 = vunpack.c.l.bf16 %v2673
    %v2710 = vmax.f32 %v2674, 0.0
    %v2711 = vmax.f32 %v2675, 0.0
    %v2712 = vmax.f32 %v2676, 0.0
    %v2713 = vmax.f32 %v2677, 0.0
    %v2714 = vmax.f32 %v2678, 0.0
    %v2715 = vmax.f32 %v2679, 0.0
    %v2716 = vmax.f32 %v2680, 0.0
    %v2717 = vmax.f32 %v2681, 0.0
    %v2718 = vmax.f32 %v2682, 0.0
    %v2719 = vmax.f32 %v2683, 0.0
    %v2720 = vmax.f32 %v2684, 0.0
    %v2721 = vmax.f32 %v2685, 0.0
    %v2722 = vmax.f32 %v2686, 0.0
    %v2723 = vmax.f32 %v2687, 0.0
    %v2724 = vmax.f32 %v2688, 0.0
    %v2725 = vmax.f32 %v2689, 0.0
    %v2726 = vmax.f32 %v2690, 0.0
    %v2727 = vmax.f32 %v2691, 0.0
    %v2728 = vmax.f32 %v2692, 0.0
    %v2729 = vmax.f32 %v2693, 0.0
    %v2730 = vmax.f32 %v2694, 0.0
    %v2731 = vmax.f32 %v2695, 0.0
    %v2732 = vmax.f32 %v2696, 0.0
    %v2733 = vmax.f32 %v2697, 0.0
    %v2734 = vmax.f32 %v2698, 0.0
    %v2735 = vmax.f32 %v2699, 0.0
    %v2736 = vmax.f32 %v2700, 0.0
    %v2737 = vmax.f32 %v2701, 0.0
    %v2738 = vmax.f32 %v2702, 0.0
    %v2739 = vmax.f32 %v2703, 0.0
    %v2740 = vmax.f32 %v2704, 0.0
    %v2741 = vmax.f32 %v2705, 0.0
    %v2742 = vmax.f32 %v2706, 0.0
    %v2743 = vmax.f32 %v2707, 0.0
    %v2744 = vmax.f32 %v2708, 0.0
    %v2745 = vmax.f32 %v2709, 0.0
    %v2746 = vmul.f32 %v2710, %v209
    %v2747 = vmul.f32 %v2711, %v209
    %v2748 = vmul.f32 %v2712, %v209
    %v2749 = vmul.f32 %v2713, %v209
    %v2750 = vmul.f32 %v2714, %v209
    %v2751 = vmul.f32 %v2715, %v209
    %v2752 = vmul.f32 %v2716, %v209
    %v2753 = vmul.f32 %v2717, %v209
    %v2754 = vmul.f32 %v2718, %v209
    %v2755 = vmul.f32 %v2719, %v209
    %v2756 = vmul.f32 %v2720, %v209
    %v2757 = vmul.f32 %v2721, %v209
    %v2758 = vmul.f32 %v2722, %v209
    %v2759 = vmul.f32 %v2723, %v209
    %v2760 = vmul.f32 %v2724, %v209
    %v2761 = vmul.f32 %v2725, %v209
    %v2762 = vmul.f32 %v2726, %v209
    %v2763 = vmul.f32 %v2727, %v209
    %v2764 = vmul.f32 %v2728, %v209
    %v2765 = vmul.f32 %v2729, %v209
    %v2766 = vmul.f32 %v2730, %v209
    %v2767 = vmul.f32 %v2731, %v209
    %v2768 = vmul.f32 %v2732, %v209
    %v2769 = vmul.f32 %v2733, %v209
    %v2770 = vmul.f32 %v2734, %v209
    %v2771 = vmul.f32 %v2735, %v209
    %v2772 = vmul.f32 %v2736, %v209
    %v2773 = vmul.f32 %v2737, %v209
    %v2774 = vmul.f32 %v2738, %v209
    %v2775 = vmul.f32 %v2739, %v209
    %v2776 = vmul.f32 %v2740, %v209
    %v2777 = vmul.f32 %v2741, %v209
    %v2778 = vmul.f32 %v2742, %v209
    %v2779 = vmul.f32 %v2743, %v209
    %v2780 = vmul.f32 %v2744, %v209
    %v2781 = vmul.f32 %v2745, %v209
    %v2782 = vadd.f32 %v2746, %v251
    %v2783 = vadd.f32 %v2747, %v251
    %v2784 = vadd.f32 %v2748, %v251
    %v2785 = vadd.f32 %v2749, %v251
    %v2786 = vadd.f32 %v2750, %v251
    %v2787 = vadd.f32 %v2751, %v251
    %v2788 = vadd.f32 %v2752, %v251
    %v2789 = vadd.f32 %v2753, %v251
    %v2790 = vadd.f32 %v2754, %v251
    %v2791 = vadd.f32 %v2755, %v251
    %v2792 = vadd.f32 %v2756, %v251
    %v2793 = vadd.f32 %v2757, %v251
    %v2794 = vadd.f32 %v2758, %v251
    %v2795 = vadd.f32 %v2759, %v251
    %v2796 = vadd.f32 %v2760, %v251
    %v2797 = vadd.f32 %v2761, %v251
    %v2798 = vadd.f32 %v2762, %v251
    %v2799 = vadd.f32 %v2763, %v251
    %v2800 = vadd.f32 %v2764, %v251
    %v2801 = vadd.f32 %v2765, %v251
    %v2802 = vadd.f32 %v2766, %v251
    %v2803 = vadd.f32 %v2767, %v251
    %v2804 = vadd.f32 %v2768, %v251
    %v2805 = vadd.f32 %v2769, %v251
    %v2806 = vadd.f32 %v2770, %v251
    %v2807 = vadd.f32 %v2771, %v251
    %v2808 = vadd.f32 %v2772, %v251
    %v2809 = vadd.f32 %v2773, %v251
    %v2810 = vadd.f32 %v2774, %v251
    %v2811 = vadd.f32 %v2775, %v251
    %v2812 = vadd.f32 %v2776, %v251
    %v2813 = vadd.f32 %v2777, %v251
    %v2814 = vadd.f32 %v2778, %v251
    %v2815 = vadd.f32 %v2779, %v251
    %v2816 = vadd.f32 %v2780, %v251
    %v2817 = vadd.f32 %v2781, %v251
    %v2818 = vpack.c.bf16 %v2783, %v2782
    %v2819 = vpack.c.bf16 %v2785, %v2784
    %v2820 = vpack.c.bf16 %v2787, %v2786
    %v2821 = vpack.c.bf16 %v2789, %v2788
    %v2822 = vpack.c.bf16 %v2791, %v2790
    %v2823 = vpack.c.bf16 %v2793, %v2792
    %v2824 = vpack.c.bf16 %v2795, %v2794
    %v2825 = vpack.c.bf16 %v2797, %v2796
    %v2826 = vpack.c.bf16 %v2799, %v2798
    %v2827 = vpack.c.bf16 %v2801, %v2800
    %v2828 = vpack.c.bf16 %v2803, %v2802
    %v2829 = vpack.c.bf16 %v2805, %v2804
    %v2830 = vpack.c.bf16 %v2807, %v2806
    %v2831 = vpack.c.bf16 %v2809, %v2808
    %v2832 = vpack.c.bf16 %v2811, %v2810
    %v2833 = vpack.c.bf16 %v2813, %v2812
    %v2834 = vpack.c.bf16 %v2815, %v2814
    %v2835 = vpack.c.bf16 %v2817, %v2816
    %v2837 = vsel %vm313, %v2818, 0
    %v2840 = vsel %vm313, %v2819, 0
    %v2843 = vsel %vm313, %v2820, 0
    %v2846 = vsel %vm313, %v2821, 0
    %v2849 = vsel %vm313, %v2822, 0
    %v2852 = vsel %vm313, %v2823, 0
    %v2855 = vsel %vm313, %v2824, 0
    %v2858 = vsel %vm313, %v2825, 0
    %v2861 = vsel %vm313, %v2826, 0
    %v2864 = vsel %vm313, %v2827, 0
    %v2867 = vsel %vm313, %v2828, 0
    %v2870 = vsel %vm313, %v2829, 0
    %v2873 = vsel %vm313, %v2830, 0
    %v2876 = vsel %vm313, %v2831, 0
    %v2879 = vsel %vm313, %v2832, 0
    %v2882 = vsel %vm313, %v2833, 0
    %v2885 = vsel %vm313, %v2834, 0
    %v2888 = vsel %vm313, %v2835, 0
    %2890 = vmatprep.subr.bf16.mxu0 0
    %2891 = vmatpush1.bf16.msra.mxu0 0
    %2892 = vmatprep.subr.bf16.mxu0 0
    %2893 = vmatpush1.bf16.msra.mxu0 0
    %2894 = vmatprep.subr.bf16.mxu0 0
    %2895 = vmatpush1.bf16.msra.mxu0 0
    %2896 = vmatprep.subr.bf16.mxu0 0
    %2897 = vmatpush1.bf16.msra.mxu0 0
    %2898 = vmatprep.subr.bf16.mxu0 0
    %2899 = vmatpush1.bf16.msra.mxu0 0
    %2900 = vmatprep.subr.bf16.mxu0 0
    %2901 = vmatpush1.bf16.msra.mxu0 0
    %2902 = vmatprep.subr.bf16.mxu0 0
    %2903 = vmatpush1.bf16.msra.mxu0 0
    %2904 = vmatprep.subr.bf16.mxu0 0
    %2905 = vmatpush1.bf16.msra.mxu0 %v311
    %2906 = vmatprep.subr.bf16.mxu0 0
    %2907 = vmatpush2.bf16.msra.mxu0 0
    %2908 = vmatprep.subr.bf16.mxu0 0
    %2909 = vmatpush2.bf16.msra.mxu0 0
    %2910 = vmatprep.subr.bf16.mxu0 0
    %2911 = vmatpush2.bf16.msra.mxu0 0
    %2912 = vmatprep.subr.bf16.mxu0 0
    %2913 = vmatpush2.bf16.msra.mxu0 0
    %2914 = vmatprep.subr.bf16.mxu0 0
    %2915 = vmatpush2.bf16.msra.mxu0 0
    %2916 = vmatprep.subr.bf16.mxu0 0
    %2917 = vmatpush2.bf16.msra.mxu0 0
    %2918 = vmatprep.subr.bf16.mxu0 0
    %2919 = vmatpush2.bf16.msra.mxu0 0
    %2920 = vmatprep.subr.bf16.mxu0 0
    %2921 = vmatpush2.bf16.msra.mxu0 0
    %2922 = vmatprep.mubr.bf16.mxu0 0
    %2923 = vmatmul.mubr.bf16.gmra.mxu0 %v2837
    %v2924 = vpop.f32.mrf.mxu0
    %v2925 = vadd.f32 0.0, %v2924
    %v2926 = vpop.f32.mrf.mxu0
    %v2927 = vpop.f32.mrf.mxu0
    %v2928 = vadd.f32 0.0, %v2927
    %v2929 = vpop.f32.mrf.mxu0
    %2930 = vmatprep.mubr.bf16.mxu0 0
    %2931 = vmatmul.mubr.bf16.gmra.mxu0 %v2840
    %v2932 = vpop.f32.mrf.mxu0
    %v2933 = vadd.f32 0.0, %v2932
    %v2934 = vpop.f32.mrf.mxu0
    %v2935 = vpop.f32.mrf.mxu0
    %v2936 = vadd.f32 0.0, %v2935
    %v2937 = vpop.f32.mrf.mxu0
    %2938 = vmatprep.mubr.bf16.mxu0 0
    %2939 = vmatmul.mubr.bf16.gmra.mxu0 %v2843
    %v2940 = vpop.f32.mrf.mxu0
    %v2941 = vadd.f32 0.0, %v2940
    %v2942 = vpop.f32.mrf.mxu0
    %v2943 = vpop.f32.mrf.mxu0
    %v2944 = vadd.f32 0.0, %v2943
    %v2945 = vpop.f32.mrf.mxu0
    %2946 = vmatprep.mubr.bf16.mxu0 0
    %2947 = vmatmul.mubr.bf16.gmra.mxu0 %v2846
    %v2948 = vpop.f32.mrf.mxu0
    %v2949 = vadd.f32 0.0, %v2948
    %v2950 = vpop.f32.mrf.mxu0
    %v2951 = vpop.f32.mrf.mxu0
    %v2952 = vadd.f32 0.0, %v2951
    %v2953 = vpop.f32.mrf.mxu0
    %2954 = vmatprep.mubr.bf16.mxu0 0
    %2955 = vmatmul.mubr.bf16.gmra.mxu0 %v2849
    %v2956 = vpop.f32.mrf.mxu0
    %v2957 = vadd.f32 0.0, %v2956
    %v2958 = vpop.f32.mrf.mxu0
    %v2959 = vpop.f32.mrf.mxu0
    %v2960 = vadd.f32 0.0, %v2959
    %v2961 = vpop.f32.mrf.mxu0
    %2962 = vmatprep.mubr.bf16.mxu0 0
    %2963 = vmatmul.mubr.bf16.gmra.mxu0 %v2852
    %v2964 = vpop.f32.mrf.mxu0
    %v2965 = vadd.f32 0.0, %v2964
    %v2966 = vpop.f32.mrf.mxu0
    %v2967 = vpop.f32.mrf.mxu0
    %v2968 = vadd.f32 0.0, %v2967
    %v2969 = vpop.f32.mrf.mxu0
    %2970 = vmatprep.mubr.bf16.mxu0 0
    %2971 = vmatmul.mubr.bf16.gmra.mxu0 %v2855
    %v2972 = vpop.f32.mrf.mxu0
    %v2973 = vadd.f32 0.0, %v2972
    %v2974 = vpop.f32.mrf.mxu0
    %v2975 = vpop.f32.mrf.mxu0
    %v2976 = vadd.f32 0.0, %v2975
    %v2977 = vpop.f32.mrf.mxu0
    %2978 = vmatprep.mubr.bf16.mxu0 0
    %2979 = vmatmul.mubr.bf16.gmra.mxu0 %v2858
    %v2980 = vpop.f32.mrf.mxu0
    %v2981 = vadd.f32 0.0, %v2980
    %v2982 = vpop.f32.mrf.mxu0
    %v2983 = vpop.f32.mrf.mxu0
    %v2984 = vadd.f32 0.0, %v2983
    %v2985 = vpop.f32.mrf.mxu0
    %2986 = vmatprep.mubr.bf16.mxu0 0
    %2987 = vmatmul.mubr.bf16.gmra.mxu0 %v2861
    %v2988 = vpop.f32.mrf.mxu0
    %v2989 = vadd.f32 0.0, %v2988
    %v2990 = vpop.f32.mrf.mxu0
    %v2991 = vpop.f32.mrf.mxu0
    %v2992 = vadd.f32 0.0, %v2991
    %v2993 = vpop.f32.mrf.mxu0
    %2994 = vmatprep.mubr.bf16.mxu0 0
    %2995 = vmatmul.mubr.bf16.gmra.mxu0 %v2864
    %v2996 = vpop.f32.mrf.mxu0
    %v2997 = vadd.f32 0.0, %v2996
    %v2998 = vpop.f32.mrf.mxu0
    %v2999 = vpop.f32.mrf.mxu0
    %v3000 = vadd.f32 0.0, %v2999
    %v3001 = vpop.f32.mrf.mxu0
    %3002 = vmatprep.mubr.bf16.mxu0 0
    %3003 = vmatmul.mubr.bf16.gmra.mxu0 %v2867
    %v3004 = vpop.f32.mrf.mxu0
    %v3005 = vadd.f32 0.0, %v3004
    %v3006 = vpop.f32.mrf.mxu0
    %v3007 = vpop.f32.mrf.mxu0
    %v3008 = vadd.f32 0.0, %v3007
    %v3009 = vpop.f32.mrf.mxu0
    %3010 = vmatprep.mubr.bf16.mxu0 0
    %3011 = vmatmul.mubr.bf16.gmra.mxu0 %v2870
    %v3012 = vpop.f32.mrf.mxu0
    %v3013 = vadd.f32 0.0, %v3012
    %v3014 = vpop.f32.mrf.mxu0
    %v3015 = vpop.f32.mrf.mxu0
    %v3016 = vadd.f32 0.0, %v3015
    %v3017 = vpop.f32.mrf.mxu0
    %3018 = vmatprep.mubr.bf16.mxu0 0
    %3019 = vmatmul.mubr.bf16.gmra.mxu0 %v2873
    %v3020 = vpop.f32.mrf.mxu0
    %v3021 = vadd.f32 0.0, %v3020
    %v3022 = vpop.f32.mrf.mxu0
    %v3023 = vpop.f32.mrf.mxu0
    %v3024 = vadd.f32 0.0, %v3023
    %v3025 = vpop.f32.mrf.mxu0
    %3026 = vmatprep.mubr.bf16.mxu0 0
    %3027 = vmatmul.mubr.bf16.gmra.mxu0 %v2876
    %v3028 = vpop.f32.mrf.mxu0
    %v3029 = vadd.f32 0.0, %v3028
    %v3030 = vpop.f32.mrf.mxu0
    %v3031 = vpop.f32.mrf.mxu0
    %v3032 = vadd.f32 0.0, %v3031
    %v3033 = vpop.f32.mrf.mxu0
    %3034 = vmatprep.mubr.bf16.mxu0 0
    %3035 = vmatmul.mubr.bf16.gmra.mxu0 %v2879
    %v3036 = vpop.f32.mrf.mxu0
    %v3037 = vadd.f32 0.0, %v3036
    %v3038 = vpop.f32.mrf.mxu0
    %v3039 = vpop.f32.mrf.mxu0
    %v3040 = vadd.f32 0.0, %v3039
    %v3041 = vpop.f32.mrf.mxu0
    %3042 = vmatprep.mubr.bf16.mxu0 0
    %3043 = vmatmul.mubr.bf16.gmra.mxu0 %v2882
    %v3044 = vpop.f32.mrf.mxu0
    %v3045 = vadd.f32 0.0, %v3044
    %v3046 = vpop.f32.mrf.mxu0
    %v3047 = vpop.f32.mrf.mxu0
    %v3048 = vadd.f32 0.0, %v3047
    %v3049 = vpop.f32.mrf.mxu0
    %3050 = vmatprep.mubr.bf16.mxu0 0
    %3051 = vmatmul.mubr.bf16.gmra.mxu0 %v2885
    %v3052 = vpop.f32.mrf.mxu0
    %v3053 = vadd.f32 0.0, %v3052
    %v3054 = vpop.f32.mrf.mxu0
    %v3055 = vpop.f32.mrf.mxu0
    %v3056 = vadd.f32 0.0, %v3055
    %v3057 = vpop.f32.mrf.mxu0
    %3058 = vmatprep.mubr.bf16.mxu0 0
    %3059 = vmatmul.mubr.bf16.gmra.mxu0 %v2888
    %v3060 = vpop.f32.mrf.mxu0
    %v3061 = vadd.f32 0.0, %v3060
    %v3062 = vpop.f32.mrf.mxu0
    %v3063 = vpop.f32.mrf.mxu0
    %v3064 = vadd.f32 0.0, %v3063
    %v3065 = vpop.f32.mrf.mxu0
    %3066 = vdwg.mxu0
    %v3067 = vmax.f32 %v2925, 0.0
    %v3068 = vmax.f32 %v2928, 0.0
    %v3069 = vmax.f32 %v2933, 0.0
    %v3070 = vmax.f32 %v2936, 0.0
    %v3071 = vmax.f32 %v2941, 0.0
    %v3072 = vmax.f32 %v2944, 0.0
    %v3073 = vmax.f32 %v2949, 0.0
    %v3074 = vmax.f32 %v2952, 0.0
    %v3075 = vmax.f32 %v2957, 0.0
    %v3076 = vmax.f32 %v2960, 0.0
    %v3077 = vmax.f32 %v2965, 0.0
    %v3078 = vmax.f32 %v2968, 0.0
    %v3079 = vmax.f32 %v2973, 0.0
    %v3080 = vmax.f32 %v2976, 0.0
    %v3081 = vmax.f32 %v2981, 0.0
    %v3082 = vmax.f32 %v2984, 0.0
    %v3083 = vmax.f32 %v2989, 0.0
    %v3084 = vmax.f32 %v2992, 0.0
    %v3085 = vmax.f32 %v2997, 0.0
    %v3086 = vmax.f32 %v3000, 0.0
    %v3087 = vmax.f32 %v3005, 0.0
    %v3088 = vmax.f32 %v3008, 0.0
    %v3089 = vmax.f32 %v3013, 0.0
    %v3090 = vmax.f32 %v3016, 0.0
    %v3091 = vmax.f32 %v3021, 0.0
    %v3092 = vmax.f32 %v3024, 0.0
    %v3093 = vmax.f32 %v3029, 0.0
    %v3094 = vmax.f32 %v3032, 0.0
    %v3095 = vmax.f32 %v3037, 0.0
    %v3096 = vmax.f32 %v3040, 0.0
    %v3097 = vmax.f32 %v3045, 0.0
    %v3098 = vmax.f32 %v3048, 0.0
    %v3099 = vmax.f32 %v3053, 0.0
    %v3100 = vmax.f32 %v3056, 0.0
    %v3101 = vmax.f32 %v3061, 0.0
    %v3102 = vmax.f32 %v3064, 0.0
    %v3103 = vmul.f32 %v3067, %v585
    %v3104 = vmul.f32 %v3068, %v585
    %v3105 = vmul.f32 %v3069, %v585
    %v3106 = vmul.f32 %v3070, %v585
    %v3107 = vmul.f32 %v3071, %v585
    %v3108 = vmul.f32 %v3072, %v585
    %v3109 = vmul.f32 %v3073, %v585
    %v3110 = vmul.f32 %v3074, %v585
    %v3111 = vmul.f32 %v3075, %v585
    %v3112 = vmul.f32 %v3076, %v585
    %v3113 = vmul.f32 %v3077, %v585
    %v3114 = vmul.f32 %v3078, %v585
    %v3115 = vmul.f32 %v3079, %v585
    %v3116 = vmul.f32 %v3080, %v585
    %v3117 = vmul.f32 %v3081, %v585
    %v3118 = vmul.f32 %v3082, %v585
    %v3119 = vmul.f32 %v3083, %v585
    %v3120 = vmul.f32 %v3084, %v585
    %v3121 = vmul.f32 %v3085, %v585
    %v3122 = vmul.f32 %v3086, %v585
    %v3123 = vmul.f32 %v3087, %v585
    %v3124 = vmul.f32 %v3088, %v585
    %v3125 = vmul.f32 %v3089, %v585
    %v3126 = vmul.f32 %v3090, %v585
    %v3127 = vmul.f32 %v3091, %v585
    %v3128 = vmul.f32 %v3092, %v585
    %v3129 = vmul.f32 %v3093, %v585
    %v3130 = vmul.f32 %v3094, %v585
    %v3131 = vmul.f32 %v3095, %v585
    %v3132 = vmul.f32 %v3096, %v585
    %v3133 = vmul.f32 %v3097, %v585
    %v3134 = vmul.f32 %v3098, %v585
    %v3135 = vmul.f32 %v3099, %v585
    %v3136 = vmul.f32 %v3100, %v585
    %v3137 = vmul.f32 %v3101, %v585
    %v3138 = vmul.f32 %v3102, %v585
    %v3139 = vadd.f32 %v3103, %v627
    %v3140 = vadd.f32 %v3104, %v627
    %v3141 = vadd.f32 %v3105, %v627
    %v3142 = vadd.f32 %v3106, %v627
    %v3143 = vadd.f32 %v3107, %v627
    %v3144 = vadd.f32 %v3108, %v627
    %v3145 = vadd.f32 %v3109, %v627
    %v3146 = vadd.f32 %v3110, %v627
    %v3147 = vadd.f32 %v3111, %v627
    %v3148 = vadd.f32 %v3112, %v627
    %v3149 = vadd.f32 %v3113, %v627
    %v3150 = vadd.f32 %v3114, %v627
    %v3151 = vadd.f32 %v3115, %v627
    %v3152 = vadd.f32 %v3116, %v627
    %v3153 = vadd.f32 %v3117, %v627
    %v3154 = vadd.f32 %v3118, %v627
    %v3155 = vadd.f32 %v3119, %v627
    %v3156 = vadd.f32 %v3120, %v627
    %v3157 = vadd.f32 %v3121, %v627
    %v3158 = vadd.f32 %v3122, %v627
    %v3159 = vadd.f32 %v3123, %v627
    %v3160 = vadd.f32 %v3124, %v627
    %v3161 = vadd.f32 %v3125, %v627
    %v3162 = vadd.f32 %v3126, %v627
    %v3163 = vadd.f32 %v3127, %v627
    %v3164 = vadd.f32 %v3128, %v627
    %v3165 = vadd.f32 %v3129, %v627
    %v3166 = vadd.f32 %v3130, %v627
    %v3167 = vadd.f32 %v3131, %v627
    %v3168 = vadd.f32 %v3132, %v627
    %v3169 = vadd.f32 %v3133, %v627
    %v3170 = vadd.f32 %v3134, %v627
    %v3171 = vadd.f32 %v3135, %v627
    %v3172 = vadd.f32 %v3136, %v627
    %v3173 = vadd.f32 %v3137, %v627
    %v3174 = vadd.f32 %v3138, %v627
    %v3175 = vsel %vm668, %v3139, 0.0
    %v3176 = vsel %vm668, %v3140, 0.0
    %v3177 = vsel %vm674, %v3173, 0.0
    %v3178 = vsel %vm674, %v3174, 0.0
    %v3179 = vpack.c.bf16 %v3176, %v3175
    %v3180 = vpack.c.bf16 %v3142, %v3141
    %v3181 = vpack.c.bf16 %v3144, %v3143
    %v3182 = vpack.c.bf16 %v3146, %v3145
    %v3183 = vpack.c.bf16 %v3148, %v3147
    %v3184 = vpack.c.bf16 %v3150, %v3149
    %v3185 = vpack.c.bf16 %v3152, %v3151
    %v3186 = vpack.c.bf16 %v3154, %v3153
    %v3187 = vpack.c.bf16 %v3156, %v3155
    %v3188 = vpack.c.bf16 %v3158, %v3157
    %v3189 = vpack.c.bf16 %v3160, %v3159
    %v3190 = vpack.c.bf16 %v3162, %v3161
    %v3191 = vpack.c.bf16 %v3164, %v3163
    %v3192 = vpack.c.bf16 %v3166, %v3165
    %v3193 = vpack.c.bf16 %v3168, %v3167
    %v3194 = vpack.c.bf16 %v3170, %v3169
    %v3195 = vpack.c.bf16 %v3172, %v3171
    %v3196 = vpack.c.bf16 %v3178, %v3177
    %v3198 = vshrl.u32 %v3179, 16
    %v3200 = vrot.slane %v3198, 7
    %v3201 = vshll.u32 %v3179, 16
    %v3203 = vor.u32 %v3200, %v3201
    %v3205 = vshrl.u32 %v3180, 16
    %v3207 = vrot.slane %v3205, 7
    %v3208 = vshll.u32 %v3180, 16
    %v3210 = vor.u32 %v3207, %v3208
    %v3212 = vshrl.u32 %v3181, 16
    %v3214 = vrot.slane %v3212, 7
    %v3215 = vshll.u32 %v3181, 16
    %v3217 = vor.u32 %v3214, %v3215
    %v3219 = vshrl.u32 %v3182, 16
    %v3221 = vrot.slane %v3219, 7
    %v3222 = vshll.u32 %v3182, 16
    %v3224 = vor.u32 %v3221, %v3222
    %v3226 = vshrl.u32 %v3183, 16
    %v3228 = vrot.slane %v3226, 7
    %v3229 = vshll.u32 %v3183, 16
    %v3231 = vor.u32 %v3228, %v3229
    %v3233 = vshrl.u32 %v3184, 16
    %v3235 = vrot.slane %v3233, 7
    %v3236 = vshll.u32 %v3184, 16
    %v3238 = vor.u32 %v3235, %v3236
    %v3240 = vshrl.u32 %v3185, 16
    %v3242 = vrot.slane %v3240, 7
    %v3243 = vshll.u32 %v3185, 16
    %v3245 = vor.u32 %v3242, %v3243
    %v3247 = vshrl.u32 %v3186, 16
    %v3249 = vrot.slane %v3247, 7
    %v3250 = vshll.u32 %v3186, 16
    %v3252 = vor.u32 %v3249, %v3250
    %v3254 = vshrl.u32 %v3187, 16
    %v3256 = vrot.slane %v3254, 7
    %v3257 = vshll.u32 %v3187, 16
    %v3259 = vor.u32 %v3256, %v3257
    %v3261 = vshrl.u32 %v3188, 16
    %v3263 = vrot.slane %v3261, 7
    %v3264 = vshll.u32 %v3188, 16
    %v3266 = vor.u32 %v3263, %v3264
    %v3268 = vshrl.u32 %v3189, 16
    %v3270 = vrot.slane %v3268, 7
    %v3271 = vshll.u32 %v3189, 16
    %v3273 = vor.u32 %v3270, %v3271
    %v3275 = vshrl.u32 %v3190, 16
    %v3277 = vrot.slane %v3275, 7
    %v3278 = vshll.u32 %v3190, 16
    %v3280 = vor.u32 %v3277, %v3278
    %v3282 = vshrl.u32 %v3191, 16
    %v3284 = vrot.slane %v3282, 7
    %v3285 = vshll.u32 %v3191, 16
    %v3287 = vor.u32 %v3284, %v3285
    %v3289 = vshrl.u32 %v3192, 16
    %v3291 = vrot.slane %v3289, 7
    %v3292 = vshll.u32 %v3192, 16
    %v3294 = vor.u32 %v3291, %v3292
    %v3296 = vshrl.u32 %v3193, 16
    %v3298 = vrot.slane %v3296, 7
    %v3299 = vshll.u32 %v3193, 16
    %v3301 = vor.u32 %v3298, %v3299
    %v3303 = vshrl.u32 %v3194, 16
    %v3305 = vrot.slane %v3303, 7
    %v3306 = vshll.u32 %v3194, 16
    %v3308 = vor.u32 %v3305, %v3306
    %v3310 = vshrl.u32 %v3195, 16
    %v3312 = vrot.slane %v3310, 7
    %v3313 = vshll.u32 %v3195, 16
    %v3315 = vor.u32 %v3312, %v3313
    %v3317 = vshrl.u32 %v3196, 16
    %v3319 = vrot.slane %v3317, 7
    %v3320 = vshll.u32 %v3196, 16
    %v3322 = vor.u32 %v3319, %v3320
    %v3359 = vsel %vm859, 0, %v3203
    %v3360 = vsel %vm859, 0, %v3210
    %v3361 = vsel %vm859, 0, %v3217
    %v3362 = vsel %vm859, 0, %v3224
    %v3363 = vsel %vm859, 0, %v3231
    %v3364 = vsel %vm859, 0, %v3238
    %v3365 = vsel %vm859, 0, %v3245
    %v3366 = vsel %vm859, 0, %v3252
    %v3367 = vsel %vm859, 0, %v3259
    %v3368 = vsel %vm859, 0, %v3266
    %v3369 = vsel %vm859, 0, %v3273
    %v3370 = vsel %vm859, 0, %v3280
    %v3371 = vsel %vm859, 0, %v3287
    %v3372 = vsel %vm859, 0, %v3294
    %v3373 = vsel %vm859, 0, %v3301
    %v3374 = vsel %vm859, 0, %v3308
    %v3375 = vsel %vm859, 0, %v3315
    %v3376 = vsel %vm859, 0, %v3322
    %v3377 = vsel %vm859, %v3200, 0
    %v3378 = vsel %vm859, %v3207, 0
    %v3379 = vsel %vm859, %v3214, 0
    %v3380 = vsel %vm859, %v3221, 0
    %v3381 = vsel %vm859, %v3228, 0
    %v3382 = vsel %vm859, %v3235, 0
    %v3383 = vsel %vm859, %v3242, 0
    %v3384 = vsel %vm859, %v3249, 0
    %v3385 = vsel %vm859, %v3256, 0
    %v3386 = vsel %vm859, %v3263, 0
    %v3387 = vsel %vm859, %v3270, 0
    %v3388 = vsel %vm859, %v3277, 0
    %v3389 = vsel %vm859, %v3284, 0
    %v3390 = vsel %vm859, %v3291, 0
    %v3391 = vsel %vm859, %v3298, 0
    %v3392 = vsel %vm859, %v3305, 0
    %v3393 = vsel %vm859, %v3312, 0
    %v3394 = vsel %vm859, %v3319, 0
    %3411 = vrot.lane.b32.xlu0 %v3360, 4
    %v3412 = vpop.permute.xlu0 %3411
    %3413 = vrot.lane.b32.xlu0 %v3361, 4
    %v3414 = vpop.permute.xlu0 %3413
    %3415 = vrot.lane.b32.xlu0 %v3362, 4
    %v3416 = vpop.permute.xlu0 %3415
    %3417 = vrot.lane.b32.xlu0 %v3363, 4
    %v3418 = vpop.permute.xlu0 %3417
    %3419 = vrot.lane.b32.xlu0 %v3364, 4
    %v3420 = vpop.permute.xlu0 %3419
    %3421 = vrot.lane.b32.xlu0 %v3365, 4
    %v3422 = vpop.permute.xlu0 %3421
    %3423 = vrot.lane.b32.xlu0 %v3366, 4
    %v3424 = vpop.permute.xlu0 %3423
    %3425 = vrot.lane.b32.xlu0 %v3367, 4
    %v3426 = vpop.permute.xlu0 %3425
    %3427 = vrot.lane.b32.xlu0 %v3368, 4
    %v3428 = vpop.permute.xlu0 %3427
    %3429 = vrot.lane.b32.xlu0 %v3369, 4
    %v3430 = vpop.permute.xlu0 %3429
    %3431 = vrot.lane.b32.xlu0 %v3370, 4
    %v3432 = vpop.permute.xlu0 %3431
    %3433 = vrot.lane.b32.xlu0 %v3371, 4
    %v3434 = vpop.permute.xlu0 %3433
    %3435 = vrot.lane.b32.xlu0 %v3372, 4
    %v3436 = vpop.permute.xlu0 %3435
    %3437 = vrot.lane.b32.xlu0 %v3373, 4
    %v3438 = vpop.permute.xlu0 %3437
    %3439 = vrot.lane.b32.xlu0 %v3374, 4
    %v3440 = vpop.permute.xlu0 %3439
    %3441 = vrot.lane.b32.xlu0 %v3375, 4
    %v3442 = vpop.permute.xlu0 %3441
    %3444 = vrot.lane.b32.xlu0 %v3361, 8
    %v3445 = vpop.permute.xlu0 %3444
    %3446 = vrot.lane.b32.xlu0 %v3362, 8
    %v3447 = vpop.permute.xlu0 %3446
    %3448 = vrot.lane.b32.xlu0 %v3363, 8
    %v3449 = vpop.permute.xlu0 %3448
    %3450 = vrot.lane.b32.xlu0 %v3364, 8
    %v3451 = vpop.permute.xlu0 %3450
    %3452 = vrot.lane.b32.xlu0 %v3365, 8
    %v3453 = vpop.permute.xlu0 %3452
    %3454 = vrot.lane.b32.xlu0 %v3366, 8
    %v3455 = vpop.permute.xlu0 %3454
    %3456 = vrot.lane.b32.xlu0 %v3367, 8
    %v3457 = vpop.permute.xlu0 %3456
    %3458 = vrot.lane.b32.xlu0 %v3368, 8
    %v3459 = vpop.permute.xlu0 %3458
    %3460 = vrot.lane.b32.xlu0 %v3369, 8
    %v3461 = vpop.permute.xlu0 %3460
    %3462 = vrot.lane.b32.xlu0 %v3370, 8
    %v3463 = vpop.permute.xlu0 %3462
    %3464 = vrot.lane.b32.xlu0 %v3371, 8
    %v3465 = vpop.permute.xlu0 %3464
    %3466 = vrot.lane.b32.xlu0 %v3372, 8
    %v3467 = vpop.permute.xlu0 %3466
    %3468 = vrot.lane.b32.xlu0 %v3373, 8
    %v3469 = vpop.permute.xlu0 %3468
    %3470 = vrot.lane.b32.xlu0 %v3374, 8
    %v3471 = vpop.permute.xlu0 %3470
    %3472 = vrot.lane.b32.xlu0 %v3375, 8
    %v3473 = vpop.permute.xlu0 %3472
    %3474 = vrot.lane.b32.xlu0 %v3376, 8
    %v3475 = vpop.permute.xlu0 %3474
    %v3478 = vsel %vm977, %v3359, %v3412
    %v3481 = vsel %vm977, %v3360, %v3414
    %v3484 = vsel %vm977, %v3361, %v3416
    %v3487 = vsel %vm977, %v3362, %v3418
    %v3490 = vsel %vm977, %v3363, %v3420
    %v3493 = vsel %vm977, %v3364, %v3422
    %v3496 = vsel %vm977, %v3365, %v3424
    %v3499 = vsel %vm977, %v3366, %v3426
    %v3502 = vsel %vm977, %v3367, %v3428
    %v3505 = vsel %vm977, %v3368, %v3430
    %v3508 = vsel %vm977, %v3369, %v3432
    %v3511 = vsel %vm977, %v3370, %v3434
    %v3514 = vsel %vm977, %v3371, %v3436
    %v3517 = vsel %vm977, %v3372, %v3438
    %v3520 = vsel %vm977, %v3373, %v3440
    %v3523 = vsel %vm977, %v3374, %v3442
    %v3525 = vsel %vm1026, %v3478, %v3445
    %v3527 = vsel %vm1026, %v3481, %v3447
    %v3529 = vsel %vm1026, %v3484, %v3449
    %v3531 = vsel %vm1026, %v3487, %v3451
    %v3533 = vsel %vm1026, %v3490, %v3453
    %v3535 = vsel %vm1026, %v3493, %v3455
    %v3537 = vsel %vm1026, %v3496, %v3457
    %v3539 = vsel %vm1026, %v3499, %v3459
    %v3541 = vsel %vm1026, %v3502, %v3461
    %v3543 = vsel %vm1026, %v3505, %v3463
    %v3545 = vsel %vm1026, %v3508, %v3465
    %v3547 = vsel %vm1026, %v3511, %v3467
    %v3549 = vsel %vm1026, %v3514, %v3469
    %v3551 = vsel %vm1026, %v3517, %v3471
    %v3553 = vsel %vm1026, %v3520, %v3473
    %v3555 = vsel %vm1026, %v3523, %v3475
    %3572 = vrot.lane.b32.xlu0 %v3378, 4
    %v3573 = vpop.permute.xlu0 %3572
    %3574 = vrot.lane.b32.xlu0 %v3379, 4
    %v3575 = vpop.permute.xlu0 %3574
    %3576 = vrot.lane.b32.xlu0 %v3380, 4
    %v3577 = vpop.permute.xlu0 %3576
    %3578 = vrot.lane.b32.xlu0 %v3381, 4
    %v3579 = vpop.permute.xlu0 %3578
    %3580 = vrot.lane.b32.xlu0 %v3382, 4
    %v3581 = vpop.permute.xlu0 %3580
    %3582 = vrot.lane.b32.xlu0 %v3383, 4
    %v3583 = vpop.permute.xlu0 %3582
    %3584 = vrot.lane.b32.xlu0 %v3384, 4
    %v3585 = vpop.permute.xlu0 %3584
    %3586 = vrot.lane.b32.xlu0 %v3385, 4
    %v3587 = vpop.permute.xlu0 %3586
    %3588 = vrot.lane.b32.xlu0 %v3386, 4
    %v3589 = vpop.permute.xlu0 %3588
    %3590 = vrot.lane.b32.xlu0 %v3387, 4
    %v3591 = vpop.permute.xlu0 %3590
    %3592 = vrot.lane.b32.xlu0 %v3388, 4
    %v3593 = vpop.permute.xlu0 %3592
    %3594 = vrot.lane.b32.xlu0 %v3389, 4
    %v3595 = vpop.permute.xlu0 %3594
    %3596 = vrot.lane.b32.xlu0 %v3390, 4
    %v3597 = vpop.permute.xlu0 %3596
    %3598 = vrot.lane.b32.xlu0 %v3391, 4
    %v3599 = vpop.permute.xlu0 %3598
    %3600 = vrot.lane.b32.xlu0 %v3392, 4
    %v3601 = vpop.permute.xlu0 %3600
    %3602 = vrot.lane.b32.xlu0 %v3393, 4
    %v3603 = vpop.permute.xlu0 %3602
    %3605 = vrot.lane.b32.xlu0 %v3379, 8
    %v3606 = vpop.permute.xlu0 %3605
    %3607 = vrot.lane.b32.xlu0 %v3380, 8
    %v3608 = vpop.permute.xlu0 %3607
    %3609 = vrot.lane.b32.xlu0 %v3381, 8
    %v3610 = vpop.permute.xlu0 %3609
    %3611 = vrot.lane.b32.xlu0 %v3382, 8
    %v3612 = vpop.permute.xlu0 %3611
    %3613 = vrot.lane.b32.xlu0 %v3383, 8
    %v3614 = vpop.permute.xlu0 %3613
    %3615 = vrot.lane.b32.xlu0 %v3384, 8
    %v3616 = vpop.permute.xlu0 %3615
    %3617 = vrot.lane.b32.xlu0 %v3385, 8
    %v3618 = vpop.permute.xlu0 %3617
    %3619 = vrot.lane.b32.xlu0 %v3386, 8
    %v3620 = vpop.permute.xlu0 %3619
    %3621 = vrot.lane.b32.xlu0 %v3387, 8
    %v3622 = vpop.permute.xlu0 %3621
    %3623 = vrot.lane.b32.xlu0 %v3388, 8
    %v3624 = vpop.permute.xlu0 %3623
    %3625 = vrot.lane.b32.xlu0 %v3389, 8
    %v3626 = vpop.permute.xlu0 %3625
    %3627 = vrot.lane.b32.xlu0 %v3390, 8
    %v3628 = vpop.permute.xlu0 %3627
    %3629 = vrot.lane.b32.xlu0 %v3391, 8
    %v3630 = vpop.permute.xlu0 %3629
    %3631 = vrot.lane.b32.xlu0 %v3392, 8
    %v3632 = vpop.permute.xlu0 %3631
    %3633 = vrot.lane.b32.xlu0 %v3393, 8
    %v3634 = vpop.permute.xlu0 %3633
    %3635 = vrot.lane.b32.xlu0 %v3394, 8
    %v3636 = vpop.permute.xlu0 %3635
    %v3639 = vsel %vm977, %v3377, %v3573
    %v3642 = vsel %vm977, %v3378, %v3575
    %v3645 = vsel %vm977, %v3379, %v3577
    %v3648 = vsel %vm977, %v3380, %v3579
    %v3651 = vsel %vm977, %v3381, %v3581
    %v3654 = vsel %vm977, %v3382, %v3583
    %v3657 = vsel %vm977, %v3383, %v3585
    %v3660 = vsel %vm977, %v3384, %v3587
    %v3663 = vsel %vm977, %v3385, %v3589
    %v3666 = vsel %vm977, %v3386, %v3591
    %v3669 = vsel %vm977, %v3387, %v3593
    %v3672 = vsel %vm977, %v3388, %v3595
    %v3675 = vsel %vm977, %v3389, %v3597
    %v3678 = vsel %vm977, %v3390, %v3599
    %v3681 = vsel %vm977, %v3391, %v3601
    %v3684 = vsel %vm977, %v3392, %v3603
    %v3686 = vsel %vm1026, %v3639, %v3606
    %v3688 = vsel %vm1026, %v3642, %v3608
    %v3690 = vsel %vm1026, %v3645, %v3610
    %v3692 = vsel %vm1026, %v3648, %v3612
    %v3694 = vsel %vm1026, %v3651, %v3614
    %v3696 = vsel %vm1026, %v3654, %v3616
    %v3698 = vsel %vm1026, %v3657, %v3618
    %v3700 = vsel %vm1026, %v3660, %v3620
    %v3702 = vsel %vm1026, %v3663, %v3622
    %v3704 = vsel %vm1026, %v3666, %v3624
    %v3706 = vsel %vm1026, %v3669, %v3626
    %v3708 = vsel %vm1026, %v3672, %v3628
    %v3710 = vsel %vm1026, %v3675, %v3630
    %v3712 = vsel %vm1026, %v3678, %v3632
    %v3714 = vsel %vm1026, %v3681, %v3634
    %v3716 = vsel %vm1026, %v3684, %v3636
    %v3717 = vshrl.u32 %v3525, 16
    %v3719 = vshll.u32 %v3525, 16
    %v3721 = vrot.slane %v3719, 1
    %v3722 = vor.u32 %v3717, %v3721
    %v3723 = vshll.u32 %v3686, 16
    %v3725 = vrot.slane %v3723, 1
    %v3726 = vsel %vm1220, %v3722, %v3725
    %v3727 = vshrl.u32 %v3527, 16
    %v3729 = vshll.u32 %v3527, 16
    %v3731 = vrot.slane %v3729, 1
    %v3732 = vor.u32 %v3727, %v3731
    %v3733 = vshll.u32 %v3688, 16
    %v3735 = vrot.slane %v3733, 1
    %v3736 = vsel %vm1220, %v3732, %v3735
    %v3737 = vshrl.u32 %v3529, 16
    %v3739 = vshll.u32 %v3529, 16
    %v3741 = vrot.slane %v3739, 1
    %v3742 = vor.u32 %v3737, %v3741
    %v3743 = vshll.u32 %v3690, 16
    %v3745 = vrot.slane %v3743, 1
    %v3746 = vsel %vm1220, %v3742, %v3745
    %v3747 = vshrl.u32 %v3531, 16
    %v3749 = vshll.u32 %v3531, 16
    %v3751 = vrot.slane %v3749, 1
    %v3752 = vor.u32 %v3747, %v3751
    %v3753 = vshll.u32 %v3692, 16
    %v3755 = vrot.slane %v3753, 1
    %v3756 = vsel %vm1220, %v3752, %v3755
    %v3757 = vshrl.u32 %v3533, 16
    %v3759 = vshll.u32 %v3533, 16
    %v3761 = vrot.slane %v3759, 1
    %v3762 = vor.u32 %v3757, %v3761
    %v3763 = vshll.u32 %v3694, 16
    %v3765 = vrot.slane %v3763, 1
    %v3766 = vsel %vm1220, %v3762, %v3765
    %v3767 = vshrl.u32 %v3535, 16
    %v3769 = vshll.u32 %v3535, 16
    %v3771 = vrot.slane %v3769, 1
    %v3772 = vor.u32 %v3767, %v3771
    %v3773 = vshll.u32 %v3696, 16
    %v3775 = vrot.slane %v3773, 1
    %v3776 = vsel %vm1220, %v3772, %v3775
    %v3777 = vshrl.u32 %v3537, 16
    %v3779 = vshll.u32 %v3537, 16
    %v3781 = vrot.slane %v3779, 1
    %v3782 = vor.u32 %v3777, %v3781
    %v3783 = vshll.u32 %v3698, 16
    %v3785 = vrot.slane %v3783, 1
    %v3786 = vsel %vm1220, %v3782, %v3785
    %v3787 = vshrl.u32 %v3539, 16
    %v3789 = vshll.u32 %v3539, 16
    %v3791 = vrot.slane %v3789, 1
    %v3792 = vor.u32 %v3787, %v3791
    %v3793 = vshll.u32 %v3700, 16
    %v3795 = vrot.slane %v3793, 1
    %v3796 = vsel %vm1220, %v3792, %v3795
    %v3797 = vshrl.u32 %v3541, 16
    %v3799 = vshll.u32 %v3541, 16
    %v3801 = vrot.slane %v3799, 1
    %v3802 = vor.u32 %v3797, %v3801
    %v3803 = vshll.u32 %v3702, 16
    %v3805 = vrot.slane %v3803, 1
    %v3806 = vsel %vm1220, %v3802, %v3805
    %v3807 = vshrl.u32 %v3543, 16
    %v3809 = vshll.u32 %v3543, 16
    %v3811 = vrot.slane %v3809, 1
    %v3812 = vor.u32 %v3807, %v3811
    %v3813 = vshll.u32 %v3704, 16
    %v3815 = vrot.slane %v3813, 1
    %v3816 = vsel %vm1220, %v3812, %v3815
    %v3817 = vshrl.u32 %v3545, 16
    %v3819 = vshll.u32 %v3545, 16
    %v3821 = vrot.slane %v3819, 1
    %v3822 = vor.u32 %v3817, %v3821
    %v3823 = vshll.u32 %v3706, 16
    %v3825 = vrot.slane %v3823, 1
    %v3826 = vsel %vm1220, %v3822, %v3825
    %v3827 = vshrl.u32 %v3547, 16
    %v3829 = vshll.u32 %v3547, 16
    %v3831 = vrot.slane %v3829, 1
    %v3832 = vor.u32 %v3827, %v3831
    %v3833 = vshll.u32 %v3708, 16
    %v3835 = vrot.slane %v3833, 1
    %v3836 = vsel %vm1220, %v3832, %v3835
    %v3837 = vshrl.u32 %v3549, 16
    %v3839 = vshll.u32 %v3549, 16
    %v3841 = vrot.slane %v3839, 1
    %v3842 = vor.u32 %v3837, %v3841
    %v3843 = vshll.u32 %v3710, 16
    %v3845 = vrot.slane %v3843, 1
    %v3846 = vsel %vm1220, %v3842, %v3845
    %v3847 = vshrl.u32 %v3551, 16
    %v3849 = vshll.u32 %v3551, 16
    %v3851 = vrot.slane %v3849, 1
    %v3852 = vor.u32 %v3847, %v3851
    %v3853 = vshll.u32 %v3712, 16
    %v3855 = vrot.slane %v3853, 1
    %v3856 = vsel %vm1220, %v3852, %v3855
    %v3857 = vshrl.u32 %v3553, 16
    %v3859 = vshll.u32 %v3553, 16
    %v3861 = vrot.slane %v3859, 1
    %v3862 = vor.u32 %v3857, %v3861
    %v3863 = vshll.u32 %v3714, 16
    %v3865 = vrot.slane %v3863, 1
    %v3866 = vsel %vm1220, %v3862, %v3865
    %v3867 = vshrl.u32 %v3555, 16
    %v3869 = vshll.u32 %v3555, 16
    %v3871 = vrot.slane %v3869, 1
    %v3872 = vor.u32 %v3867, %v3871
    %v3873 = vshll.u32 %v3716, 16
    %v3875 = vrot.slane %v3873, 1
    %v3876 = vsel %vm1220, %v3872, %v3875
    %v3878 = vsel %vm1386, %v3726, 0
    %v3881 = vsel %vm1386, %v3736, 0
    %v3884 = vsel %vm1386, %v3746, 0
    %v3887 = vsel %vm1386, %v3756, 0
    %v3890 = vsel %vm1386, %v3766, 0
    %v3893 = vsel %vm1386, %v3776, 0
    %v3896 = vsel %vm1386, %v3786, 0
    %v3899 = vsel %vm1386, %v3796, 0
    %v3902 = vsel %vm1386, %v3806, 0
    %v3905 = vsel %vm1386, %v3816, 0
    %v3908 = vsel %vm1386, %v3826, 0
    %v3911 = vsel %vm1386, %v3836, 0
    %v3914 = vsel %vm1386, %v3846, 0
    %v3917 = vsel %vm1386, %v3856, 0
    %v3920 = vsel %vm1386, %v3866, 0
    %v3923 = vsel %vm1386, %v3876, 0
    %3925 = vmatprep.subr.bf16.mxu0 0
    %3926 = vmatpush1.bf16.msra.mxu0 0
    %3927 = vmatprep.subr.bf16.mxu0 0
    %3928 = vmatpush1.bf16.msra.mxu0 0
    %3929 = vmatprep.subr.bf16.mxu0 0
    %3930 = vmatpush1.bf16.msra.mxu0 0
    %3931 = vmatprep.subr.bf16.mxu0 0
    %3932 = vmatpush1.bf16.msra.mxu0 0
    %3933 = vmatprep.subr.bf16.mxu0 0
    %3934 = vmatpush1.bf16.msra.mxu0 0
    %3935 = vmatprep.subr.bf16.mxu0 0
    %3936 = vmatpush1.bf16.msra.mxu0 0
    %3937 = vmatprep.subr.bf16.mxu0 0
    %3938 = vmatpush1.bf16.msra.mxu0 0
    %3939 = vmatprep.subr.bf16.mxu0 0
    %3940 = vmatpush1.bf16.msra.mxu0 %v1437
    %3941 = vmatprep.subr.bf16.mxu0 0
    %3942 = vmatpush2.bf16.msra.mxu0 0
    %3943 = vmatprep.subr.bf16.mxu0 0
    %3944 = vmatpush2.bf16.msra.mxu0 0
    %3945 = vmatprep.subr.bf16.mxu0 0
    %3946 = vmatpush2.bf16.msra.mxu0 0
    %3947 = vmatprep.subr.bf16.mxu0 0
    %3948 = vmatpush2.bf16.msra.mxu0 0
    %3949 = vmatprep.subr.bf16.mxu0 0
    %3950 = vmatpush2.bf16.msra.mxu0 0
    %3951 = vmatprep.subr.bf16.mxu0 0
    %3952 = vmatpush2.bf16.msra.mxu0 0
    %3953 = vmatprep.subr.bf16.mxu0 0
    %3954 = vmatpush2.bf16.msra.mxu0 0
    %3955 = vmatprep.subr.bf16.mxu0 0
    %3956 = vmatpush2.bf16.msra.mxu0 0
    %3957 = vmatprep.mubr.bf16.mxu0 0
    %3958 = vmatmul.mubr.bf16.gmra.mxu0 %v3878
    %v3959 = vpop.f32.mrf.mxu0
    %v3960 = vadd.f32 0.0, %v3959
    %v3961 = vpop.f32.mrf.mxu0
    %v3962 = vpop.f32.mrf.mxu0
    %v3963 = vadd.f32 0.0, %v3962
    %v3964 = vpop.f32.mrf.mxu0
    %3965 = vmatprep.mubr.bf16.mxu0 0
    %3966 = vmatmul.mubr.bf16.gmra.mxu0 %v3881
    %v3967 = vpop.f32.mrf.mxu0
    %v3968 = vadd.f32 0.0, %v3967
    %v3969 = vpop.f32.mrf.mxu0
    %v3970 = vpop.f32.mrf.mxu0
    %v3971 = vadd.f32 0.0, %v3970
    %v3972 = vpop.f32.mrf.mxu0
    %3973 = vmatprep.mubr.bf16.mxu0 0
    %3974 = vmatmul.mubr.bf16.gmra.mxu0 %v3884
    %v3975 = vpop.f32.mrf.mxu0
    %v3976 = vadd.f32 0.0, %v3975
    %v3977 = vpop.f32.mrf.mxu0
    %v3978 = vpop.f32.mrf.mxu0
    %v3979 = vadd.f32 0.0, %v3978
    %v3980 = vpop.f32.mrf.mxu0
    %3981 = vmatprep.mubr.bf16.mxu0 0
    %3982 = vmatmul.mubr.bf16.gmra.mxu0 %v3887
    %v3983 = vpop.f32.mrf.mxu0
    %v3984 = vadd.f32 0.0, %v3983
    %v3985 = vpop.f32.mrf.mxu0
    %v3986 = vpop.f32.mrf.mxu0
    %v3987 = vadd.f32 0.0, %v3986
    %v3988 = vpop.f32.mrf.mxu0
    %3989 = vmatprep.mubr.bf16.mxu0 0
    %3990 = vmatmul.mubr.bf16.gmra.mxu0 %v3890
    %v3991 = vpop.f32.mrf.mxu0
    %v3992 = vadd.f32 0.0, %v3991
    %v3993 = vpop.f32.mrf.mxu0
    %v3994 = vpop.f32.mrf.mxu0
    %v3995 = vadd.f32 0.0, %v3994
    %v3996 = vpop.f32.mrf.mxu0
    %3997 = vmatprep.mubr.bf16.mxu0 0
    %3998 = vmatmul.mubr.bf16.gmra.mxu0 %v3893
    %v3999 = vpop.f32.mrf.mxu0
    %v4000 = vadd.f32 0.0, %v3999
    %v4001 = vpop.f32.mrf.mxu0
    %v4002 = vpop.f32.mrf.mxu0
    %v4003 = vadd.f32 0.0, %v4002
    %v4004 = vpop.f32.mrf.mxu0
    %4005 = vmatprep.mubr.bf16.mxu0 0
    %4006 = vmatmul.mubr.bf16.gmra.mxu0 %v3896
    %v4007 = vpop.f32.mrf.mxu0
    %v4008 = vadd.f32 0.0, %v4007
    %v4009 = vpop.f32.mrf.mxu0
    %v4010 = vpop.f32.mrf.mxu0
    %v4011 = vadd.f32 0.0, %v4010
    %v4012 = vpop.f32.mrf.mxu0
    %4013 = vmatprep.mubr.bf16.mxu0 0
    %4014 = vmatmul.mubr.bf16.gmra.mxu0 %v3899
    %v4015 = vpop.f32.mrf.mxu0
    %v4016 = vadd.f32 0.0, %v4015
    %v4017 = vpop.f32.mrf.mxu0
    %v4018 = vpop.f32.mrf.mxu0
    %v4019 = vadd.f32 0.0, %v4018
    %v4020 = vpop.f32.mrf.mxu0
    %4021 = vmatprep.mubr.bf16.mxu0 0
    %4022 = vmatmul.mubr.bf16.gmra.mxu0 %v3902
    %v4023 = vpop.f32.mrf.mxu0
    %v4024 = vadd.f32 0.0, %v4023
    %v4025 = vpop.f32.mrf.mxu0
    %v4026 = vpop.f32.mrf.mxu0
    %v4027 = vadd.f32 0.0, %v4026
    %v4028 = vpop.f32.mrf.mxu0
    %4029 = vmatprep.mubr.bf16.mxu0 0
    %4030 = vmatmul.mubr.bf16.gmra.mxu0 %v3905
    %v4031 = vpop.f32.mrf.mxu0
    %v4032 = vadd.f32 0.0, %v4031
    %v4033 = vpop.f32.mrf.mxu0
    %v4034 = vpop.f32.mrf.mxu0
    %v4035 = vadd.f32 0.0, %v4034
    %v4036 = vpop.f32.mrf.mxu0
    %4037 = vmatprep.mubr.bf16.mxu0 0
    %4038 = vmatmul.mubr.bf16.gmra.mxu0 %v3908
    %v4039 = vpop.f32.mrf.mxu0
    %v4040 = vadd.f32 0.0, %v4039
    %v4041 = vpop.f32.mrf.mxu0
    %v4042 = vpop.f32.mrf.mxu0
    %v4043 = vadd.f32 0.0, %v4042
    %v4044 = vpop.f32.mrf.mxu0
    %4045 = vmatprep.mubr.bf16.mxu0 0
    %4046 = vmatmul.mubr.bf16.gmra.mxu0 %v3911
    %v4047 = vpop.f32.mrf.mxu0
    %v4048 = vadd.f32 0.0, %v4047
    %v4049 = vpop.f32.mrf.mxu0
    %v4050 = vpop.f32.mrf.mxu0
    %v4051 = vadd.f32 0.0, %v4050
    %v4052 = vpop.f32.mrf.mxu0
    %4053 = vmatprep.mubr.bf16.mxu0 0
    %4054 = vmatmul.mubr.bf16.gmra.mxu0 %v3914
    %v4055 = vpop.f32.mrf.mxu0
    %v4056 = vadd.f32 0.0, %v4055
    %v4057 = vpop.f32.mrf.mxu0
    %v4058 = vpop.f32.mrf.mxu0
    %v4059 = vadd.f32 0.0, %v4058
    %v4060 = vpop.f32.mrf.mxu0
    %4061 = vmatprep.mubr.bf16.mxu0 0
    %4062 = vmatmul.mubr.bf16.gmra.mxu0 %v3917
    %v4063 = vpop.f32.mrf.mxu0
    %v4064 = vadd.f32 0.0, %v4063
    %v4065 = vpop.f32.mrf.mxu0
    %v4066 = vpop.f32.mrf.mxu0
    %v4067 = vadd.f32 0.0, %v4066
    %v4068 = vpop.f32.mrf.mxu0
    %4069 = vmatprep.mubr.bf16.mxu0 0
    %4070 = vmatmul.mubr.bf16.gmra.mxu0 %v3920
    %v4071 = vpop.f32.mrf.mxu0
    %v4072 = vadd.f32 0.0, %v4071
    %v4073 = vpop.f32.mrf.mxu0
    %v4074 = vpop.f32.mrf.mxu0
    %v4075 = vadd.f32 0.0, %v4074
    %v4076 = vpop.f32.mrf.mxu0
    %4077 = vmatprep.mubr.bf16.mxu0 0
    %4078 = vmatmul.mubr.bf16.gmra.mxu0 %v3923
    %v4079 = vpop.f32.mrf.mxu0
    %v4080 = vadd.f32 0.0, %v4079
    %v4081 = vpop.f32.mrf.mxu0
    %v4082 = vpop.f32.mrf.mxu0
    %v4083 = vadd.f32 0.0, %v4082
    %v4084 = vpop.f32.mrf.mxu0
    %4085 = vdwg.mxu0
    %v4086 = vsel %vm1386, %v3525, 0
    %v4088 = vsel %vm1386, %v3527, 0
    %v4090 = vsel %vm1386, %v3529, 0
    %v4092 = vsel %vm1386, %v3531, 0
    %v4094 = vsel %vm1386, %v3533, 0
    %v4096 = vsel %vm1386, %v3535, 0
    %v4098 = vsel %vm1386, %v3537, 0
    %v4100 = vsel %vm1386, %v3539, 0
    %v4102 = vsel %vm1386, %v3541, 0
    %v4104 = vsel %vm1386, %v3543, 0
    %v4106 = vsel %vm1386, %v3545, 0
    %v4108 = vsel %vm1386, %v3547, 0
    %v4110 = vsel %vm1386, %v3549, 0
    %v4112 = vsel %vm1386, %v3551, 0
    %v4114 = vsel %vm1386, %v3553, 0
    %v4116 = vsel %vm1386, %v3555, 0
    %4118 = vmatprep.subr.bf16.mxu0 0
    %4119 = vmatpush1.bf16.msra.mxu0 0
    %4120 = vmatprep.subr.bf16.mxu0 0
    %4121 = vmatpush1.bf16.msra.mxu0 0
    %4122 = vmatprep.subr.bf16.mxu0 0
    %4123 = vmatpush1.bf16.msra.mxu0 0
    %4124 = vmatprep.subr.bf16.mxu0 0
    %4125 = vmatpush1.bf16.msra.mxu0 0
    %4126 = vmatprep.subr.bf16.mxu0 0
    %4127 = vmatpush1.bf16.msra.mxu0 0
    %4128 = vmatprep.subr.bf16.mxu0 0
    %4129 = vmatpush1.bf16.msra.mxu0 0
    %4130 = vmatprep.subr.bf16.mxu0 0
    %4131 = vmatpush1.bf16.msra.mxu0 0
    %4132 = vmatprep.subr.bf16.mxu0 0
    %4133 = vmatpush1.bf16.msra.mxu0 %v1638
    %4134 = vmatprep.subr.bf16.mxu0 0
    %4135 = vmatpush2.bf16.msra.mxu0 0
    %4136 = vmatprep.subr.bf16.mxu0 0
    %4137 = vmatpush2.bf16.msra.mxu0 0
    %4138 = vmatprep.subr.bf16.mxu0 0
    %4139 = vmatpush2.bf16.msra.mxu0 0
    %4140 = vmatprep.subr.bf16.mxu0 0
    %4141 = vmatpush2.bf16.msra.mxu0 0
    %4142 = vmatprep.subr.bf16.mxu0 0
    %4143 = vmatpush2.bf16.msra.mxu0 0
    %4144 = vmatprep.subr.bf16.mxu0 0
    %4145 = vmatpush2.bf16.msra.mxu0 0
    %4146 = vmatprep.subr.bf16.mxu0 0
    %4147 = vmatpush2.bf16.msra.mxu0 0
    %4148 = vmatprep.subr.bf16.mxu0 0
    %4149 = vmatpush2.bf16.msra.mxu0 0
    %4150 = vmatprep.mubr.bf16.mxu0 0
    %4151 = vmatmul.mubr.bf16.gmra.mxu0 %v4086
    %v4152 = vpop.f32.mrf.mxu0
    %v4153 = vadd.f32 %v3960, %v4152
    %v4154 = vpop.f32.mrf.mxu0
    %v4155 = vpop.f32.mrf.mxu0
    %v4156 = vadd.f32 %v3963, %v4155
    %v4157 = vpop.f32.mrf.mxu0
    %4158 = vmatprep.mubr.bf16.mxu0 0
    %4159 = vmatmul.mubr.bf16.gmra.mxu0 %v4088
    %v4160 = vpop.f32.mrf.mxu0
    %v4161 = vadd.f32 %v3968, %v4160
    %v4162 = vpop.f32.mrf.mxu0
    %v4163 = vpop.f32.mrf.mxu0
    %v4164 = vadd.f32 %v3971, %v4163
    %v4165 = vpop.f32.mrf.mxu0
    %4166 = vmatprep.mubr.bf16.mxu0 0
    %4167 = vmatmul.mubr.bf16.gmra.mxu0 %v4090
    %v4168 = vpop.f32.mrf.mxu0
    %v4169 = vadd.f32 %v3976, %v4168
    %v4170 = vpop.f32.mrf.mxu0
    %v4171 = vpop.f32.mrf.mxu0
    %v4172 = vadd.f32 %v3979, %v4171
    %v4173 = vpop.f32.mrf.mxu0
    %4174 = vmatprep.mubr.bf16.mxu0 0
    %4175 = vmatmul.mubr.bf16.gmra.mxu0 %v4092
    %v4176 = vpop.f32.mrf.mxu0
    %v4177 = vadd.f32 %v3984, %v4176
    %v4178 = vpop.f32.mrf.mxu0
    %v4179 = vpop.f32.mrf.mxu0
    %v4180 = vadd.f32 %v3987, %v4179
    %v4181 = vpop.f32.mrf.mxu0
    %4182 = vmatprep.mubr.bf16.mxu0 0
    %4183 = vmatmul.mubr.bf16.gmra.mxu0 %v4094
    %v4184 = vpop.f32.mrf.mxu0
    %v4185 = vadd.f32 %v3992, %v4184
    %v4186 = vpop.f32.mrf.mxu0
    %v4187 = vpop.f32.mrf.mxu0
    %v4188 = vadd.f32 %v3995, %v4187
    %v4189 = vpop.f32.mrf.mxu0
    %4190 = vmatprep.mubr.bf16.mxu0 0
    %4191 = vmatmul.mubr.bf16.gmra.mxu0 %v4096
    %v4192 = vpop.f32.mrf.mxu0
    %v4193 = vadd.f32 %v4000, %v4192
    %v4194 = vpop.f32.mrf.mxu0
    %v4195 = vpop.f32.mrf.mxu0
    %v4196 = vadd.f32 %v4003, %v4195
    %v4197 = vpop.f32.mrf.mxu0
    %4198 = vmatprep.mubr.bf16.mxu0 0
    %4199 = vmatmul.mubr.bf16.gmra.mxu0 %v4098
    %v4200 = vpop.f32.mrf.mxu0
    %v4201 = vadd.f32 %v4008, %v4200
    %v4202 = vpop.f32.mrf.mxu0
    %v4203 = vpop.f32.mrf.mxu0
    %v4204 = vadd.f32 %v4011, %v4203
    %v4205 = vpop.f32.mrf.mxu0
    %4206 = vmatprep.mubr.bf16.mxu0 0
    %4207 = vmatmul.mubr.bf16.gmra.mxu0 %v4100
    %v4208 = vpop.f32.mrf.mxu0
    %v4209 = vadd.f32 %v4016, %v4208
    %v4210 = vpop.f32.mrf.mxu0
    %v4211 = vpop.f32.mrf.mxu0
    %v4212 = vadd.f32 %v4019, %v4211
    %v4213 = vpop.f32.mrf.mxu0
    %4214 = vmatprep.mubr.bf16.mxu0 0
    %4215 = vmatmul.mubr.bf16.gmra.mxu0 %v4102
    %v4216 = vpop.f32.mrf.mxu0
    %v4217 = vadd.f32 %v4024, %v4216
    %v4218 = vpop.f32.mrf.mxu0
    %v4219 = vpop.f32.mrf.mxu0
    %v4220 = vadd.f32 %v4027, %v4219
    %v4221 = vpop.f32.mrf.mxu0
    %4222 = vmatprep.mubr.bf16.mxu0 0
    %4223 = vmatmul.mubr.bf16.gmra.mxu0 %v4104
    %v4224 = vpop.f32.mrf.mxu0
    %v4225 = vadd.f32 %v4032, %v4224
    %v4226 = vpop.f32.mrf.mxu0
    %v4227 = vpop.f32.mrf.mxu0
    %v4228 = vadd.f32 %v4035, %v4227
    %v4229 = vpop.f32.mrf.mxu0
    %4230 = vmatprep.mubr.bf16.mxu0 0
    %4231 = vmatmul.mubr.bf16.gmra.mxu0 %v4106
    %v4232 = vpop.f32.mrf.mxu0
    %v4233 = vadd.f32 %v4040, %v4232
    %v4234 = vpop.f32.mrf.mxu0
    %v4235 = vpop.f32.mrf.mxu0
    %v4236 = vadd.f32 %v4043, %v4235
    %v4237 = vpop.f32.mrf.mxu0
    %4238 = vmatprep.mubr.bf16.mxu0 0
    %4239 = vmatmul.mubr.bf16.gmra.mxu0 %v4108
    %v4240 = vpop.f32.mrf.mxu0
    %v4241 = vadd.f32 %v4048, %v4240
    %v4242 = vpop.f32.mrf.mxu0
    %v4243 = vpop.f32.mrf.mxu0
    %v4244 = vadd.f32 %v4051, %v4243
    %v4245 = vpop.f32.mrf.mxu0
    %4246 = vmatprep.mubr.bf16.mxu0 0
    %4247 = vmatmul.mubr.bf16.gmra.mxu0 %v4110
    %v4248 = vpop.f32.mrf.mxu0
    %v4249 = vadd.f32 %v4056, %v4248
    %v4250 = vpop.f32.mrf.mxu0
    %v4251 = vpop.f32.mrf.mxu0
    %v4252 = vadd.f32 %v4059, %v4251
    %v4253 = vpop.f32.mrf.mxu0
    %4254 = vmatprep.mubr.bf16.mxu0 0
    %4255 = vmatmul.mubr.bf16.gmra.mxu0 %v4112
    %v4256 = vpop.f32.mrf.mxu0
    %v4257 = vadd.f32 %v4064, %v4256
    %v4258 = vpop.f32.mrf.mxu0
    %v4259 = vpop.f32.mrf.mxu0
    %v4260 = vadd.f32 %v4067, %v4259
    %v4261 = vpop.f32.mrf.mxu0
    %4262 = vmatprep.mubr.bf16.mxu0 0
    %4263 = vmatmul.mubr.bf16.gmra.mxu0 %v4114
    %v4264 = vpop.f32.mrf.mxu0
    %v4265 = vadd.f32 %v4072, %v4264
    %v4266 = vpop.f32.mrf.mxu0
    %v4267 = vpop.f32.mrf.mxu0
    %v4268 = vadd.f32 %v4075, %v4267
    %v4269 = vpop.f32.mrf.mxu0
    %4270 = vmatprep.mubr.bf16.mxu0 0
    %4271 = vmatmul.mubr.bf16.gmra.mxu0 %v4116
    %v4272 = vpop.f32.mrf.mxu0
    %v4273 = vadd.f32 %v4080, %v4272
    %v4274 = vpop.f32.mrf.mxu0
    %v4275 = vpop.f32.mrf.mxu0
    %v4276 = vadd.f32 %v4083, %v4275
    %v4277 = vpop.f32.mrf.mxu0
    %4278 = vdwg.mxu0
    %v4311 = vrot.slane %v3525, 1
    %v4312 = vrot.slane %v3686, 1
    %v4313 = vsel %vm1833, %v4311, %v4312
    %v4314 = vrot.slane %v3527, 1
    %v4315 = vrot.slane %v3688, 1
    %v4316 = vsel %vm1833, %v4314, %v4315
    %v4317 = vrot.slane %v3529, 1
    %v4318 = vrot.slane %v3690, 1
    %v4319 = vsel %vm1833, %v4317, %v4318
    %v4320 = vrot.slane %v3531, 1
    %v4321 = vrot.slane %v3692, 1
    %v4322 = vsel %vm1833, %v4320, %v4321
    %v4323 = vrot.slane %v3533, 1
    %v4324 = vrot.slane %v3694, 1
    %v4325 = vsel %vm1833, %v4323, %v4324
    %v4326 = vrot.slane %v3535, 1
    %v4327 = vrot.slane %v3696, 1
    %v4328 = vsel %vm1833, %v4326, %v4327
    %v4329 = vrot.slane %v3537, 1
    %v4330 = vrot.slane %v3698, 1
    %v4331 = vsel %vm1833, %v4329, %v4330
    %v4332 = vrot.slane %v3539, 1
    %v4333 = vrot.slane %v3700, 1
    %v4334 = vsel %vm1833, %v4332, %v4333
    %v4335 = vrot.slane %v3541, 1
    %v4336 = vrot.slane %v3702, 1
    %v4337 = vsel %vm1833, %v4335, %v4336
    %v4338 = vrot.slane %v3543, 1
    %v4339 = vrot.slane %v3704, 1
    %v4340 = vsel %vm1833, %v4338, %v4339
    %v4341 = vrot.slane %v3545, 1
    %v4342 = vrot.slane %v3706, 1
    %v4343 = vsel %vm1833, %v4341, %v4342
    %v4344 = vrot.slane %v3547, 1
    %v4345 = vrot.slane %v3708, 1
    %v4346 = vsel %vm1833, %v4344, %v4345
    %v4347 = vrot.slane %v3549, 1
    %v4348 = vrot.slane %v3710, 1
    %v4349 = vsel %vm1833, %v4347, %v4348
    %v4350 = vrot.slane %v3551, 1
    %v4351 = vrot.slane %v3712, 1
    %v4352 = vsel %vm1833, %v4350, %v4351
    %v4353 = vrot.slane %v3553, 1
    %v4354 = vrot.slane %v3714, 1
    %v4355 = vsel %vm1833, %v4353, %v4354
    %v4356 = vrot.slane %v3555, 1
    %v4357 = vrot.slane %v3716, 1
    %v4358 = vsel %vm1833, %v4356, %v4357
    %v4360 = vsel %vm1386, %v4313, 0
    %v4363 = vsel %vm1386, %v4316, 0
    %v4366 = vsel %vm1386, %v4319, 0
    %v4369 = vsel %vm1386, %v4322, 0
    %v4372 = vsel %vm1386, %v4325, 0
    %v4375 = vsel %vm1386, %v4328, 0
    %v4378 = vsel %vm1386, %v4331, 0
    %v4381 = vsel %vm1386, %v4334, 0
    %v4384 = vsel %vm1386, %v4337, 0
    %v4387 = vsel %vm1386, %v4340, 0
    %v4390 = vsel %vm1386, %v4343, 0
    %v4393 = vsel %vm1386, %v4346, 0
    %v4396 = vsel %vm1386, %v4349, 0
    %v4399 = vsel %vm1386, %v4352, 0
    %v4402 = vsel %vm1386, %v4355, 0
    %v4405 = vsel %vm1386, %v4358, 0
    %4407 = vmatprep.subr.bf16.mxu0 0
    %4408 = vmatpush1.bf16.msra.mxu0 0
    %4409 = vmatprep.subr.bf16.mxu0 0
    %4410 = vmatpush1.bf16.msra.mxu0 0
    %4411 = vmatprep.subr.bf16.mxu0 0
    %4412 = vmatpush1.bf16.msra.mxu0 0
    %4413 = vmatprep.subr.bf16.mxu0 0
    %4414 = vmatpush1.bf16.msra.mxu0 0
    %4415 = vmatprep.subr.bf16.mxu0 0
    %4416 = vmatpush1.bf16.msra.mxu0 0
    %4417 = vmatprep.subr.bf16.mxu0 0
    %4418 = vmatpush1.bf16.msra.mxu0 0
    %4419 = vmatprep.subr.bf16.mxu0 0
    %4420 = vmatpush1.bf16.msra.mxu0 0
    %4421 = vmatprep.subr.bf16.mxu0 0
    %4422 = vmatpush1.bf16.msra.mxu0 %v1936
    %4423 = vmatprep.subr.bf16.mxu0 0
    %4424 = vmatpush2.bf16.msra.mxu0 0
    %4425 = vmatprep.subr.bf16.mxu0 0
    %4426 = vmatpush2.bf16.msra.mxu0 0
    %4427 = vmatprep.subr.bf16.mxu0 0
    %4428 = vmatpush2.bf16.msra.mxu0 0
    %4429 = vmatprep.subr.bf16.mxu0 0
    %4430 = vmatpush2.bf16.msra.mxu0 0
    %4431 = vmatprep.subr.bf16.mxu0 0
    %4432 = vmatpush2.bf16.msra.mxu0 0
    %4433 = vmatprep.subr.bf16.mxu0 0
    %4434 = vmatpush2.bf16.msra.mxu0 0
    %4435 = vmatprep.subr.bf16.mxu0 0
    %4436 = vmatpush2.bf16.msra.mxu0 0
    %4437 = vmatprep.subr.bf16.mxu0 0
    %4438 = vmatpush2.bf16.msra.mxu0 0
    %4439 = vmatprep.mubr.bf16.mxu0 0
    %4440 = vmatmul.mubr.bf16.gmra.mxu0 %v4360
    %v4441 = vpop.f32.mrf.mxu0
    %v4442 = vadd.f32 0.0, %v4441
    %v4443 = vpop.f32.mrf.mxu0
    %v4444 = vpop.f32.mrf.mxu0
    %v4445 = vadd.f32 0.0, %v4444
    %v4446 = vpop.f32.mrf.mxu0
    %4447 = vmatprep.mubr.bf16.mxu0 0
    %4448 = vmatmul.mubr.bf16.gmra.mxu0 %v4363
    %v4449 = vpop.f32.mrf.mxu0
    %v4450 = vadd.f32 0.0, %v4449
    %v4451 = vpop.f32.mrf.mxu0
    %v4452 = vpop.f32.mrf.mxu0
    %v4453 = vadd.f32 0.0, %v4452
    %v4454 = vpop.f32.mrf.mxu0
    %4455 = vmatprep.mubr.bf16.mxu0 0
    %4456 = vmatmul.mubr.bf16.gmra.mxu0 %v4366
    %v4457 = vpop.f32.mrf.mxu0
    %v4458 = vadd.f32 0.0, %v4457
    %v4459 = vpop.f32.mrf.mxu0
    %v4460 = vpop.f32.mrf.mxu0
    %v4461 = vadd.f32 0.0, %v4460
    %v4462 = vpop.f32.mrf.mxu0
    %4463 = vmatprep.mubr.bf16.mxu0 0
    %4464 = vmatmul.mubr.bf16.gmra.mxu0 %v4369
    %v4465 = vpop.f32.mrf.mxu0
    %v4466 = vadd.f32 0.0, %v4465
    %v4467 = vpop.f32.mrf.mxu0
    %v4468 = vpop.f32.mrf.mxu0
    %v4469 = vadd.f32 0.0, %v4468
    %v4470 = vpop.f32.mrf.mxu0
    %4471 = vmatprep.mubr.bf16.mxu0 0
    %4472 = vmatmul.mubr.bf16.gmra.mxu0 %v4372
    %v4473 = vpop.f32.mrf.mxu0
    %v4474 = vadd.f32 0.0, %v4473
    %v4475 = vpop.f32.mrf.mxu0
    %v4476 = vpop.f32.mrf.mxu0
    %v4477 = vadd.f32 0.0, %v4476
    %v4478 = vpop.f32.mrf.mxu0
    %4479 = vmatprep.mubr.bf16.mxu0 0
    %4480 = vmatmul.mubr.bf16.gmra.mxu0 %v4375
    %v4481 = vpop.f32.mrf.mxu0
    %v4482 = vadd.f32 0.0, %v4481
    %v4483 = vpop.f32.mrf.mxu0
    %v4484 = vpop.f32.mrf.mxu0
    %v4485 = vadd.f32 0.0, %v4484
    %v4486 = vpop.f32.mrf.mxu0
    %4487 = vmatprep.mubr.bf16.mxu0 0
    %4488 = vmatmul.mubr.bf16.gmra.mxu0 %v4378
    %v4489 = vpop.f32.mrf.mxu0
    %v4490 = vadd.f32 0.0, %v4489
    %v4491 = vpop.f32.mrf.mxu0
    %v4492 = vpop.f32.mrf.mxu0
    %v4493 = vadd.f32 0.0, %v4492
    %v4494 = vpop.f32.mrf.mxu0
    %4495 = vmatprep.mubr.bf16.mxu0 0
    %4496 = vmatmul.mubr.bf16.gmra.mxu0 %v4381
    %v4497 = vpop.f32.mrf.mxu0
    %v4498 = vadd.f32 0.0, %v4497
    %v4499 = vpop.f32.mrf.mxu0
    %v4500 = vpop.f32.mrf.mxu0
    %v4501 = vadd.f32 0.0, %v4500
    %v4502 = vpop.f32.mrf.mxu0
    %4503 = vmatprep.mubr.bf16.mxu0 0
    %4504 = vmatmul.mubr.bf16.gmra.mxu0 %v4384
    %v4505 = vpop.f32.mrf.mxu0
    %v4506 = vadd.f32 0.0, %v4505
    %v4507 = vpop.f32.mrf.mxu0
    %v4508 = vpop.f32.mrf.mxu0
    %v4509 = vadd.f32 0.0, %v4508
    %v4510 = vpop.f32.mrf.mxu0
    %4511 = vmatprep.mubr.bf16.mxu0 0
    %4512 = vmatmul.mubr.bf16.gmra.mxu0 %v4387
    %v4513 = vpop.f32.mrf.mxu0
    %v4514 = vadd.f32 0.0, %v4513
    %v4515 = vpop.f32.mrf.mxu0
    %v4516 = vpop.f32.mrf.mxu0
    %v4517 = vadd.f32 0.0, %v4516
    %v4518 = vpop.f32.mrf.mxu0
    %4519 = vmatprep.mubr.bf16.mxu0 0
    %4520 = vmatmul.mubr.bf16.gmra.mxu0 %v4390
    %v4521 = vpop.f32.mrf.mxu0
    %v4522 = vadd.f32 0.0, %v4521
    %v4523 = vpop.f32.mrf.mxu0
    %v4524 = vpop.f32.mrf.mxu0
    %v4525 = vadd.f32 0.0, %v4524
    %v4526 = vpop.f32.mrf.mxu0
    %4527 = vmatprep.mubr.bf16.mxu0 0
    %4528 = vmatmul.mubr.bf16.gmra.mxu0 %v4393
    %v4529 = vpop.f32.mrf.mxu0
    %v4530 = vadd.f32 0.0, %v4529
    %v4531 = vpop.f32.mrf.mxu0
    %v4532 = vpop.f32.mrf.mxu0
    %v4533 = vadd.f32 0.0, %v4532
    %v4534 = vpop.f32.mrf.mxu0
    %4535 = vmatprep.mubr.bf16.mxu0 0
    %4536 = vmatmul.mubr.bf16.gmra.mxu0 %v4396
    %v4537 = vpop.f32.mrf.mxu0
    %v4538 = vadd.f32 0.0, %v4537
    %v4539 = vpop.f32.mrf.mxu0
    %v4540 = vpop.f32.mrf.mxu0
    %v4541 = vadd.f32 0.0, %v4540
    %v4542 = vpop.f32.mrf.mxu0
    %4543 = vmatprep.mubr.bf16.mxu0 0
    %4544 = vmatmul.mubr.bf16.gmra.mxu0 %v4399
    %v4545 = vpop.f32.mrf.mxu0
    %v4546 = vadd.f32 0.0, %v4545
    %v4547 = vpop.f32.mrf.mxu0
    %v4548 = vpop.f32.mrf.mxu0
    %v4549 = vadd.f32 0.0, %v4548
    %v4550 = vpop.f32.mrf.mxu0
    %4551 = vmatprep.mubr.bf16.mxu0 0
    %4552 = vmatmul.mubr.bf16.gmra.mxu0 %v4402
    %v4553 = vpop.f32.mrf.mxu0
    %v4554 = vadd.f32 0.0, %v4553
    %v4555 = vpop.f32.mrf.mxu0
    %v4556 = vpop.f32.mrf.mxu0
    %v4557 = vadd.f32 0.0, %v4556
    %v4558 = vpop.f32.mrf.mxu0
    %4559 = vmatprep.mubr.bf16.mxu0 0
    %4560 = vmatmul.mubr.bf16.gmra.mxu0 %v4405
    %v4561 = vpop.f32.mrf.mxu0
    %v4562 = vadd.f32 0.0, %v4561
    %v4563 = vpop.f32.mrf.mxu0
    %v4564 = vpop.f32.mrf.mxu0
    %v4565 = vadd.f32 0.0, %v4564
    %v4566 = vpop.f32.mrf.mxu0
    %4567 = vdwg.mxu0
    %v4568 = vadd.f32 %v4153, %v4442
    %v4569 = vadd.f32 %v4156, %v4445
    %v4570 = vadd.f32 %v4161, %v4450
    %v4571 = vadd.f32 %v4164, %v4453
    %v4572 = vadd.f32 %v4169, %v4458
    %v4573 = vadd.f32 %v4172, %v4461
    %v4574 = vadd.f32 %v4177, %v4466
    %v4575 = vadd.f32 %v4180, %v4469
    %v4576 = vadd.f32 %v4185, %v4474
    %v4577 = vadd.f32 %v4188, %v4477
    %v4578 = vadd.f32 %v4193, %v4482
    %v4579 = vadd.f32 %v4196, %v4485
    %v4580 = vadd.f32 %v4201, %v4490
    %v4581 = vadd.f32 %v4204, %v4493
    %v4582 = vadd.f32 %v4209, %v4498
    %v4583 = vadd.f32 %v4212, %v4501
    %v4584 = vadd.f32 %v4217, %v4506
    %v4585 = vadd.f32 %v4220, %v4509
    %v4586 = vadd.f32 %v4225, %v4514
    %v4587 = vadd.f32 %v4228, %v4517
    %v4588 = vadd.f32 %v4233, %v4522
    %v4589 = vadd.f32 %v4236, %v4525
    %v4590 = vadd.f32 %v4241, %v4530
    %v4591 = vadd.f32 %v4244, %v4533
    %v4592 = vadd.f32 %v4249, %v4538
    %v4593 = vadd.f32 %v4252, %v4541
    %v4594 = vadd.f32 %v4257, %v4546
    %v4595 = vadd.f32 %v4260, %v4549
    %v4596 = vadd.f32 %v4265, %v4554
    %v4597 = vadd.f32 %v4268, %v4557
    %v4598 = vadd.f32 %v4273, %v4562
    %v4599 = vadd.f32 %v4276, %v4565
    %v4600 = vmax.f32 %v4568, 0.0
    %v4601 = vmax.f32 %v4569, 0.0
    %v4602 = vmax.f32 %v4570, 0.0
    %v4603 = vmax.f32 %v4571, 0.0
    %v4604 = vmax.f32 %v4572, 0.0
    %v4605 = vmax.f32 %v4573, 0.0
    %v4606 = vmax.f32 %v4574, 0.0
    %v4607 = vmax.f32 %v4575, 0.0
    %v4608 = vmax.f32 %v4576, 0.0
    %v4609 = vmax.f32 %v4577, 0.0
    %v4610 = vmax.f32 %v4578, 0.0
    %v4611 = vmax.f32 %v4579, 0.0
    %v4612 = vmax.f32 %v4580, 0.0
    %v4613 = vmax.f32 %v4581, 0.0
    %v4614 = vmax.f32 %v4582, 0.0
    %v4615 = vmax.f32 %v4583, 0.0
    %v4616 = vmax.f32 %v4584, 0.0
    %v4617 = vmax.f32 %v4585, 0.0
    %v4618 = vmax.f32 %v4586, 0.0
    %v4619 = vmax.f32 %v4587, 0.0
    %v4620 = vmax.f32 %v4588, 0.0
    %v4621 = vmax.f32 %v4589, 0.0
    %v4622 = vmax.f32 %v4590, 0.0
    %v4623 = vmax.f32 %v4591, 0.0
    %v4624 = vmax.f32 %v4592, 0.0
    %v4625 = vmax.f32 %v4593, 0.0
    %v4626 = vmax.f32 %v4594, 0.0
    %v4627 = vmax.f32 %v4595, 0.0
    %v4628 = vmax.f32 %v4596, 0.0
    %v4629 = vmax.f32 %v4597, 0.0
    %v4630 = vmax.f32 %v4598, 0.0
    %v4631 = vmax.f32 %v4599, 0.0
    %v4632 = vmul.f32 %v4600, %v2167
    %v4633 = vmul.f32 %v4601, %v2167
    %v4634 = vmul.f32 %v4602, %v2167
    %v4635 = vmul.f32 %v4603, %v2167
    %v4636 = vmul.f32 %v4604, %v2167
    %v4637 = vmul.f32 %v4605, %v2167
    %v4638 = vmul.f32 %v4606, %v2167
    %v4639 = vmul.f32 %v4607, %v2167
    %v4640 = vmul.f32 %v4608, %v2167
    %v4641 = vmul.f32 %v4609, %v2167
    %v4642 = vmul.f32 %v4610, %v2167
    %v4643 = vmul.f32 %v4611, %v2167
    %v4644 = vmul.f32 %v4612, %v2167
    %v4645 = vmul.f32 %v4613, %v2167
    %v4646 = vmul.f32 %v4614, %v2167
    %v4647 = vmul.f32 %v4615, %v2167
    %v4648 = vmul.f32 %v4616, %v2167
    %v4649 = vmul.f32 %v4617, %v2167
    %v4650 = vmul.f32 %v4618, %v2167
    %v4651 = vmul.f32 %v4619, %v2167
    %v4652 = vmul.f32 %v4620, %v2167
    %v4653 = vmul.f32 %v4621, %v2167
    %v4654 = vmul.f32 %v4622, %v2167
    %v4655 = vmul.f32 %v4623, %v2167
    %v4656 = vmul.f32 %v4624, %v2167
    %v4657 = vmul.f32 %v4625, %v2167
    %v4658 = vmul.f32 %v4626, %v2167
    %v4659 = vmul.f32 %v4627, %v2167
    %v4660 = vmul.f32 %v4628, %v2167
    %v4661 = vmul.f32 %v4629, %v2167
    %v4662 = vmul.f32 %v4630, %v2167
    %v4663 = vmul.f32 %v4631, %v2167
    %v4664 = vadd.f32 %v4632, %v2205
    %v4665 = vadd.f32 %v4633, %v2205
    %v4666 = vadd.f32 %v4634, %v2205
    %v4667 = vadd.f32 %v4635, %v2205
    %v4668 = vadd.f32 %v4636, %v2205
    %v4669 = vadd.f32 %v4637, %v2205
    %v4670 = vadd.f32 %v4638, %v2205
    %v4671 = vadd.f32 %v4639, %v2205
    %v4672 = vadd.f32 %v4640, %v2205
    %v4673 = vadd.f32 %v4641, %v2205
    %v4674 = vadd.f32 %v4642, %v2205
    %v4675 = vadd.f32 %v4643, %v2205
    %v4676 = vadd.f32 %v4644, %v2205
    %v4677 = vadd.f32 %v4645, %v2205
    %v4678 = vadd.f32 %v4646, %v2205
    %v4679 = vadd.f32 %v4647, %v2205
    %v4680 = vadd.f32 %v4648, %v2205
    %v4681 = vadd.f32 %v4649, %v2205
    %v4682 = vadd.f32 %v4650, %v2205
    %v4683 = vadd.f32 %v4651, %v2205
    %v4684 = vadd.f32 %v4652, %v2205
    %v4685 = vadd.f32 %v4653, %v2205
    %v4686 = vadd.f32 %v4654, %v2205
    %v4687 = vadd.f32 %v4655, %v2205
    %v4688 = vadd.f32 %v4656, %v2205
    %v4689 = vadd.f32 %v4657, %v2205
    %v4690 = vadd.f32 %v4658, %v2205
    %v4691 = vadd.f32 %v4659, %v2205
    %v4692 = vadd.f32 %v4660, %v2205
    %v4693 = vadd.f32 %v4661, %v2205
    %v4694 = vadd.f32 %v4662, %v2205
    %v4695 = vadd.f32 %v4663, %v2205
    %v4696 = vpack.c.bf16 %v4665, %v4664
    %v4697 = vpack.c.bf16 %v4667, %v4666
    %v4698 = vpack.c.bf16 %v4669, %v4668
    %v4699 = vpack.c.bf16 %v4671, %v4670
    %v4700 = vpack.c.bf16 %v4673, %v4672
    %v4701 = vpack.c.bf16 %v4675, %v4674
    %v4702 = vpack.c.bf16 %v4677, %v4676
    %v4703 = vpack.c.bf16 %v4679, %v4678
    %v4704 = vpack.c.bf16 %v4681, %v4680
    %v4705 = vpack.c.bf16 %v4683, %v4682
    %v4706 = vpack.c.bf16 %v4685, %v4684
    %v4707 = vpack.c.bf16 %v4687, %v4686
    %v4708 = vpack.c.bf16 %v4689, %v4688
    %v4709 = vpack.c.bf16 %v4691, %v4690
    %v4710 = vpack.c.bf16 %v4693, %v4692
    %v4711 = vpack.c.bf16 %v4695, %v4694
    %v4713 = vsel %vm977, %v4696, 0
    %v4716 = vsel %vm977, %v4697, 0
    %v4719 = vsel %vm977, %v4698, 0
    %v4722 = vsel %vm977, %v4699, 0
    %v4725 = vsel %vm977, %v4700, 0
    %v4728 = vsel %vm977, %v4701, 0
    %v4731 = vsel %vm977, %v4702, 0
    %v4734 = vsel %vm977, %v4703, 0
    %v4737 = vsel %vm977, %v4704, 0
    %v4740 = vsel %vm977, %v4705, 0
    %v4743 = vsel %vm977, %v4706, 0
    %v4746 = vsel %vm977, %v4707, 0
    %v4749 = vsel %vm977, %v4708, 0
    %v4752 = vsel %vm977, %v4709, 0
    %v4755 = vsel %vm977, %v4710, 0
    %v4758 = vsel %vm977, %v4711, 0
    %4760 = vmatprep.subr.bf16.mxu0 0
    %4761 = vmatpush1.bf16.msra.mxu0 0
    %4762 = vmatprep.subr.bf16.mxu0 0
    %4763 = vmatpush1.bf16.msra.mxu0 0
    %4764 = vmatprep.subr.bf16.mxu0 0
    %4765 = vmatpush1.bf16.msra.mxu0 0
    %4766 = vmatprep.subr.bf16.mxu0 0
    %4767 = vmatpush1.bf16.msra.mxu0 0
    %4768 = vmatprep.subr.bf16.mxu0 0
    %4769 = vmatpush1.bf16.msra.mxu0 0
    %4770 = vmatprep.subr.bf16.mxu0 0
    %4771 = vmatpush1.bf16.msra.mxu0 0
    %4772 = vmatprep.subr.bf16.mxu0 0
    %4773 = vmatpush1.bf16.msra.mxu0 0
    %4774 = vmatprep.subr.bf16.mxu0 0
    %4775 = vmatpush1.bf16.msra.mxu0 %v2305
    %4776 = vmatprep.subr.bf16.mxu0 0
    %4777 = vmatpush2.bf16.msra.mxu0 0
    %4778 = vmatprep.subr.bf16.mxu0 0
    %4779 = vmatpush2.bf16.msra.mxu0 0
    %4780 = vmatprep.subr.bf16.mxu0 0
    %4781 = vmatpush2.bf16.msra.mxu0 0
    %4782 = vmatprep.subr.bf16.mxu0 0
    %4783 = vmatpush2.bf16.msra.mxu0 0
    %4784 = vmatprep.subr.bf16.mxu0 0
    %4785 = vmatpush2.bf16.msra.mxu0 0
    %4786 = vmatprep.subr.bf16.mxu0 0
    %4787 = vmatpush2.bf16.msra.mxu0 0
    %4788 = vmatprep.subr.bf16.mxu0 0
    %4789 = vmatpush2.bf16.msra.mxu0 0
    %4790 = vmatprep.subr.bf16.mxu0 0
    %4791 = vmatpush2.bf16.msra.mxu0 0
    %4792 = vmatprep.mubr.bf16.mxu0 0
    %4793 = vmatmul.mubr.bf16.gmra.mxu0 %v4713
    %v4794 = vpop.f32.mrf.mxu0
    %v4795 = vadd.f32 %v2676, %v4794
    %v4796 = vpop.f32.mrf.mxu0
    %v4797 = vpop.f32.mrf.mxu0
    %v4798 = vadd.f32 %v2677, %v4797
    %v4799 = vpop.f32.mrf.mxu0
    %4800 = vmatprep.mubr.bf16.mxu0 0
    %4801 = vmatmul.mubr.bf16.gmra.mxu0 %v4716
    %v4802 = vpop.f32.mrf.mxu0
    %v4803 = vadd.f32 %v2678, %v4802
    %v4804 = vpop.f32.mrf.mxu0
    %v4805 = vpop.f32.mrf.mxu0
    %v4806 = vadd.f32 %v2679, %v4805
    %v4807 = vpop.f32.mrf.mxu0
    %4808 = vmatprep.mubr.bf16.mxu0 0
    %4809 = vmatmul.mubr.bf16.gmra.mxu0 %v4719
    %v4810 = vpop.f32.mrf.mxu0
    %v4811 = vadd.f32 %v2680, %v4810
    %v4812 = vpop.f32.mrf.mxu0
    %v4813 = vpop.f32.mrf.mxu0
    %v4814 = vadd.f32 %v2681, %v4813
    %v4815 = vpop.f32.mrf.mxu0
    %4816 = vmatprep.mubr.bf16.mxu0 0
    %4817 = vmatmul.mubr.bf16.gmra.mxu0 %v4722
    %v4818 = vpop.f32.mrf.mxu0
    %v4819 = vadd.f32 %v2682, %v4818
    %v4820 = vpop.f32.mrf.mxu0
    %v4821 = vpop.f32.mrf.mxu0
    %v4822 = vadd.f32 %v2683, %v4821
    %v4823 = vpop.f32.mrf.mxu0
    %4824 = vmatprep.mubr.bf16.mxu0 0
    %4825 = vmatmul.mubr.bf16.gmra.mxu0 %v4725
    %v4826 = vpop.f32.mrf.mxu0
    %v4827 = vadd.f32 %v2684, %v4826
    %v4828 = vpop.f32.mrf.mxu0
    %v4829 = vpop.f32.mrf.mxu0
    %v4830 = vadd.f32 %v2685, %v4829
    %v4831 = vpop.f32.mrf.mxu0
    %4832 = vmatprep.mubr.bf16.mxu0 0
    %4833 = vmatmul.mubr.bf16.gmra.mxu0 %v4728
    %v4834 = vpop.f32.mrf.mxu0
    %v4835 = vadd.f32 %v2686, %v4834
    %v4836 = vpop.f32.mrf.mxu0
    %v4837 = vpop.f32.mrf.mxu0
    %v4838 = vadd.f32 %v2687, %v4837
    %v4839 = vpop.f32.mrf.mxu0
    %4840 = vmatprep.mubr.bf16.mxu0 0
    %4841 = vmatmul.mubr.bf16.gmra.mxu0 %v4731
    %v4842 = vpop.f32.mrf.mxu0
    %v4843 = vadd.f32 %v2688, %v4842
    %v4844 = vpop.f32.mrf.mxu0
    %v4845 = vpop.f32.mrf.mxu0
    %v4846 = vadd.f32 %v2689, %v4845
    %v4847 = vpop.f32.mrf.mxu0
    %4848 = vmatprep.mubr.bf16.mxu0 0
    %4849 = vmatmul.mubr.bf16.gmra.mxu0 %v4734
    %v4850 = vpop.f32.mrf.mxu0
    %v4851 = vadd.f32 %v2690, %v4850
    %v4852 = vpop.f32.mrf.mxu0
    %v4853 = vpop.f32.mrf.mxu0
    %v4854 = vadd.f32 %v2691, %v4853
    %v4855 = vpop.f32.mrf.mxu0
    %4856 = vmatprep.mubr.bf16.mxu0 0
    %4857 = vmatmul.mubr.bf16.gmra.mxu0 %v4737
    %v4858 = vpop.f32.mrf.mxu0
    %v4859 = vadd.f32 %v2692, %v4858
    %v4860 = vpop.f32.mrf.mxu0
    %v4861 = vpop.f32.mrf.mxu0
    %v4862 = vadd.f32 %v2693, %v4861
    %v4863 = vpop.f32.mrf.mxu0
    %4864 = vmatprep.mubr.bf16.mxu0 0
    %4865 = vmatmul.mubr.bf16.gmra.mxu0 %v4740
    %v4866 = vpop.f32.mrf.mxu0
    %v4867 = vadd.f32 %v2694, %v4866
    %v4868 = vpop.f32.mrf.mxu0
    %v4869 = vpop.f32.mrf.mxu0
    %v4870 = vadd.f32 %v2695, %v4869
    %v4871 = vpop.f32.mrf.mxu0
    %4872 = vmatprep.mubr.bf16.mxu0 0
    %4873 = vmatmul.mubr.bf16.gmra.mxu0 %v4743
    %v4874 = vpop.f32.mrf.mxu0
    %v4875 = vadd.f32 %v2696, %v4874
    %v4876 = vpop.f32.mrf.mxu0
    %v4877 = vpop.f32.mrf.mxu0
    %v4878 = vadd.f32 %v2697, %v4877
    %v4879 = vpop.f32.mrf.mxu0
    %4880 = vmatprep.mubr.bf16.mxu0 0
    %4881 = vmatmul.mubr.bf16.gmra.mxu0 %v4746
    %v4882 = vpop.f32.mrf.mxu0
    %v4883 = vadd.f32 %v2698, %v4882
    %v4884 = vpop.f32.mrf.mxu0
    %v4885 = vpop.f32.mrf.mxu0
    %v4886 = vadd.f32 %v2699, %v4885
    %v4887 = vpop.f32.mrf.mxu0
    %4888 = vmatprep.mubr.bf16.mxu0 0
    %4889 = vmatmul.mubr.bf16.gmra.mxu0 %v4749
    %v4890 = vpop.f32.mrf.mxu0
    %v4891 = vadd.f32 %v2700, %v4890
    %v4892 = vpop.f32.mrf.mxu0
    %v4893 = vpop.f32.mrf.mxu0
    %v4894 = vadd.f32 %v2701, %v4893
    %v4895 = vpop.f32.mrf.mxu0
    %4896 = vmatprep.mubr.bf16.mxu0 0
    %4897 = vmatmul.mubr.bf16.gmra.mxu0 %v4752
    %v4898 = vpop.f32.mrf.mxu0
    %v4899 = vadd.f32 %v2702, %v4898
    %v4900 = vpop.f32.mrf.mxu0
    %v4901 = vpop.f32.mrf.mxu0
    %v4902 = vadd.f32 %v2703, %v4901
    %v4903 = vpop.f32.mrf.mxu0
    %4904 = vmatprep.mubr.bf16.mxu0 0
    %4905 = vmatmul.mubr.bf16.gmra.mxu0 %v4755
    %v4906 = vpop.f32.mrf.mxu0
    %v4907 = vadd.f32 %v2704, %v4906
    %v4908 = vpop.f32.mrf.mxu0
    %v4909 = vpop.f32.mrf.mxu0
    %v4910 = vadd.f32 %v2705, %v4909
    %v4911 = vpop.f32.mrf.mxu0
    %4912 = vmatprep.mubr.bf16.mxu0 0
    %4913 = vmatmul.mubr.bf16.gmra.mxu0 %v4758
    %v4914 = vpop.f32.mrf.mxu0
    %v4915 = vadd.f32 %v2706, %v4914
    %v4916 = vpop.f32.mrf.mxu0
    %v4917 = vpop.f32.mrf.mxu0
    %v4918 = vadd.f32 %v2707, %v4917
    %v4919 = vpop.f32.mrf.mxu0
    %4920 = vdwg.mxu0
    %v4921 = vpack.c.bf16 %v4798, %v4795
    %v4922 = vpack.c.bf16 %v4806, %v4803
    %v4923 = vpack.c.bf16 %v4814, %v4811
    %v4924 = vpack.c.bf16 %v4822, %v4819
    %v4925 = vpack.c.bf16 %v4830, %v4827
    %v4926 = vpack.c.bf16 %v4838, %v4835
    %v4927 = vpack.c.bf16 %v4846, %v4843
    %v4928 = vpack.c.bf16 %v4854, %v4851
    %v4929 = vpack.c.bf16 %v4862, %v4859
    %v4930 = vpack.c.bf16 %v4870, %v4867
    %v4931 = vpack.c.bf16 %v4878, %v4875
    %v4932 = vpack.c.bf16 %v4886, %v4883
    %v4933 = vpack.c.bf16 %v4894, %v4891
    %v4934 = vpack.c.bf16 %v4902, %v4899
    %v4935 = vpack.c.bf16 %v4910, %v4907
    %v4936 = vpack.c.bf16 %v4918, %v4915
    %v4953 = vunpack.c.l.b16 %v4921
    %v4954 = vunpack.c.h.b16 %v4921
    %v4955 = vunpack.c.l.b16 %v4922
    %v4956 = vunpack.c.h.b16 %v4922
    %v4957 = vunpack.c.l.b16 %v4923
    %v4958 = vunpack.c.h.b16 %v4923
    %v4959 = vunpack.c.l.b16 %v4924
    %v4960 = vunpack.c.h.b16 %v4924
    %v4961 = vunpack.c.l.b16 %v4925
    %v4962 = vunpack.c.h.b16 %v4925
    %v4963 = vunpack.c.l.b16 %v4926
    %v4964 = vunpack.c.h.b16 %v4926
    %v4965 = vunpack.c.l.b16 %v4927
    %v4966 = vunpack.c.h.b16 %v4927
    %v4967 = vunpack.c.l.b16 %v4928
    %v4968 = vunpack.c.h.b16 %v4928
    %v4969 = vunpack.c.l.b16 %v4929
    %v4970 = vunpack.c.h.b16 %v4929
    %v4971 = vunpack.c.l.b16 %v4930
    %v4972 = vunpack.c.h.b16 %v4930
    %v4973 = vunpack.c.l.b16 %v4931
    %v4974 = vunpack.c.h.b16 %v4931
    %v4975 = vunpack.c.l.b16 %v4932
    %v4976 = vunpack.c.h.b16 %v4932
    %v4977 = vunpack.c.l.b16 %v4933
    %v4978 = vunpack.c.h.b16 %v4933
    %v4979 = vunpack.c.l.b16 %v4934
    %v4980 = vunpack.c.h.b16 %v4934
    %v4981 = vunpack.c.l.b16 %v4935
    %v4982 = vunpack.c.h.b16 %v4935
    %v4983 = vunpack.c.l.b16 %v4936
    %v4984 = vunpack.c.h.b16 %v4936
    %v4985 = vpack.c.b16 %v4953, %v4953
    %v4986 = vpack.c.b16 %v4954, %v4954
    %v4987 = vpack.c.b16 %v4955, %v4955
    %v4988 = vpack.c.b16 %v4956, %v4956
    %v4989 = vpack.c.b16 %v4957, %v4957
    %v4990 = vpack.c.b16 %v4958, %v4958
    %v4991 = vpack.c.b16 %v4959, %v4959
    %v4992 = vpack.c.b16 %v4960, %v4960
    %v4993 = vpack.c.b16 %v4961, %v4961
    %v4994 = vpack.c.b16 %v4962, %v4962
    %v4995 = vpack.c.b16 %v4963, %v4963
    %v4996 = vpack.c.b16 %v4964, %v4964
    %v4997 = vpack.c.b16 %v4965, %v4965
    %v4998 = vpack.c.b16 %v4966, %v4966
    %v4999 = vpack.c.b16 %v4967, %v4967
    %v5000 = vpack.c.b16 %v4968, %v4968
    %v5001 = vpack.c.b16 %v4969, %v4969
    %v5002 = vpack.c.b16 %v4970, %v4970
    %v5003 = vpack.c.b16 %v4971, %v4971
    %v5004 = vpack.c.b16 %v4972, %v4972
    %v5005 = vpack.c.b16 %v4973, %v4973
    %v5006 = vpack.c.b16 %v4974, %v4974
    %v5007 = vpack.c.b16 %v4975, %v4975
    %v5008 = vpack.c.b16 %v4976, %v4976
    %v5009 = vpack.c.b16 %v4977, %v4977
    %v5010 = vpack.c.b16 %v4978, %v4978
    %v5011 = vpack.c.b16 %v4979, %v4979
    %v5012 = vpack.c.b16 %v4980, %v4980
    %v5013 = vpack.c.b16 %v4981, %v4981
    %v5014 = vpack.c.b16 %v4982, %v4982
    %v5015 = vpack.c.b16 %v4983, %v4983
    %v5016 = vpack.c.b16 %v4984, %v4984
    %5049 = vst.msk [vmem:[%s60 + $0x80] sm:$0xf] %vm2596, %v4985
    %5050 = vst.msk [vmem:[%s60 + $0x84] sm:$0xf] %vm2596, %v4986
    %5051 = vst.msk [vmem:[%s60 + $0x88] sm:$0xf] %vm2596, %v4987
    %5052 = vst.msk [vmem:[%s60 + $0x8c] sm:$0xf] %vm2596, %v4988
    %5053 = vst.msk [vmem:[%s60 + $0x90] sm:$0xf] %vm2596, %v4989
    %5054 = vst.msk [vmem:[%s60 + $0x94] sm:$0xf] %vm2596, %v4990
    %5055 = vst.msk [vmem:[%s60 + $0x98] sm:$0xf] %vm2596, %v4991
    %5056 = vst.msk [vmem:[%s60 + $0x9c] sm:$0xf] %vm2596, %v4992
    %5057 = vst.msk [vmem:[%s60 + $0xa0] sm:$0xf] %vm2596, %v4993
    %5058 = vst.msk [vmem:[%s60 + $0xa4] sm:$0xf] %vm2596, %v4994
    %5059 = vst.msk [vmem:[%s60 + $0xa8] sm:$0xf] %vm2596, %v4995
    %5060 = vst.msk [vmem:[%s60 + $0xac] sm:$0xf] %vm2596, %v4996
    %5061 = vst.msk [vmem:[%s60 + $0xb0] sm:$0xf] %vm2596, %v4997
    %5062 = vst.msk [vmem:[%s60 + $0xb4] sm:$0xf] %vm2596, %v4998
    %5063 = vst.msk [vmem:[%s60 + $0xb8] sm:$0xf] %vm2596, %v4999
    %5064 = vst.msk [vmem:[%s60 + $0xbc] sm:$0xf] %vm2596, %v5000
    %5065 = vst.msk [vmem:[%s60 + $0xc0] sm:$0xf] %vm2596, %v5001
    %5066 = vst.msk [vmem:[%s60 + $0xc4] sm:$0xf] %vm2596, %v5002
    %5067 = vst.msk [vmem:[%s60 + $0xc8] sm:$0xf] %vm2596, %v5003
    %5068 = vst.msk [vmem:[%s60 + $0xcc] sm:$0xf] %vm2596, %v5004
    %5069 = vst.msk [vmem:[%s60 + $0xd0] sm:$0xf] %vm2596, %v5005
    %5070 = vst.msk [vmem:[%s60 + $0xd4] sm:$0xf] %vm2596, %v5006
    %5071 = vst.msk [vmem:[%s60 + $0xd8] sm:$0xf] %vm2596, %v5007
    %5072 = vst.msk [vmem:[%s60 + $0xdc] sm:$0xf] %vm2596, %v5008
    %5073 = vst.msk [vmem:[%s60 + $0xe0] sm:$0xf] %vm2596, %v5009
    %5074 = vst.msk [vmem:[%s60 + $0xe4] sm:$0xf] %vm2596, %v5010
    %5075 = vst.msk [vmem:[%s60 + $0xe8] sm:$0xf] %vm2596, %v5011
    %5076 = vst.msk [vmem:[%s60 + $0xec] sm:$0xf] %vm2596, %v5012
    %5077 = vst.msk [vmem:[%s60 + $0xf0] sm:$0xf] %vm2596, %v5013
    %5078 = vst.msk [vmem:[%s60 + $0xf4] sm:$0xf] %vm2596, %v5014
    %5079 = vst.msk [vmem:[%s60 + $0xf8] sm:$0xf] %vm2596, %v5015
    %5080 = vst.msk [vmem:[%s60 + $0xfc] sm:$0xf] %vm2596, %v5016
    %s5081 = sadd.s32 0, 0
    %s5082 = smul.u32 64, %s5081
    %p5083 = scmp.lt.s32.totalorder %s5082, 63
    %s5084 = scalar_select %p5083, %s5082, 63
    %s5085 = smul.addr %s5084, 4
    %s5086 = scalar_lea.vmem %s10, %s5085
    // Predicated region
    $region46: #{tpu_custom_call.1} parent=1 // pred_check
      _
    $region47: #{tpu_custom_call.1} parent=1 // pred_check_branch
      %5088 = sbr.rel (0) target = $region49
    $region48: #{tpu_custom_call.1} parent=1 // pred_region
      %s5089 = sadd.s32 0, 0
      %s5090 = smul.u32 64, %s5089
    $region49: #{tpu_custom_call.1} parent=1 // pred_fallthru
      _
    // Predicated region
    $region50: #{tpu_custom_call.1} parent=1 // pred_check
      _
    $region51: #{tpu_custom_call.1} parent=1 // pred_check_branch
      %5092 = sbr.rel (0) target = $region53
    $region52: #{tpu_custom_call.1} parent=1 // pred_region
      %s5093 = sadd.s32 0, 0
      %s5094 = smul.u32 64, %s5093
      %p5095 = scmp.lt.s32.totalorder %s5094, 63
      %s5096 = scalar_select %p5095, %s5094, 63
      %s5097 = smul.addr %s5096, 4
      %s5098 = scalar_lea.vmem %s10, %s5097
    $region53: #{tpu_custom_call.1} parent=1 // pred_fallthru
      _
    %5099 = vsyncpa [#allocation3], 1

</llo_original>
